<compile_context>
chip_gen: v7x
topology: tpu7x:2x2x1
jax: 0.10.0
libtpu: 0.0.40
codegen_flags: <defaults>
</compile_context>

<pallas_src>
import functools
import math

import jax
import jax.numpy as jnp
from jax.experimental import pallas as pl
from jax.experimental.pallas import tpu as pltpu


NEG_INF = -1e30  # large finite negative: masked logits underflow to 0 after exp, no NaN


# ----------------------------- kernel helpers -------------------------------

def _layer_norm_f32(x, g, b, eps):
    mu = jnp.mean(x, axis=-1, keepdims=True)
    var = jnp.mean((x - mu) ** 2, axis=-1, keepdims=True)
    return (x - mu) * jax.lax.rsqrt(var + eps) * g + b


def _gelu_exact(x):
    # nn.GELU() default = exact erf form
    return 0.5 * x * (1.0 + jax.lax.erf(x * (1.0 / math.sqrt(2.0))))


# --------------------- pass 1: LN1 + fused QKV projection --------------------

def qkv_kernel(x_ref, g_ref, b_ref, wqkv_ref, q_ref, k_ref, v_ref,
               *, n_heads, head_dim, eps):
    d_model = n_heads * head_dim
    x = x_ref[...].astype(jnp.float32)                                   # (tq, D)
    h = _layer_norm_f32(x, g_ref[...], b_ref[...], eps)
    # single full-width matmul, full MXU output width (N = 3D)
    qkv = jnp.dot(h.astype(jnp.bfloat16), wqkv_ref[...],
                  preferred_element_type=jnp.float32).astype(jnp.bfloat16)  # (tq, 3D)
    # static per-head lane slicing -> (H, tq, hd) head-major outputs
    for hh in range(n_heads):
        lo = hh * head_dim
        q_ref[hh] = qkv[:, lo:lo + head_dim]
        k_ref[hh] = qkv[:, d_model + lo:d_model + lo + head_dim]
        v_ref[hh] = qkv[:, 2 * d_model + lo:2 * d_model + lo + head_dim]


# ----------- pass 2: triangular flash attention + out-proj + residual --------

def attn_kernel(qidx_ref, kidx_ref,
                q_ref, k_ref, v_ref, pbias_ref, wo_ref, bo_ref, xres_ref,
                y_ref,
                m_scr, l_scr, acc_scr, cat_scr,
                *, n_heads, head_dim, tq, tk):
    p = pl.program_id(1)
    qi = qidx_ref[p]
    ki = kidx_ref[p]

    # ---- new q tile: reset online-softmax state ----
    @pl.when(ki == 0)
    def _init():
        m_scr[...] = jnp.full((n_heads, tq, 1), -jnp.inf, jnp.float32)
        l_scr[...] = jnp.zeros((n_heads, tq, 1), jnp.float32)
        acc_scr[...] = jnp.zeros((n_heads, tq, head_dim), jnp.float32)

    def accumulate(bias):
        # per-head loop keeps s/p at (tq, tk) -> fits the vreg file, no batched-H spills
        def head_body(h, carry):
            s = jax.lax.dot_general(
                q_ref[h], k_ref[h],
                dimension_numbers=(((1,), (1,)), ((), ())),
                preferred_element_type=jnp.float32)                      # (tq, tk)
            s = s + bias
            m_prev = m_scr[h]                                            # (tq, 1)
            m_new = jnp.maximum(m_prev, jnp.max(s, axis=-1, keepdims=True))
            alpha = jnp.exp(m_prev - m_new)
            pmat = jnp.exp(s - m_new)                                    # (tq, tk)
            l_scr[h] = alpha * l_scr[h] + jnp.sum(pmat, axis=-1, keepdims=True)
            acc_scr[h] = alpha * acc_scr[h] + jax.lax.dot_general(
                pmat.astype(jnp.bfloat16), v_ref[h],
                dimension_numbers=(((1,), (0,)), ((), ())),
                preferred_element_type=jnp.float32)                      # (tq, hd)
            m_scr[h] = m_new
            return carry

        jax.lax.fori_loop(0, n_heads, head_body, 0, unroll=True)

    # ---- strictly-below-diagonal KV tile: key-padding bias only (no causal iota) ----
    @pl.when(ki != qi)
    def _off_diag():
        accumulate(pbias_ref[...])                                       # (1, tk) broadcast

    # ---- diagonal tile: causal mask, then finalize this q tile ----
    @pl.when(ki == qi)
    def _diag_and_finalize():
        rows = jax.lax.broadcasted_iota(jnp.int32, (tq, tk), 0)
        cols = jax.lax.broadcasted_iota(jnp.int32, (tq, tk), 1)
        causal = jnp.where(cols > rows, jnp.float32(NEG_INF), jnp.float32(0.0))
        accumulate(causal + pbias_ref[...])

        # concat heads -> (tq, D), then ONE full-width output projection matmul
        for hh in range(n_heads):
            cat_scr[:, hh * head_dim:(hh + 1) * head_dim] = (
                acc_scr[hh] / l_scr[hh]).astype(jnp.bfloat16)            # exact recip, 1x/q-tile
        proj = jnp.dot(cat_scr[...], wo_ref[...],
                       preferred_element_type=jnp.float32) + bo_ref[...]  # (tq, D)
        y_ref[...] = proj + xres_ref[...].astype(jnp.float32)             # residual 1 in f32


# --------------------- pass 3: LN2 + GELU FFN + residual ---------------------

def ffn_kernel(y_ref, g_ref, b_ref, w1_ref, b1_ref, w2_ref, b2_ref, out_ref, *, eps):
    y = y_ref[...]                                                       # (tq, D) f32
    h = _layer_norm_f32(y, g_ref[...], b_ref[...], eps)
    a = jnp.dot(h.astype(jnp.bfloat16), w1_ref[...],
                preferred_element_type=jnp.float32) + b1_ref[...]
    a = _gelu_exact(a)
    o = jnp.dot(a.astype(jnp.bfloat16), w2_ref[...],
                preferred_element_type=jnp.float32) + b2_ref[...]
    out_ref[...] = (o + y).astype(out_ref.dtype)                          # residual 2


# -------------------------------- wrapper ------------------------------------

def transformer_block(x, mask, params, *, n_heads, tq=128, tk=128):
    B, S, D = x.shape
    assert D % n_heads == 0
    hd = D // n_heads
    assert tq == tk, "triangular tile enumeration assumes square tiles"
    assert S % tq == 0, "TODO(synk): ragged/odd sequence lengths need padding"
    nq = S // tq
    eps = 1e-5

    f32 = lambda a: a.astype(jnp.float32)
    bf16 = lambda a: a.astype(jnp.bfloat16)

    # fused QKV weight; softmax 1/sqrt(hd) folded into the Q columns
    wqkv = jnp.concatenate(
        [params["wq"] * (1.0 / math.sqrt(hd)), params["wk"], params["wv"]],
        axis=1).astype(jnp.bfloat16)                                      # (D, 3D)

    x_bf16 = bf16(x)                                  # halve activation DMA bytes
    # key-padding mask as a precomputed additive f32 bias (0 valid / NEG_INF padded)
    pad_bias = jnp.where(mask == 0, jnp.float32(NEG_INF),
                         jnp.float32(0.0)).reshape(B, 1, S)

    def _full(arr):
        nd = arr.ndim
        return pl.BlockSpec(arr.shape, lambda *_: (0,) * nd)

    cparams_par = pltpu.CompilerParams(
        dimension_semantics=("parallel", "parallel"),
        vmem_limit_bytes=48 * 1024 * 1024)            # <= ~48 MiB keeps v7x (64 MiB) safe

    # ---------------- pass 1: LN1 + fused QKV projection -----------------
    ln1g, ln1b = f32(params["ln1_g"]), f32(params["ln1_b"])
    qkv_shape = jax.ShapeDtypeStruct((B, n_heads, S, hd), jnp.bfloat16)
    head_out_spec = pl.BlockSpec((pl.Squeezed(), n_heads, tq, hd),
                                 lambda b, i: (b, 0, i, 0))
    q, k, v = pl.pallas_call(
        functools.partial(qkv_kernel, n_heads=n_heads, head_dim=hd, eps=eps),
        out_shape=(qkv_shape, qkv_shape, qkv_shape),
        grid_spec=pltpu.PrefetchScalarGridSpec(
            num_scalar_prefetch=0,
            grid=(B, nq),
            in_specs=[
                pl.BlockSpec((pl.Squeezed(), tq, D), lambda b, i: (b, i, 0)),
                _full(ln1g), _full(ln1b), _full(wqkv),
            ],
            out_specs=(head_out_spec, head_out_spec, head_out_spec),
        ),
        compiler_params=cparams_par,
    )(x_bf16, ln1g, ln1b, wqkv)

    # --------- pass 2: triangular flash attention + out-proj + residual ---------
    # flatten the causal (q, k) tile-pair space to its lower triangle
    q_idx = jnp.array([qt for qt in range(nq) for _ in range(qt + 1)], jnp.int32)
    k_idx = jnp.array([kt for qt in range(nq) for kt in range(qt + 1)], jnp.int32)
    n_pairs = int(q_idx.shape[0])

    wo, bo = bf16(params["wo"]), f32(params["bo"])

    y = pl.pallas_call(
        functools.partial(attn_kernel, n_heads=n_heads, head_dim=hd, tq=tq, tk=tk),
        out_shape=jax.ShapeDtypeStruct((B, S, D), jnp.float32),
        grid_spec=pltpu.PrefetchScalarGridSpec(
            num_scalar_prefetch=2,
            grid=(B, n_pairs),
            in_specs=[
                pl.BlockSpec((pl.Squeezed(), n_heads, tq, hd),
                             lambda b, p, qi, ki: (b, 0, qi[p], 0)),      # Q (per q tile)
                pl.BlockSpec((pl.Squeezed(), n_heads, tk, hd),
                             lambda b, p, qi, ki: (b, 0, ki[p], 0)),      # K (per kv step)
                pl.BlockSpec((pl.Squeezed(), n_heads, tk, hd),
                             lambda b, p, qi, ki: (b, 0, ki[p], 0)),      # V (per kv step)
                pl.BlockSpec((pl.Squeezed(), 1, tk),
                             lambda b, p, qi, ki: (b, 0, ki[p])),         # padding bias row
                _full(wo), _full(bo),
                pl.BlockSpec((pl.Squeezed(), tq, D),
                             lambda b, p, qi, ki: (b, qi[p], 0)),         # x for residual 1
            ],
            out_specs=pl.BlockSpec((pl.Squeezed(), tq, D),
                                   lambda b, p, qi, ki: (b, qi[p], 0)),
            scratch_shapes=[
                pltpu.VMEM((n_heads, tq, 1), jnp.float32),    # running max m
                pltpu.VMEM((n_heads, tq, 1), jnp.float32),    # running denom l
                pltpu.VMEM((n_heads, tq, hd), jnp.float32),   # per-head PV accumulator
                pltpu.VMEM((tq, D), jnp.bfloat16),            # concatenated heads
            ],
        ),
        compiler_params=pltpu.CompilerParams(
            dimension_semantics=("parallel", "arbitrary"),
            vmem_limit_bytes=48 * 1024 * 1024),
    )(q_idx, k_idx, q, k, v, pad_bias, wo, bo, x_bf16)

    # ------------------- pass 3: LN2 + GELU FFN + residual ----------------------
    ln2g, ln2b = f32(params["ln2_g"]), f32(params["ln2_b"])
    w1, b1 = bf16(params["w1"]), f32(params["b1"])
    w2, b2 = bf16(params["w2"]), f32(params["b2"])

    out = pl.pallas_call(
        functools.partial(ffn_kernel, eps=eps),
        out_shape=jax.ShapeDtypeStruct((B, S, D), x.dtype),
        grid_spec=pltpu.PrefetchScalarGridSpec(
            num_scalar_prefetch=0,
            grid=(B, nq),
            in_specs=[
                pl.BlockSpec((pl.Squeezed(), tq, D), lambda b, i: (b, i, 0)),
                _full(ln2g), _full(ln2b), _full(w1), _full(b1), _full(w2), _full(b2),
            ],
            out_specs=pl.BlockSpec((pl.Squeezed(), tq, D), lambda b, i: (b, i, 0)),
        ),
        compiler_params=cparams_par,
    )(y, ln2g, ln2b, w1, b1, w2, b2)

    return out


# ------------------------- pure-JAX reference --------------------------------

def transformer_block_ref(x, mask, params, *, n_heads):
    B, S, D = x.shape
    hd = D // n_heads
    eps = 1e-5

    def ln(v, g, b):
        mu = jnp.mean(v, axis=-1, keepdims=True)
        var = jnp.mean((v - mu) ** 2, axis=-1, keepdims=True)
        return (v - mu) / jnp.sqrt(var + eps) * g + b

    h = ln(x, params["ln1_g"], params["ln1_b"])
    q = (h @ params["wq"]).reshape(B, S, n_heads, hd).transpose(0, 2, 1, 3)
    k = (h @ params["wk"]).reshape(B, S, n_heads, hd).transpose(0, 2, 1, 3)
    v = (h @ params["wv"]).reshape(B, S, n_heads, hd).transpose(0, 2, 1, 3)
    scores = jnp.einsum("bhqd,bhkd->bhqk", q, k) / math.sqrt(hd)
    causal = jnp.triu(jnp.ones((S, S), dtype=bool), k=1)
    scores = jnp.where(causal[None, None], -jnp.inf, scores)
    scores = jnp.where(mask[:, None, None, :] == 0, -jnp.inf, scores)
    attn = jax.nn.softmax(scores, axis=-1)
    out = jnp.einsum("bhqk,bhkd->bhqd", attn, v)
    out = out.transpose(0, 2, 1, 3).reshape(B, S, D)
    out = out @ params["wo"] + params["bo"]
    y = out + x
    h2 = ln(y, params["ln2_g"], params["ln2_b"])
    a = jax.nn.gelu(h2 @ params["w1"] + params["b1"], approximate=False)
    o = a @ params["w2"] + params["b2"]
    return o + y


# --------------------------------- main ---------------------------------------

if __name__ == "__main__":
    B, S, D, H, DFF = 2, 256, 128, 4, 256
    TQ = TK = 128

    key = jax.random.PRNGKey(0)
    ks = jax.random.split(key, 10)

    def rnd(k, shape, scale=0.02):
        return (scale * jax.random.normal(k, shape)).astype(jnp.float32)

    params = {
        "ln1_g": jnp.ones((1, D), jnp.float32),
        "ln1_b": jnp.zeros((1, D), jnp.float32),
        "wq": rnd(ks[0], (D, D)),
        "wk": rnd(ks[1], (D, D)),
        "wv": rnd(ks[2], (D, D)),
        "wo": rnd(ks[3], (D, D)),
        "bo": rnd(ks[4], (1, D)),
        "ln2_g": jnp.ones((1, D), jnp.float32),
        "ln2_b": jnp.zeros((1, D), jnp.float32),
        "w1": rnd(ks[5], (D, DFF)),
        "b1": rnd(ks[6], (1, DFF)),
        "w2": rnd(ks[7], (DFF, D)),
        "b2": rnd(ks[8], (1, D)),
    }

    x = jax.random.normal(ks[9], (B, S, D), dtype=jnp.float32)
    # padding mask: batch 0 all valid, batch 1 has the last 64 positions padded
    mask = jnp.ones((B, S), jnp.float32).at[1, -64:].set(0.0)

    out = transformer_block(x, mask, params, n_heads=H, tq=TQ, tk=TK)
    out = jax.block_until_ready(out)

    ref = transformer_block_ref(x, mask, params, n_heads=H)
    assert out.shape == (B, S, D)
    err = jnp.max(jnp.abs(out - ref))
    # bf16 MXU inputs / bf16 activation streaming with f32 accumulation -> relaxed tolerance
    assert jnp.allclose(out, ref, rtol=2e-2, atol=2e-2), f"max abs err = {err}"

    print("KERNEL_OK")
</pallas_src>

<mosaic_0001>
module attributes {stable_mosaic.version = 11 : i64} {
  func.func @qkv_kernel(%arg0: i32, %arg1: i32, %arg2: memref<1x128x128xbf16, #tpu.memory_space<vmem>>, %arg3: memref<1x128xf32, #tpu.memory_space<vmem>>, %arg4: memref<1x128xf32, #tpu.memory_space<vmem>>, %arg5: memref<128x384xbf16, #tpu.memory_space<vmem>>, %arg6: memref<1x4x128x32xbf16, #tpu.memory_space<vmem>>, %arg7: memref<1x4x128x32xbf16, #tpu.memory_space<vmem>>, %arg8: memref<1x4x128x32xbf16, #tpu.memory_space<vmem>>) attributes {dimension_semantics = [#tpu.dimension_semantics<parallel>, #tpu.dimension_semantics<parallel>], iteration_bounds = array<i64: 2, 2>, scalar_prefetch = 0 : i64, scratch_operands = 0 : i64, tpu.core_type = #tpu.core_type<tc>, window_params = [{transform_indices = @transform_0, window_bounds = array<i64: 1, 128, 128>}, {pipeline_mode = #tpu.pipeline_mode<synchronous>, transform_indices = @transform_1, window_bounds = array<i64: 1, 128>}, {pipeline_mode = #tpu.pipeline_mode<synchronous>, transform_indices = @transform_2, window_bounds = array<i64: 1, 128>}, {pipeline_mode = #tpu.pipeline_mode<synchronous>, transform_indices = @transform_3, window_bounds = array<i64: 128, 384>}, {transform_indices = @transform_4, window_bounds = array<i64: 1, 4, 128, 32>}, {transform_indices = @transform_5, window_bounds = array<i64: 1, 4, 128, 32>}, {transform_indices = @transform_6, window_bounds = array<i64: 1, 4, 128, 32>}]} {
    %c0 = arith.constant 0 : index
    %c0_0 = arith.constant 0 : index
    %c0_1 = arith.constant 0 : index
    %0 = vector.load %arg2[%c0, %c0_0, %c0_1] : memref<1x128x128xbf16, #tpu.memory_space<vmem>>, vector<1x128x128xbf16>
    %1 = vector.shape_cast %0 : vector<1x128x128xbf16> to vector<128x128xbf16>
    %2 = arith.extf %1 : vector<128x128xbf16> to vector<128x128xf32>
    %c0_2 = arith.constant 0 : index
    %c0_3 = arith.constant 0 : index
    %3 = vector.load %arg3[%c0_2, %c0_3] : memref<1x128xf32, #tpu.memory_space<vmem>>, vector<1x128xf32>
    %c0_4 = arith.constant 0 : index
    %c0_5 = arith.constant 0 : index
    %4 = vector.load %arg4[%c0_4, %c0_5] : memref<1x128xf32, #tpu.memory_space<vmem>>, vector<1x128xf32>
    %cst = arith.constant dense<0.000000e+00> : vector<128xf32>
    %5 = vector.multi_reduction <add>, %2, %cst [1] : vector<128x128xf32> to vector<128xf32>
    %6 = vector.shape_cast %5 : vector<128xf32> to vector<128x1xf32>
    %cst_6 = arith.constant 1.280000e+02 : f32
    %7 = vector.broadcast %cst_6 : f32 to vector<128x1xf32>
    %8 = arith.divf %6, %7 : vector<128x1xf32>
    %9 = vector.broadcast %8 : vector<128x1xf32> to vector<128x128xf32>
    %10 = arith.subf %2, %9 : vector<128x128xf32>
    %11 = arith.mulf %10, %10 : vector<128x128xf32>
    %cst_7 = arith.constant dense<0.000000e+00> : vector<128xf32>
    %12 = vector.multi_reduction <add>, %11, %cst_7 [1] : vector<128x128xf32> to vector<128xf32>
    %13 = vector.shape_cast %12 : vector<128xf32> to vector<128x1xf32>
    %cst_8 = arith.constant 1.280000e+02 : f32
    %14 = vector.broadcast %cst_8 : f32 to vector<128x1xf32>
    %15 = arith.divf %13, %14 : vector<128x1xf32>
    %16 = vector.broadcast %8 : vector<128x1xf32> to vector<128x128xf32>
    %17 = arith.subf %2, %16 : vector<128x128xf32>
    %cst_9 = arith.constant 9.99999974E-6 : f32
    %18 = vector.broadcast %cst_9 : f32 to vector<128x1xf32>
    %19 = arith.addf %15, %18 : vector<128x1xf32>
    %20 = math.rsqrt %19 : vector<128x1xf32>
    %21 = vector.broadcast %20 : vector<128x1xf32> to vector<128x128xf32>
    %22 = arith.mulf %17, %21 : vector<128x128xf32>
    %23 = vector.broadcast %3 : vector<1x128xf32> to vector<128x128xf32>
    %24 = arith.mulf %22, %23 : vector<128x128xf32>
    %25 = vector.broadcast %4 : vector<1x128xf32> to vector<128x128xf32>
    %26 = arith.addf %24, %25 : vector<128x128xf32>
    %27 = arith.truncf %26 : vector<128x128xf32> to vector<128x128xbf16>
    %c0_10 = arith.constant 0 : index
    %c0_11 = arith.constant 0 : index
    %28 = vector.load %arg5[%c0_10, %c0_11] : memref<128x384xbf16, #tpu.memory_space<vmem>>, vector<128x384xbf16>
    %cst_12 = arith.constant dense<0.000000e+00> : vector<128x384xf32>
    %29 = tpu.matmul %27, %28, %cst_12 {dimension_numbers = #tpu.dot_dimension_numbers<[1], [0], [0], [1], [0, 0, 1, 1], [], []>} : vector<128x128xbf16>, vector<128x384xbf16>, vector<128x384xf32> -> vector<128x384xf32>
    %30 = arith.truncf %29 : vector<128x384xf32> to vector<128x384xbf16>
    %31 = vector.extract_strided_slice %30 {offsets = [0, 0], sizes = [128, 32], strides = [1, 1]} : vector<128x384xbf16> to vector<128x32xbf16>
    %c0_13 = arith.constant 0 : index
    %c0_14 = arith.constant 0 : index
    %c0_15 = arith.constant 0 : index
    %c0_16 = arith.constant 0 : index
    %32 = vector.load %arg6[%c0_13, %c0_14, %c0_15, %c0_16] : memref<1x4x128x32xbf16, #tpu.memory_space<vmem>>, vector<1x1x128x32xbf16>
    %33 = vector.shape_cast %32 : vector<1x1x128x32xbf16> to vector<128x32xbf16>
    %34 = vector.shape_cast %31 : vector<128x32xbf16> to vector<1x1x128x32xbf16>
    tpu.vector_store %arg6[%c0_13, %c0_14, %c0_15, %c0_16], %34 {strides = array<i32>} : memref<1x4x128x32xbf16, #tpu.memory_space<vmem>>, vector<1x1x128x32xbf16>,
    %35 = vector.extract_strided_slice %30 {offsets = [0, 128], sizes = [128, 32], strides = [1, 1]} : vector<128x384xbf16> to vector<128x32xbf16>
    %c0_17 = arith.constant 0 : index
    %c0_18 = arith.constant 0 : index
    %c0_19 = arith.constant 0 : index
    %c0_20 = arith.constant 0 : index
    %36 = vector.load %arg7[%c0_17, %c0_18, %c0_19, %c0_20] : memref<1x4x128x32xbf16, #tpu.memory_space<vmem>>, vector<1x1x128x32xbf16>
    %37 = vector.shape_cast %36 : vector<1x1x128x32xbf16> to vector<128x32xbf16>
    %38 = vector.shape_cast %35 : vector<128x32xbf16> to vector<1x1x128x32xbf16>
    tpu.vector_store %arg7[%c0_17, %c0_18, %c0_19, %c0_20], %38 {strides = array<i32>} : memref<1x4x128x32xbf16, #tpu.memory_space<vmem>>, vector<1x1x128x32xbf16>,
    %39 = vector.extract_strided_slice %30 {offsets = [0, 256], sizes = [128, 32], strides = [1, 1]} : vector<128x384xbf16> to vector<128x32xbf16>
    %c0_21 = arith.constant 0 : index
    %c0_22 = arith.constant 0 : index
    %c0_23 = arith.constant 0 : index
    %c0_24 = arith.constant 0 : index
    %40 = vector.load %arg8[%c0_21, %c0_22, %c0_23, %c0_24] : memref<1x4x128x32xbf16, #tpu.memory_space<vmem>>, vector<1x1x128x32xbf16>
    %41 = vector.shape_cast %40 : vector<1x1x128x32xbf16> to vector<128x32xbf16>
    %42 = vector.shape_cast %39 : vector<128x32xbf16> to vector<1x1x128x32xbf16>
    tpu.vector_store %arg8[%c0_21, %c0_22, %c0_23, %c0_24], %42 {strides = array<i32>} : memref<1x4x128x32xbf16, #tpu.memory_space<vmem>>, vector<1x1x128x32xbf16>,
    %43 = vector.extract_strided_slice %30 {offsets = [0, 32], sizes = [128, 32], strides = [1, 1]} : vector<128x384xbf16> to vector<128x32xbf16>
    %c0_25 = arith.constant 0 : index
    %c1 = arith.constant 1 : index
    %c0_26 = arith.constant 0 : index
    %c0_27 = arith.constant 0 : index
    %44 = vector.load %arg6[%c0_25, %c1, %c0_26, %c0_27] : memref<1x4x128x32xbf16, #tpu.memory_space<vmem>>, vector<1x1x128x32xbf16>
    %45 = vector.shape_cast %44 : vector<1x1x128x32xbf16> to vector<128x32xbf16>
    %46 = vector.shape_cast %43 : vector<128x32xbf16> to vector<1x1x128x32xbf16>
    tpu.vector_store %arg6[%c0_25, %c1, %c0_26, %c0_27], %46 {strides = array<i32>} : memref<1x4x128x32xbf16, #tpu.memory_space<vmem>>, vector<1x1x128x32xbf16>,
    %47 = vector.extract_strided_slice %30 {offsets = [0, 160], sizes = [128, 32], strides = [1, 1]} : vector<128x384xbf16> to vector<128x32xbf16>
    %c0_28 = arith.constant 0 : index
    %c1_29 = arith.constant 1 : index
    %c0_30 = arith.constant 0 : index
    %c0_31 = arith.constant 0 : index
    %48 = vector.load %arg7[%c0_28, %c1_29, %c0_30, %c0_31] : memref<1x4x128x32xbf16, #tpu.memory_space<vmem>>, vector<1x1x128x32xbf16>
    %49 = vector.shape_cast %48 : vector<1x1x128x32xbf16> to vector<128x32xbf16>
    %50 = vector.shape_cast %47 : vector<128x32xbf16> to vector<1x1x128x32xbf16>
    tpu.vector_store %arg7[%c0_28, %c1_29, %c0_30, %c0_31], %50 {strides = array<i32>} : memref<1x4x128x32xbf16, #tpu.memory_space<vmem>>, vector<1x1x128x32xbf16>,
    %51 = vector.extract_strided_slice %30 {offsets = [0, 288], sizes = [128, 32], strides = [1, 1]} : vector<128x384xbf16> to vector<128x32xbf16>
    %c0_32 = arith.constant 0 : index
    %c1_33 = arith.constant 1 : index
    %c0_34 = arith.constant 0 : index
    %c0_35 = arith.constant 0 : index
    %52 = vector.load %arg8[%c0_32, %c1_33, %c0_34, %c0_35] : memref<1x4x128x32xbf16, #tpu.memory_space<vmem>>, vector<1x1x128x32xbf16>
    %53 = vector.shape_cast %52 : vector<1x1x128x32xbf16> to vector<128x32xbf16>
    %54 = vector.shape_cast %51 : vector<128x32xbf16> to vector<1x1x128x32xbf16>
    tpu.vector_store %arg8[%c0_32, %c1_33, %c0_34, %c0_35], %54 {strides = array<i32>} : memref<1x4x128x32xbf16, #tpu.memory_space<vmem>>, vector<1x1x128x32xbf16>,
    %55 = vector.extract_strided_slice %30 {offsets = [0, 64], sizes = [128, 32], strides = [1, 1]} : vector<128x384xbf16> to vector<128x32xbf16>
    %c0_36 = arith.constant 0 : index
    %c2 = arith.constant 2 : index
    %c0_37 = arith.constant 0 : index
    %c0_38 = arith.constant 0 : index
    %56 = vector.load %arg6[%c0_36, %c2, %c0_37, %c0_38] : memref<1x4x128x32xbf16, #tpu.memory_space<vmem>>, vector<1x1x128x32xbf16>
    %57 = vector.shape_cast %56 : vector<1x1x128x32xbf16> to vector<128x32xbf16>
    %58 = vector.shape_cast %55 : vector<128x32xbf16> to vector<1x1x128x32xbf16>
    tpu.vector_store %arg6[%c0_36, %c2, %c0_37, %c0_38], %58 {strides = array<i32>} : memref<1x4x128x32xbf16, #tpu.memory_space<vmem>>, vector<1x1x128x32xbf16>,
    %59 = vector.extract_strided_slice %30 {offsets = [0, 192], sizes = [128, 32], strides = [1, 1]} : vector<128x384xbf16> to vector<128x32xbf16>
    %c0_39 = arith.constant 0 : index
    %c2_40 = arith.constant 2 : index
    %c0_41 = arith.constant 0 : index
    %c0_42 = arith.constant 0 : index
    %60 = vector.load %arg7[%c0_39, %c2_40, %c0_41, %c0_42] : memref<1x4x128x32xbf16, #tpu.memory_space<vmem>>, vector<1x1x128x32xbf16>
    %61 = vector.shape_cast %60 : vector<1x1x128x32xbf16> to vector<128x32xbf16>
    %62 = vector.shape_cast %59 : vector<128x32xbf16> to vector<1x1x128x32xbf16>
    tpu.vector_store %arg7[%c0_39, %c2_40, %c0_41, %c0_42], %62 {strides = array<i32>} : memref<1x4x128x32xbf16, #tpu.memory_space<vmem>>, vector<1x1x128x32xbf16>,
    %63 = vector.extract_strided_slice %30 {offsets = [0, 320], sizes = [128, 32], strides = [1, 1]} : vector<128x384xbf16> to vector<128x32xbf16>
    %c0_43 = arith.constant 0 : index
    %c2_44 = arith.constant 2 : index
    %c0_45 = arith.constant 0 : index
    %c0_46 = arith.constant 0 : index
    %64 = vector.load %arg8[%c0_43, %c2_44, %c0_45, %c0_46] : memref<1x4x128x32xbf16, #tpu.memory_space<vmem>>, vector<1x1x128x32xbf16>
    %65 = vector.shape_cast %64 : vector<1x1x128x32xbf16> to vector<128x32xbf16>
    %66 = vector.shape_cast %63 : vector<128x32xbf16> to vector<1x1x128x32xbf16>
    tpu.vector_store %arg8[%c0_43, %c2_44, %c0_45, %c0_46], %66 {strides = array<i32>} : memref<1x4x128x32xbf16, #tpu.memory_space<vmem>>, vector<1x1x128x32xbf16>,
    %67 = vector.extract_strided_slice %30 {offsets = [0, 96], sizes = [128, 32], strides = [1, 1]} : vector<128x384xbf16> to vector<128x32xbf16>
    %c0_47 = arith.constant 0 : index
    %c3 = arith.constant 3 : index
    %c0_48 = arith.constant 0 : index
    %c0_49 = arith.constant 0 : index
    %68 = vector.load %arg6[%c0_47, %c3, %c0_48, %c0_49] : memref<1x4x128x32xbf16, #tpu.memory_space<vmem>>, vector<1x1x128x32xbf16>
    %69 = vector.shape_cast %68 : vector<1x1x128x32xbf16> to vector<128x32xbf16>
    %70 = vector.shape_cast %67 : vector<128x32xbf16> to vector<1x1x128x32xbf16>
    tpu.vector_store %arg6[%c0_47, %c3, %c0_48, %c0_49], %70 {strides = array<i32>} : memref<1x4x128x32xbf16, #tpu.memory_space<vmem>>, vector<1x1x128x32xbf16>,
    %71 = vector.extract_strided_slice %30 {offsets = [0, 224], sizes = [128, 32], strides = [1, 1]} : vector<128x384xbf16> to vector<128x32xbf16>
    %c0_50 = arith.constant 0 : index
    %c3_51 = arith.constant 3 : index
    %c0_52 = arith.constant 0 : index
    %c0_53 = arith.constant 0 : index
    %72 = vector.load %arg7[%c0_50, %c3_51, %c0_52, %c0_53] : memref<1x4x128x32xbf16, #tpu.memory_space<vmem>>, vector<1x1x128x32xbf16>
    %73 = vector.shape_cast %72 : vector<1x1x128x32xbf16> to vector<128x32xbf16>
    %74 = vector.shape_cast %71 : vector<128x32xbf16> to vector<1x1x128x32xbf16>
    tpu.vector_store %arg7[%c0_50, %c3_51, %c0_52, %c0_53], %74 {strides = array<i32>} : memref<1x4x128x32xbf16, #tpu.memory_space<vmem>>, vector<1x1x128x32xbf16>,
    %75 = vector.extract_strided_slice %30 {offsets = [0, 352], sizes = [128, 32], strides = [1, 1]} : vector<128x384xbf16> to vector<128x32xbf16>
    %c0_54 = arith.constant 0 : index
    %c3_55 = arith.constant 3 : index
    %c0_56 = arith.constant 0 : index
    %c0_57 = arith.constant 0 : index
    %76 = vector.load %arg8[%c0_54, %c3_55, %c0_56, %c0_57] : memref<1x4x128x32xbf16, #tpu.memory_space<vmem>>, vector<1x1x128x32xbf16>
    %77 = vector.shape_cast %76 : vector<1x1x128x32xbf16> to vector<128x32xbf16>
    %78 = vector.shape_cast %75 : vector<128x32xbf16> to vector<1x1x128x32xbf16>
    tpu.vector_store %arg8[%c0_54, %c3_55, %c0_56, %c0_57], %78 {strides = array<i32>} : memref<1x4x128x32xbf16, #tpu.memory_space<vmem>>, vector<1x1x128x32xbf16>,
    return
  }
  func.func @transform_0(%arg0: i32, %arg1: i32) -> (i32, i32, i32) {
    %c0_i32 = arith.constant 0 : i32
    %c0_i32_0 = arith.constant 0 : i32
    return %arg0, %arg1, %c0_i32 : i32, i32, i32
  }
  func.func @transform_1(%arg0: i32, %arg1: i32) -> (i32, i32) {
    %c0_i32 = arith.constant 0 : i32
    %c0_i32_0 = arith.constant 0 : i32
    %c0_i32_1 = arith.constant 0 : i32
    return %c0_i32, %c0_i32_0 : i32, i32
  }
  func.func @transform_2(%arg0: i32, %arg1: i32) -> (i32, i32) {
    %c0_i32 = arith.constant 0 : i32
    %c0_i32_0 = arith.constant 0 : i32
    %c0_i32_1 = arith.constant 0 : i32
    return %c0_i32, %c0_i32_0 : i32, i32
  }
  func.func @transform_3(%arg0: i32, %arg1: i32) -> (i32, i32) {
    %c0_i32 = arith.constant 0 : i32
    %c0_i32_0 = arith.constant 0 : i32
    %c0_i32_1 = arith.constant 0 : i32
    return %c0_i32, %c0_i32_0 : i32, i32
  }
  func.func @transform_4(%arg0: i32, %arg1: i32) -> (i32, i32, i32, i32) {
    %c0_i32 = arith.constant 0 : i32
    %c0_i32_0 = arith.constant 0 : i32
    %c0_i32_1 = arith.constant 0 : i32
    return %arg0, %c0_i32, %arg1, %c0_i32_0 : i32, i32, i32, i32
  }
  func.func @transform_5(%arg0: i32, %arg1: i32) -> (i32, i32, i32, i32) {
    %c0_i32 = arith.constant 0 : i32
    %c0_i32_0 = arith.constant 0 : i32
    %c0_i32_1 = arith.constant 0 : i32
    return %arg0, %c0_i32, %arg1, %c0_i32_0 : i32, i32, i32, i32
  }
  func.func @transform_6(%arg0: i32, %arg1: i32) -> (i32, i32, i32, i32) {
    %c0_i32 = arith.constant 0 : i32
    %c0_i32_0 = arith.constant 0 : i32
    %c0_i32_1 = arith.constant 0 : i32
    return %arg0, %c0_i32, %arg1, %c0_i32_0 : i32, i32, i32, i32
  }
}

</mosaic_0001>

<llo_original>
// kernel: tpu_custom_call.1
$region0: #{tpu_custom_call.1}
  #allocation0 [shape = 'u32[]', space=smem, size = 0x4, offset = 0x4, fixed_abs, tag = 'smem constant byte address 0x4 - core index']
  #allocation1 [shape = 'u32[144,128]{1,0:T(1,128)}', space=vmem, size = 0x12000, scoped, tag = 'internal scratch']
  %s0 = inlined_call_operand.hbm [shape: bf16[2,256,128], index: 0, kind: input, shape index: {}]
  %s1 = inlined_call_operand.vmem [shape: f32[1,128], index: 1, kind: input, shape index: {}]
  %s2 = inlined_call_operand.vmem [shape: f32[1,128], index: 2, kind: input, shape index: {}]
  %s3 = inlined_call_operand.hbm [shape: bf16[128,384], index: 3, kind: input, shape index: {}]
  %s4 = inlined_call_operand.vmem [shape: bf16[2,4,256,32], index: 4, kind: output, shape index: {0}]
  %s5 = inlined_call_operand.vmem [shape: bf16[2,4,256,32], index: 5, kind: output, shape index: {1}]
  %s6 = inlined_call_operand.vmem [shape: bf16[2,4,256,32], index: 6, kind: output, shape index: {2}]
  %7 = xla_tuple %s4, %s5, %s6
  %s8 = sld [smem:[#allocation0]]
  $region184: #{tpu_custom_call.1} parent=0
    _
  %s10 = ssub.s32 1, %s8
  %s11 = scalar_select 0, %s10, %s8
  $region1: #{tpu_custom_call.1} parent=0
    #allocation2 [shape = 'u8[65536]{0}', space=vmem, size = 0x10000, scoped, tag = 'input window, operand 0']
    #allocation3 [shape = 's32[2]{0}', space=sflag, size = 0x8, scoped, tag = 'scoped memory for tpu_custom_call.1']
    #allocation4 [shape = 'u8[98304]{0}', space=vmem, size = 0x18000, scoped, tag = 'input window, operand 3, single buffered']
    #allocation5 [shape = 's32[1]{0}', space=sflag, size = 0x4, scoped, tag = 'scoped memory for tpu_custom_call.1']
    #allocation6 [shape = 'u8[262144]{0}', space=vmem, size = 0x40000, scoped, tag = 'output window, operand 0']
    #allocation7 [shape = 'u8[262144]{0}', space=vmem, size = 0x40000, scoped, tag = 'output window, operand 1']
    #allocation8 [shape = 'u8[262144]{0}', space=vmem, size = 0x40000, scoped, tag = 'output window, operand 2']
    %12 = vsyncpa [#allocation3], 0
    %s13 = scalar_lea.sflag [#allocation3], 1
    %14 = vsyncpa %s13, 0
    %15 = vsyncpa [#allocation5], 0
    loop: start=0, step=1, limit=6
    $region2: #{tpu_custom_call.1} parent=1 // loop_pre_header
      _
    $region3: #{tpu_custom_call.1} parent=1 // loop_header
      %s17 = sphi 0, %s21
      %p18 = scmp.ge.s32.totalorder %s17, 6
      %s24 = sphi 0, %s36
      %s25 = sphi 0, %s32
      %s26 = sphi 0, %s24
      %s27 = sphi 0, %s25
      %s28 = sphi 0, %s26
      %s29 = sphi 0, %s27
      %s41 = sphi 0, %s43
      %s44 = sphi 0, %s41
      %s45 = sphi 0, %s44
      %s61 = sphi 0, %s45
      %s65 = sphi 0, %s65
      %s67 = sphi 0, %s65
      %s68 = sphi 0, %s67
      %s82 = sphi 0, %s68
      %s86 = sphi 0, %s86
      %s88 = sphi 0, %s86
      %s89 = sphi 0, %s88
      %s103 = sphi 0, %s89
      %s107 = sphi 0, %s107
      %s109 = sphi 0, %s107
      %s110 = sphi 0, %s109
      %s124 = sphi 0, %s110
      %s132 = sphi 0, %s134
      %s135 = sphi 0, %s132
      %s136 = sphi 0, %s135
      %s152 = sphi 0, %s136
      %s160 = sphi 0, %s162
      %s163 = sphi 0, %s160
      %s164 = sphi 0, %s163
      %s180 = sphi 0, %s164
      %s188 = sphi 0, %s190
      %s191 = sphi 0, %s188
      %s192 = sphi 0, %s191
      %s208 = sphi 0, %s192
    $region4: #{tpu_custom_call.1} parent=1 // loop_header_branch
      %20 = sbr.rel (%p18) target = $region8
    $region5: #{tpu_custom_call.1} parent=1 // loop_body
      %s22 = ssub.s32 %s17, 1
      %s23 = ssub.s32 %s17, 2
      %s30 = sadd.s32 1, %s25
      %p31 = scmp.ge.s32.totalorder %s30, 2
      %s32 = scalar_select %p31, 0, %s30
      %s33 = sadd.s32 1, %s24
      %s34 = scalar_select %p31, %s33, %s24
      %p35 = scmp.ge.s32.totalorder %s34, 2
      %s36 = scalar_select %p35, 0, %s34
      %s37 = ssub.s32 %s24, %s36
      %s38 = ssub.s32 %s25, %s32
      %s39 = sor.u32 %s37, %s38
      %p40 = scmp.eq.s32.totalorder %s39, 0
      %s42 = sadd.s32 %s41, 1
      %s43 = scalar_select %p40, %s41, %s42
      %p46 = pneg %p40
      %p47 = scmp.eq.s32.totalorder %s17, 3
      %p48 = por %p46, %p47
      %p49 = scmp.ne.s32.totalorder %s41, %s44
      %p50 = scmp.eq.s32.totalorder %s17, 0
      %p51 = por %p49, %p50
      %p52 = scmp.ne.s32.totalorder %s41, %s44
      %p53 = scmp.eq.s32.totalorder %s22, 3
      %p54 = por %p52, %p53
      %p55 = scmp.ne.s32.totalorder %s44, %s45
      %p56 = scmp.eq.s32.totalorder %s22, 0
      %p57 = por %p55, %p56
      %p58 = scmp.ne.s32.totalorder %s44, %s45
      %p59 = scmp.eq.s32.totalorder %s23, 3
      %p60 = por %p58, %p59
      %p62 = scmp.ne.s32.totalorder %s45, %s61
      %p63 = scmp.eq.s32.totalorder %s23, 0
      %p64 = por %p62, %p63
      %s66 = sadd.s32 %s65, 1
      %p69 = scmp.eq.s32.totalorder %s17, 3
      %p70 = scmp.ne.s32.totalorder %s65, %s67
      %p71 = scmp.eq.s32.totalorder %s17, 0
      %p72 = por %p70, %p71
      %p73 = scmp.ne.s32.totalorder %s65, %s67
      %p74 = scmp.eq.s32.totalorder %s22, 3
      %p75 = por %p73, %p74
      %p76 = scmp.ne.s32.totalorder %s67, %s68
      %p77 = scmp.eq.s32.totalorder %s22, 0
      %p78 = por %p76, %p77
      %p79 = scmp.ne.s32.totalorder %s67, %s68
      %p80 = scmp.eq.s32.totalorder %s23, 3
      %p81 = por %p79, %p80
      %p83 = scmp.ne.s32.totalorder %s68, %s82
      %p84 = scmp.eq.s32.totalorder %s23, 0
      %p85 = por %p83, %p84
      %s87 = sadd.s32 %s86, 1
      %p90 = scmp.eq.s32.totalorder %s17, 3
      %p91 = scmp.ne.s32.totalorder %s86, %s88
      %p92 = scmp.eq.s32.totalorder %s17, 0
      %p93 = por %p91, %p92
      %p94 = scmp.ne.s32.totalorder %s86, %s88
      %p95 = scmp.eq.s32.totalorder %s22, 3
      %p96 = por %p94, %p95
      %p97 = scmp.ne.s32.totalorder %s88, %s89
      %p98 = scmp.eq.s32.totalorder %s22, 0
      %p99 = por %p97, %p98
      %p100 = scmp.ne.s32.totalorder %s88, %s89
      %p101 = scmp.eq.s32.totalorder %s23, 3
      %p102 = por %p100, %p101
      %p104 = scmp.ne.s32.totalorder %s89, %s103
      %p105 = scmp.eq.s32.totalorder %s23, 0
      %p106 = por %p104, %p105
      %s108 = sadd.s32 %s107, 1
      %p111 = scmp.eq.s32.totalorder %s17, 3
      %p112 = scmp.ne.s32.totalorder %s107, %s109
      %p113 = scmp.eq.s32.totalorder %s17, 0
      %p114 = por %p112, %p113
      %p115 = scmp.ne.s32.totalorder %s107, %s109
      %p116 = scmp.eq.s32.totalorder %s22, 3
      %p117 = por %p115, %p116
      %p118 = scmp.ne.s32.totalorder %s109, %s110
      %p119 = scmp.eq.s32.totalorder %s22, 0
      %p120 = por %p118, %p119
      %p121 = scmp.ne.s32.totalorder %s109, %s110
      %p122 = scmp.eq.s32.totalorder %s23, 3
      %p123 = por %p121, %p122
      %p125 = scmp.ne.s32.totalorder %s110, %s124
      %p126 = scmp.eq.s32.totalorder %s23, 0
      %p127 = por %p125, %p126
      %s128 = ssub.s32 %s24, %s36
      %s129 = ssub.s32 %s25, %s32
      %s130 = sor.u32 %s128, %s129
      %p131 = scmp.eq.s32.totalorder %s130, 0
      %s133 = sadd.s32 %s132, 1
      %s134 = scalar_select %p131, %s132, %s133
      %p137 = pneg %p131
      %p138 = scmp.eq.s32.totalorder %s17, 3
      %p139 = por %p137, %p138
      %p140 = scmp.ne.s32.totalorder %s132, %s135
      %p141 = scmp.eq.s32.totalorder %s17, 0
      %p142 = por %p140, %p141
      %p143 = scmp.ne.s32.totalorder %s132, %s135
      %p144 = scmp.eq.s32.totalorder %s22, 3
      %p145 = por %p143, %p144
      %p146 = scmp.ne.s32.totalorder %s135, %s136
      %p147 = scmp.eq.s32.totalorder %s22, 0
      %p148 = por %p146, %p147
      %p149 = scmp.ne.s32.totalorder %s135, %s136
      %p150 = scmp.eq.s32.totalorder %s23, 3
      %p151 = por %p149, %p150
      %p153 = scmp.ne.s32.totalorder %s136, %s152
      %p154 = scmp.eq.s32.totalorder %s23, 0
      %p155 = por %p153, %p154
      %s156 = ssub.s32 %s24, %s36
      %s157 = ssub.s32 %s25, %s32
      %s158 = sor.u32 %s156, %s157
      %p159 = scmp.eq.s32.totalorder %s158, 0
      %s161 = sadd.s32 %s160, 1
      %s162 = scalar_select %p159, %s160, %s161
      %p165 = pneg %p159
      %p166 = scmp.eq.s32.totalorder %s17, 3
      %p167 = por %p165, %p166
      %p168 = scmp.ne.s32.totalorder %s160, %s163
      %p169 = scmp.eq.s32.totalorder %s17, 0
      %p170 = por %p168, %p169
      %p171 = scmp.ne.s32.totalorder %s160, %s163
      %p172 = scmp.eq.s32.totalorder %s22, 3
      %p173 = por %p171, %p172
      %p174 = scmp.ne.s32.totalorder %s163, %s164
      %p175 = scmp.eq.s32.totalorder %s22, 0
      %p176 = por %p174, %p175
      %p177 = scmp.ne.s32.totalorder %s163, %s164
      %p178 = scmp.eq.s32.totalorder %s23, 3
      %p179 = por %p177, %p178
      %p181 = scmp.ne.s32.totalorder %s164, %s180
      %p182 = scmp.eq.s32.totalorder %s23, 0
      %p183 = por %p181, %p182
      %s184 = ssub.s32 %s24, %s36
      %s185 = ssub.s32 %s25, %s32
      %s186 = sor.u32 %s184, %s185
      %p187 = scmp.eq.s32.totalorder %s186, 0
      %s189 = sadd.s32 %s188, 1
      %s190 = scalar_select %p187, %s188, %s189
      %p193 = pneg %p187
      %p194 = scmp.eq.s32.totalorder %s17, 3
      %p195 = por %p193, %p194
      %p196 = scmp.ne.s32.totalorder %s188, %s191
      %p197 = scmp.eq.s32.totalorder %s17, 0
      %p198 = por %p196, %p197
      %p199 = scmp.ne.s32.totalorder %s188, %s191
      %p200 = scmp.eq.s32.totalorder %s22, 3
      %p201 = por %p199, %p200
      %p202 = scmp.ne.s32.totalorder %s191, %s192
      %p203 = scmp.eq.s32.totalorder %s22, 0
      %p204 = por %p202, %p203
      %p205 = scmp.ne.s32.totalorder %s191, %s192
      %p206 = scmp.eq.s32.totalorder %s23, 3
      %p207 = por %p205, %p206
      %p209 = scmp.ne.s32.totalorder %s192, %s208
      %p210 = scmp.eq.s32.totalorder %s23, 0
      %p211 = por %p209, %p210
      %p212 = scmp.le.s32.totalorder 1, %s17
      %p213 = scmp.lt.s32.totalorder %s17, 5
      %p214 = pnand %p212, %p213
      %p215 = pneg %p214
      // Predicated region
      $region9: #{tpu_custom_call.1} parent=5 // pred_check
        _
      $region10: #{tpu_custom_call.1} parent=5 // pred_check_branch
        %217 = sbr.rel (%p214) target = $region12
      $region11: #{tpu_custom_call.1} parent=5 // pred_region
        %s218 = ssub.s32 %s17, 1
        // Predicated region
        $region13: #{tpu_custom_call.1} parent=11 // pred_check
          %p219 = pneg %p78
        $region14: #{tpu_custom_call.1} parent=11 // pred_check_branch
          %221 = sbr.rel (%p219) target = $region16
        $region15: #{tpu_custom_call.1} parent=11 // pred_region
          _
        $region16: #{tpu_custom_call.1} parent=11 // pred_fallthru
          _
        // Predicated region
        $region17: #{tpu_custom_call.1} parent=11 // pred_check
          %p222 = pneg %p99
        $region18: #{tpu_custom_call.1} parent=11 // pred_check_branch
          %224 = sbr.rel (%p222) target = $region20
        $region19: #{tpu_custom_call.1} parent=11 // pred_region
          _
        $region20: #{tpu_custom_call.1} parent=11 // pred_fallthru
          _
        // Predicated region
        $region21: #{tpu_custom_call.1} parent=11 // pred_check
          %p225 = pneg %p120
        $region22: #{tpu_custom_call.1} parent=11 // pred_check_branch
          %227 = sbr.rel (%p225) target = $region24
        $region23: #{tpu_custom_call.1} parent=11 // pred_region
          %s229 = ssub.s32 3072, 3072
          %230 = vsyncadd [#allocation5], %s229
          %s231 = sshll.u32 [#allocation4], 4
          %s232 = int_to_ptr.vmem [resolvable:$true] %s231
          %237 = dma.hbm_to_vmem [thread:$0]  %s3, 3072, %s232, [#allocation5], 192, 192, 12
        $region24: #{tpu_custom_call.1} parent=11 // pred_fallthru
          _
      $region12: #{tpu_custom_call.1} parent=5 // pred_fallthru
        _
      %p238 = scmp.lt.s32.totalorder %s17, 4
      // Predicated region
      $region25: #{tpu_custom_call.1} parent=5 // pred_check
        %p239 = pneg %p238
      $region26: #{tpu_custom_call.1} parent=5 // pred_check_branch
        %241 = sbr.rel (%p239) target = $region28
      $region27: #{tpu_custom_call.1} parent=5 // pred_region
        // Predicated region
        $region29: #{tpu_custom_call.1} parent=27 // pred_check
          %p242 = pneg %p51
        $region30: #{tpu_custom_call.1} parent=27 // pred_check_branch
          %244 = sbr.rel (%p242) target = $region32
        $region31: #{tpu_custom_call.1} parent=27 // pred_region
          %s245 = sand.u32 %s41, 1
          %s246 = scalar_lea.sflag [#allocation3], %s245
          %s247 = sand.u32 %s41, 1
          %s248 = smul.addr %s247, 64
          %s249 = scalar_lea.vmem [#allocation2], %s248
          %s250 = smul.u32 16, %s25
          %s252 = ssub.s32 1024, 1024
          %253 = vsyncadd %s246, %s252
          %s254 = smul.addr %s24, 32
          %s255 = sadd.s32 %s250, %s254
          %s256 = smul.addr %s255, 64
          %s257 = scalar_lea.hbm %s0, %s256
          %s258 = sshll.u32 %s249, 4
          %s259 = int_to_ptr.vmem [resolvable:$true] %s258
          %264 = dma.hbm_to_vmem [thread:$0]  %s257, 1024, %s259, %s246, 64, 64, 4
        $region32: #{tpu_custom_call.1} parent=27 // pred_fallthru
          _
      $region28: #{tpu_custom_call.1} parent=5 // pred_fallthru
        _
      %p265 = scmp.le.s32.totalorder 1, %s17
      %p266 = scmp.lt.s32.totalorder %s17, 5
      %p267 = pnand %p265, %p266
      %p268 = pneg %p267
      // Predicated region
      $region33: #{tpu_custom_call.1} parent=5 // pred_check
        _
      $region34: #{tpu_custom_call.1} parent=5 // pred_check_branch
        %270 = sbr.rel (%p267) target = $region36
      $region35: #{tpu_custom_call.1} parent=5 // pred_region
        %s271 = ssub.s32 %s17, 1
        %s272 = sand.u32 %s44, 1
        %s273 = scalar_lea.sflag [#allocation3], %s272
        %s274 = sand.u32 %s44, 1
        %s275 = smul.addr %s274, 64
        %s276 = scalar_lea.vmem [#allocation2], %s275
        // Predicated region
        $region37: #{tpu_custom_call.1} parent=35 // pred_check
          %p277 = pneg %p57
        $region38: #{tpu_custom_call.1} parent=35 // pred_check_branch
          %279 = sbr.rel (%p277) target = $region40
        $region39: #{tpu_custom_call.1} parent=35 // pred_region
          %280 = dma.done %s273, 1024
        $region40: #{tpu_custom_call.1} parent=35 // pred_fallthru
          _
        // Predicated region
        $region41: #{tpu_custom_call.1} parent=35 // pred_check
          %p281 = pneg %p120
        $region42: #{tpu_custom_call.1} parent=35 // pred_check_branch
          %283 = sbr.rel (%p281) target = $region44
        $region43: #{tpu_custom_call.1} parent=35 // pred_region
          %284 = dma.done [#allocation5], 3072
        $region44: #{tpu_custom_call.1} parent=35 // pred_fallthru
          _
        %s285 = sand.u32 %s44, 1
        %s286 = scalar_lea.sflag [#allocation3], %s285
        %s287 = sand.u32 %s44, 1
        %s288 = smul.addr %s287, 64
        %s289 = scalar_lea.vmem [#allocation2], %s288
        %p290 = pneg %p57
        %p291 = pneg %p54
        %p292 = pneg %p78
        %p293 = pneg %p75
        %p294 = pneg %p99
        %p295 = pneg %p96
        %p296 = pneg %p120
        %p297 = pneg %p117
        %p298 = pneg %p148
        %p299 = pneg %p145
        %s300 = sand.u32 %s135, 1
        %s301 = sand.u32 %s135, 1
        %s302 = smul.addr %s301, 256
        %s303 = scalar_lea.vmem [#allocation6], %s302
        %p304 = pneg %p176
        %p305 = pneg %p173
        %s306 = sand.u32 %s163, 1
        %s307 = sand.u32 %s163, 1
        %s308 = smul.addr %s307, 256
        %s309 = scalar_lea.vmem [#allocation7], %s308
        %p310 = pneg %p204
        %p311 = pneg %p201
        %s312 = sand.u32 %s191, 1
        %s313 = sand.u32 %s191, 1
        %s314 = smul.addr %s313, 256
        %s315 = scalar_lea.vmem [#allocation8], %s314
        %s316 = smul.u32 16, %s27
        %s317 = smul.u32 16, %s27
        %s318 = smul.u32 16, %s27
        %s319 = smul.u32 16, %s27
        %v321 = vld [vmem:[%s276] sm:$0xf]
        %v322 = vld [vmem:[%s276 + $0x4] sm:$0xf]
        %v323 = vld [vmem:[%s276 + $0x8] sm:$0xf]
        %v324 = vld [vmem:[%s276 + $0xc] sm:$0xf]
        %v325 = vld [vmem:[%s276 + $0x10] sm:$0xf]
        %v326 = vld [vmem:[%s276 + $0x14] sm:$0xf]
        %v327 = vld [vmem:[%s276 + $0x18] sm:$0xf]
        %v328 = vld [vmem:[%s276 + $0x1c] sm:$0xf]
        %v329 = vld [vmem:[%s276 + $0x20] sm:$0xf]
        %v330 = vld [vmem:[%s276 + $0x24] sm:$0xf]
        %v331 = vld [vmem:[%s276 + $0x28] sm:$0xf]
        %v332 = vld [vmem:[%s276 + $0x2c] sm:$0xf]
        %v333 = vld [vmem:[%s276 + $0x30] sm:$0xf]
        %v334 = vld [vmem:[%s276 + $0x34] sm:$0xf]
        %v335 = vld [vmem:[%s276 + $0x38] sm:$0xf]
        %v336 = vld [vmem:[%s276 + $0x3c] sm:$0xf]
        %v337 = vunpack.c.l.bf16 %v321
        %v338 = vunpack.c.l.bf16 %v322
        %v339 = vunpack.c.l.bf16 %v323
        %v340 = vunpack.c.l.bf16 %v324
        %v341 = vunpack.c.l.bf16 %v325
        %v342 = vunpack.c.l.bf16 %v326
        %v343 = vunpack.c.l.bf16 %v327
        %v344 = vunpack.c.l.bf16 %v328
        %v345 = vunpack.c.l.bf16 %v329
        %v346 = vunpack.c.l.bf16 %v330
        %v347 = vunpack.c.l.bf16 %v331
        %v348 = vunpack.c.l.bf16 %v332
        %v349 = vunpack.c.l.bf16 %v333
        %v350 = vunpack.c.l.bf16 %v334
        %v351 = vunpack.c.l.bf16 %v335
        %v352 = vunpack.c.l.bf16 %v336
        %v353 = vld [vmem:[%s1] sm:$0x1]
        %v354 = vld [vmem:[%s2] sm:$0x1]
        %355 = vadd.xlane.f32.xlu0 %v337
        %v356 = vpop.xlane.xlu0 %355
        %357 = vadd.xlane.f32.xlu0 %v338
        %v358 = vpop.xlane.xlu0 %357
        %359 = vadd.xlane.f32.xlu0 %v339
        %v360 = vpop.xlane.xlu0 %359
        %361 = vadd.xlane.f32.xlu0 %v340
        %v362 = vpop.xlane.xlu0 %361
        %363 = vadd.xlane.f32.xlu0 %v341
        %v364 = vpop.xlane.xlu0 %363
        %365 = vadd.xlane.f32.xlu0 %v342
        %v366 = vpop.xlane.xlu0 %365
        %367 = vadd.xlane.f32.xlu0 %v343
        %v368 = vpop.xlane.xlu0 %367
        %369 = vadd.xlane.f32.xlu0 %v344
        %v370 = vpop.xlane.xlu0 %369
        %371 = vadd.xlane.f32.xlu0 %v345
        %v372 = vpop.xlane.xlu0 %371
        %373 = vadd.xlane.f32.xlu0 %v346
        %v374 = vpop.xlane.xlu0 %373
        %375 = vadd.xlane.f32.xlu0 %v347
        %v376 = vpop.xlane.xlu0 %375
        %377 = vadd.xlane.f32.xlu0 %v348
        %v378 = vpop.xlane.xlu0 %377
        %379 = vadd.xlane.f32.xlu0 %v349
        %v380 = vpop.xlane.xlu0 %379
        %381 = vadd.xlane.f32.xlu0 %v350
        %v382 = vpop.xlane.xlu0 %381
        %383 = vadd.xlane.f32.xlu0 %v351
        %v384 = vpop.xlane.xlu0 %383
        %385 = vadd.xlane.f32.xlu0 %v352
        %v386 = vpop.xlane.xlu0 %385
        %v387 = vrcp.pop 128.0
        %v388 = vmul.f32 %v356, %v387
        %v389 = vmul.f32 %v358, %v387
        %v390 = vmul.f32 %v360, %v387
        %v391 = vmul.f32 %v362, %v387
        %v392 = vmul.f32 %v364, %v387
        %v393 = vmul.f32 %v366, %v387
        %v394 = vmul.f32 %v368, %v387
        %v395 = vmul.f32 %v370, %v387
        %v396 = vmul.f32 %v372, %v387
        %v397 = vmul.f32 %v374, %v387
        %v398 = vmul.f32 %v376, %v387
        %v399 = vmul.f32 %v378, %v387
        %v400 = vmul.f32 %v380, %v387
        %v401 = vmul.f32 %v382, %v387
        %v402 = vmul.f32 %v384, %v387
        %v403 = vmul.f32 %v386, %v387
        %v404 = vsub.f32 %v337, %v388
        %v405 = vsub.f32 %v338, %v389
        %v406 = vsub.f32 %v339, %v390
        %v407 = vsub.f32 %v340, %v391
        %v408 = vsub.f32 %v341, %v392
        %v409 = vsub.f32 %v342, %v393
        %v410 = vsub.f32 %v343, %v394
        %v411 = vsub.f32 %v344, %v395
        %v412 = vsub.f32 %v345, %v396
        %v413 = vsub.f32 %v346, %v397
        %v414 = vsub.f32 %v347, %v398
        %v415 = vsub.f32 %v348, %v399
        %v416 = vsub.f32 %v349, %v400
        %v417 = vsub.f32 %v350, %v401
        %v418 = vsub.f32 %v351, %v402
        %v419 = vsub.f32 %v352, %v403
        %v420 = vmul.f32 %v404, %v404
        %v421 = vmul.f32 %v405, %v405
        %v422 = vmul.f32 %v406, %v406
        %v423 = vmul.f32 %v407, %v407
        %v424 = vmul.f32 %v408, %v408
        %v425 = vmul.f32 %v409, %v409
        %v426 = vmul.f32 %v410, %v410
        %v427 = vmul.f32 %v411, %v411
        %v428 = vmul.f32 %v412, %v412
        %v429 = vmul.f32 %v413, %v413
        %v430 = vmul.f32 %v414, %v414
        %v431 = vmul.f32 %v415, %v415
        %v432 = vmul.f32 %v416, %v416
        %v433 = vmul.f32 %v417, %v417
        %v434 = vmul.f32 %v418, %v418
        %v435 = vmul.f32 %v419, %v419
        %436 = vadd.xlane.f32.xlu0 %v420
        %v437 = vpop.xlane.xlu0 %436
        %438 = vadd.xlane.f32.xlu0 %v421
        %v439 = vpop.xlane.xlu0 %438
        %440 = vadd.xlane.f32.xlu0 %v422
        %v441 = vpop.xlane.xlu0 %440
        %442 = vadd.xlane.f32.xlu0 %v423
        %v443 = vpop.xlane.xlu0 %442
        %444 = vadd.xlane.f32.xlu0 %v424
        %v445 = vpop.xlane.xlu0 %444
        %446 = vadd.xlane.f32.xlu0 %v425
        %v447 = vpop.xlane.xlu0 %446
        %448 = vadd.xlane.f32.xlu0 %v426
        %v449 = vpop.xlane.xlu0 %448
        %450 = vadd.xlane.f32.xlu0 %v427
        %v451 = vpop.xlane.xlu0 %450
        %452 = vadd.xlane.f32.xlu0 %v428
        %v453 = vpop.xlane.xlu0 %452
        %454 = vadd.xlane.f32.xlu0 %v429
        %v455 = vpop.xlane.xlu0 %454
        %456 = vadd.xlane.f32.xlu0 %v430
        %v457 = vpop.xlane.xlu0 %456
        %458 = vadd.xlane.f32.xlu0 %v431
        %v459 = vpop.xlane.xlu0 %458
        %460 = vadd.xlane.f32.xlu0 %v432
        %v461 = vpop.xlane.xlu0 %460
        %462 = vadd.xlane.f32.xlu0 %v433
        %v463 = vpop.xlane.xlu0 %462
        %464 = vadd.xlane.f32.xlu0 %v434
        %v465 = vpop.xlane.xlu0 %464
        %466 = vadd.xlane.f32.xlu0 %v435
        %v467 = vpop.xlane.xlu0 %466
        %v468 = vmul.f32 %v437, %v387
        %v469 = vmul.f32 %v439, %v387
        %v470 = vmul.f32 %v441, %v387
        %v471 = vmul.f32 %v443, %v387
        %v472 = vmul.f32 %v445, %v387
        %v473 = vmul.f32 %v447, %v387
        %v474 = vmul.f32 %v449, %v387
        %v475 = vmul.f32 %v451, %v387
        %v476 = vmul.f32 %v453, %v387
        %v477 = vmul.f32 %v455, %v387
        %v478 = vmul.f32 %v457, %v387
        %v479 = vmul.f32 %v459, %v387
        %v480 = vmul.f32 %v461, %v387
        %v481 = vmul.f32 %v463, %v387
        %v482 = vmul.f32 %v465, %v387
        %v483 = vmul.f32 %v467, %v387
        %v484 = vadd.f32 %v468, 1e-05
        %v485 = vadd.f32 %v469, 1e-05
        %v486 = vadd.f32 %v470, 1e-05
        %v487 = vadd.f32 %v471, 1e-05
        %v488 = vadd.f32 %v472, 1e-05
        %v489 = vadd.f32 %v473, 1e-05
        %v490 = vadd.f32 %v474, 1e-05
        %v491 = vadd.f32 %v475, 1e-05
        %v492 = vadd.f32 %v476, 1e-05
        %v493 = vadd.f32 %v477, 1e-05
        %v494 = vadd.f32 %v478, 1e-05
        %v495 = vadd.f32 %v479, 1e-05
        %v496 = vadd.f32 %v480, 1e-05
        %v497 = vadd.f32 %v481, 1e-05
        %v498 = vadd.f32 %v482, 1e-05
        %v499 = vadd.f32 %v483, 1e-05
        %v500 = vrsqrt.pop %v484
        %v501 = vrsqrt.pop %v485
        %v502 = vrsqrt.pop %v486
        %v503 = vrsqrt.pop %v487
        %v504 = vrsqrt.pop %v488
        %v505 = vrsqrt.pop %v489
        %v506 = vrsqrt.pop %v490
        %v507 = vrsqrt.pop %v491
        %v508 = vrsqrt.pop %v492
        %v509 = vrsqrt.pop %v493
        %v510 = vrsqrt.pop %v494
        %v511 = vrsqrt.pop %v495
        %v512 = vrsqrt.pop %v496
        %v513 = vrsqrt.pop %v497
        %v514 = vrsqrt.pop %v498
        %v515 = vrsqrt.pop %v499
        %v516 = vmul.f32 %v404, %v500
        %v517 = vmul.f32 %v405, %v501
        %v518 = vmul.f32 %v406, %v502
        %v519 = vmul.f32 %v407, %v503
        %v520 = vmul.f32 %v408, %v504
        %v521 = vmul.f32 %v409, %v505
        %v522 = vmul.f32 %v410, %v506
        %v523 = vmul.f32 %v411, %v507
        %v524 = vmul.f32 %v412, %v508
        %v525 = vmul.f32 %v413, %v509
        %v526 = vmul.f32 %v414, %v510
        %v527 = vmul.f32 %v415, %v511
        %v528 = vmul.f32 %v416, %v512
        %v529 = vmul.f32 %v417, %v513
        %v530 = vmul.f32 %v418, %v514
        %v531 = vmul.f32 %v419, %v515
        %v533 = vlaneseq
        %v534 = vshrl.u32 %v533, 7
        %v535 = vsub.s32 0, %v534
        %v536 = vrot.slane %v353, %v535
        %v538 = vmul.f32 %v516, %v536
        %v539 = vmul.f32 %v517, %v536
        %v540 = vmul.f32 %v518, %v536
        %v541 = vmul.f32 %v519, %v536
        %v542 = vmul.f32 %v520, %v536
        %v543 = vmul.f32 %v521, %v536
        %v544 = vmul.f32 %v522, %v536
        %v545 = vmul.f32 %v523, %v536
        %v546 = vmul.f32 %v524, %v536
        %v547 = vmul.f32 %v525, %v536
        %v548 = vmul.f32 %v526, %v536
        %v549 = vmul.f32 %v527, %v536
        %v550 = vmul.f32 %v528, %v536
        %v551 = vmul.f32 %v529, %v536
        %v552 = vmul.f32 %v530, %v536
        %v553 = vmul.f32 %v531, %v536
        %v555 = vlaneseq
        %v556 = vshrl.u32 %v555, 7
        %v557 = vsub.s32 0, %v556
        %v558 = vrot.slane %v354, %v557
        %v560 = vadd.f32 %v538, %v558
        %v561 = vadd.f32 %v539, %v558
        %v562 = vadd.f32 %v540, %v558
        %v563 = vadd.f32 %v541, %v558
        %v564 = vadd.f32 %v542, %v558
        %v565 = vadd.f32 %v543, %v558
        %v566 = vadd.f32 %v544, %v558
        %v567 = vadd.f32 %v545, %v558
        %v568 = vadd.f32 %v546, %v558
        %v569 = vadd.f32 %v547, %v558
        %v570 = vadd.f32 %v548, %v558
        %v571 = vadd.f32 %v549, %v558
        %v572 = vadd.f32 %v550, %v558
        %v573 = vadd.f32 %v551, %v558
        %v574 = vadd.f32 %v552, %v558
        %v575 = vadd.f32 %v553, %v558
        %v576 = vpack.c.bf16 %v561, %v560
        %v577 = vpack.c.bf16 %v563, %v562
        %v578 = vpack.c.bf16 %v565, %v564
        %v579 = vpack.c.bf16 %v567, %v566
        %v580 = vpack.c.bf16 %v569, %v568
        %v581 = vpack.c.bf16 %v571, %v570
        %v582 = vpack.c.bf16 %v573, %v572
        %v583 = vpack.c.bf16 %v575, %v574
        %v584 = vld [vmem:[#allocation4] sm:$0xff]
        %v585 = vld [vmem:[#allocation4 + $0x8] sm:$0xf]
        %v586 = vld [vmem:[#allocation4 + $0xc] sm:$0xff]
        %v587 = vld [vmem:[#allocation4 + $0x14] sm:$0xf]
        %v588 = vld [vmem:[#allocation4 + $0x18] sm:$0xff]
        %v589 = vld [vmem:[#allocation4 + $0x20] sm:$0xf]
        %v590 = vld [vmem:[#allocation4 + $0x24] sm:$0xff]
        %v591 = vld [vmem:[#allocation4 + $0x2c] sm:$0xf]
        %v592 = vld [vmem:[#allocation4 + $0x30] sm:$0xff]
        %v593 = vld [vmem:[#allocation4 + $0x38] sm:$0xf]
        %v594 = vld [vmem:[#allocation4 + $0x3c] sm:$0xff]
        %v595 = vld [vmem:[#allocation4 + $0x44] sm:$0xf]
        %v596 = vld [vmem:[#allocation4 + $0x48] sm:$0xff]
        %v597 = vld [vmem:[#allocation4 + $0x50] sm:$0xf]
        %v598 = vld [vmem:[#allocation4 + $0x54] sm:$0xff]
        %v599 = vld [vmem:[#allocation4 + $0x5c] sm:$0xf]
        %v600 = vld [vmem:[#allocation4 + $0x60] sm:$0xff]
        %v601 = vld [vmem:[#allocation4 + $0x68] sm:$0xf]
        %v602 = vld [vmem:[#allocation4 + $0x6c] sm:$0xff]
        %v603 = vld [vmem:[#allocation4 + $0x74] sm:$0xf]
        %v604 = vld [vmem:[#allocation4 + $0x78] sm:$0xff]
        %v605 = vld [vmem:[#allocation4 + $0x80] sm:$0xf]
        %v606 = vld [vmem:[#allocation4 + $0x84] sm:$0xff]
        %v607 = vld [vmem:[#allocation4 + $0x8c] sm:$0xf]
        %v608 = vld [vmem:[#allocation4 + $0x90] sm:$0xff]
        %v609 = vld [vmem:[#allocation4 + $0x98] sm:$0xf]
        %v610 = vld [vmem:[#allocation4 + $0x9c] sm:$0xff]
        %v611 = vld [vmem:[#allocation4 + $0xa4] sm:$0xf]
        %v612 = vld [vmem:[#allocation4 + $0xa8] sm:$0xff]
        %v613 = vld [vmem:[#allocation4 + $0xb0] sm:$0xf]
        %v614 = vld [vmem:[#allocation4 + $0xb4] sm:$0xff]
        %v615 = vld [vmem:[#allocation4 + $0xbc] sm:$0xf]
        %v648 = vunpack.c.l.b16 %v584
        %v649 = vunpack.c.h.b16 %v584
        %v650 = vunpack.c.l.b16 %v585
        %v651 = vunpack.c.l.b16 %v586
        %v652 = vunpack.c.h.b16 %v586
        %v653 = vunpack.c.l.b16 %v587
        %v654 = vunpack.c.l.b16 %v588
        %v655 = vunpack.c.h.b16 %v588
        %v656 = vunpack.c.l.b16 %v589
        %v657 = vunpack.c.l.b16 %v590
        %v658 = vunpack.c.h.b16 %v590
        %v659 = vunpack.c.l.b16 %v591
        %v660 = vunpack.c.l.b16 %v592
        %v661 = vunpack.c.h.b16 %v592
        %v662 = vunpack.c.l.b16 %v593
        %v663 = vunpack.c.l.b16 %v594
        %v664 = vunpack.c.h.b16 %v594
        %v665 = vunpack.c.l.b16 %v595
        %v666 = vunpack.c.l.b16 %v596
        %v667 = vunpack.c.h.b16 %v596
        %v668 = vunpack.c.l.b16 %v597
        %v669 = vunpack.c.l.b16 %v598
        %v670 = vunpack.c.h.b16 %v598
        %v671 = vunpack.c.l.b16 %v599
        %v672 = vunpack.c.l.b16 %v600
        %v673 = vunpack.c.h.b16 %v600
        %v674 = vunpack.c.l.b16 %v601
        %v675 = vunpack.c.l.b16 %v602
        %v676 = vunpack.c.h.b16 %v602
        %v677 = vunpack.c.l.b16 %v603
        %v678 = vunpack.c.l.b16 %v604
        %v679 = vunpack.c.h.b16 %v604
        %v680 = vunpack.c.l.b16 %v605
        %v681 = vunpack.c.l.b16 %v606
        %v682 = vunpack.c.h.b16 %v606
        %v683 = vunpack.c.l.b16 %v607
        %v684 = vunpack.c.l.b16 %v608
        %v685 = vunpack.c.h.b16 %v608
        %v686 = vunpack.c.l.b16 %v609
        %v687 = vunpack.c.l.b16 %v610
        %v688 = vunpack.c.h.b16 %v610
        %v689 = vunpack.c.l.b16 %v611
        %v690 = vunpack.c.l.b16 %v612
        %v691 = vunpack.c.h.b16 %v612
        %v692 = vunpack.c.l.b16 %v613
        %v693 = vunpack.c.l.b16 %v614
        %v694 = vunpack.c.h.b16 %v614
        %v695 = vunpack.c.l.b16 %v615
        %v696 = vpack.c.b16 %v651, %v648
        %v697 = vpack.c.b16 %v652, %v649
        %v698 = vpack.c.b16 %v653, %v650
        %v699 = vpack.c.b16 %v657, %v654
        %v700 = vpack.c.b16 %v658, %v655
        %v701 = vpack.c.b16 %v659, %v656
        %v702 = vpack.c.b16 %v663, %v660
        %v703 = vpack.c.b16 %v664, %v661
        %v704 = vpack.c.b16 %v665, %v662
        %v705 = vpack.c.b16 %v669, %v666
        %v706 = vpack.c.b16 %v670, %v667
        %v707 = vpack.c.b16 %v671, %v668
        %v708 = vpack.c.b16 %v675, %v672
        %v709 = vpack.c.b16 %v676, %v673
        %v710 = vpack.c.b16 %v677, %v674
        %v711 = vpack.c.b16 %v681, %v678
        %v712 = vpack.c.b16 %v682, %v679
        %v713 = vpack.c.b16 %v683, %v680
        %v714 = vpack.c.b16 %v687, %v684
        %v715 = vpack.c.b16 %v688, %v685
        %v716 = vpack.c.b16 %v689, %v686
        %v717 = vpack.c.b16 %v693, %v690
        %v718 = vpack.c.b16 %v694, %v691
        %v719 = vpack.c.b16 %v695, %v692
        %744 = vmatprep.subr.bf16.mxu0 %v697
        %745 = vmatpush1.bf16.msra.mxu0 %v696
        %746 = vmatprep.subr.bf16.mxu0 %v700
        %747 = vmatpush1.bf16.msra.mxu0 %v699
        %748 = vmatprep.subr.bf16.mxu0 %v703
        %749 = vmatpush1.bf16.msra.mxu0 %v702
        %750 = vmatprep.subr.bf16.mxu0 %v706
        %751 = vmatpush1.bf16.msra.mxu0 %v705
        %752 = vmatprep.subr.bf16.mxu0 %v709
        %753 = vmatpush1.bf16.msra.mxu0 %v708
        %754 = vmatprep.subr.bf16.mxu0 %v712
        %755 = vmatpush1.bf16.msra.mxu0 %v711
        %756 = vmatprep.subr.bf16.mxu0 %v715
        %757 = vmatpush1.bf16.msra.mxu0 %v714
        %758 = vmatprep.subr.bf16.mxu0 %v718
        %759 = vmatpush1.bf16.msra.mxu0 %v717
        %760 = vmatprep.subr.bf16.mxu0 0
        %761 = vmatpush1.bf16.msra.mxu0 0
        %762 = vmatprep.subr.bf16.mxu0 0
        %763 = vmatpush1.bf16.msra.mxu0 0
        %764 = vmatprep.subr.bf16.mxu0 0
        %765 = vmatpush1.bf16.msra.mxu0 0
        %766 = vmatprep.subr.bf16.mxu0 0
        %767 = vmatpush1.bf16.msra.mxu0 0
        %768 = vmatprep.subr.bf16.mxu0 0
        %769 = vmatpush1.bf16.msra.mxu0 0
        %770 = vmatprep.subr.bf16.mxu0 0
        %771 = vmatpush1.bf16.msra.mxu0 0
        %772 = vmatprep.subr.bf16.mxu0 0
        %773 = vmatpush1.bf16.msra.mxu0 0
        %774 = vmatprep.subr.bf16.mxu0 0
        %775 = vmatpush1.bf16.msra.mxu0 0
        %776 = vmatprep.mubr.bf16.mxu0 0
        %777 = vmatmul.mubr.bf16.gmra.mrb[0].mxu0 %v576
        %v778 = vpop.f32.mrb[0].mxu0
        %v779 = vadd.f32 0.0, %v778
        %v780 = vpop.f32.mrb[0].mxu0
        %v781 = vadd.f32 0.0, %v780
        %v782 = vpop.f32.mrb[0].mxu0
        %v783 = vadd.f32 0.0, %v782
        %v784 = vpop.f32.mrb[0].mxu0
        %v785 = vadd.f32 0.0, %v784
        %786 = vmatprep.mubr.bf16.mxu0 0
        %787 = vmatmul.mubr.bf16.gmra.mrb[0].mxu0 %v577
        %v788 = vpop.f32.mrb[0].mxu0
        %v789 = vadd.f32 0.0, %v788
        %v790 = vpop.f32.mrb[0].mxu0
        %v791 = vadd.f32 0.0, %v790
        %v792 = vpop.f32.mrb[0].mxu0
        %v793 = vadd.f32 0.0, %v792
        %v794 = vpop.f32.mrb[0].mxu0
        %v795 = vadd.f32 0.0, %v794
        %796 = vmatprep.mubr.bf16.mxu0 0
        %797 = vmatmul.mubr.bf16.gmra.mrb[0].mxu0 %v578
        %v798 = vpop.f32.mrb[0].mxu0
        %v799 = vadd.f32 0.0, %v798
        %v800 = vpop.f32.mrb[0].mxu0
        %v801 = vadd.f32 0.0, %v800
        %v802 = vpop.f32.mrb[0].mxu0
        %v803 = vadd.f32 0.0, %v802
        %v804 = vpop.f32.mrb[0].mxu0
        %v805 = vadd.f32 0.0, %v804
        %806 = vmatprep.mubr.bf16.mxu0 0
        %807 = vmatmul.mubr.bf16.gmra.mrb[0].mxu0 %v579
        %v808 = vpop.f32.mrb[0].mxu0
        %v809 = vadd.f32 0.0, %v808
        %v810 = vpop.f32.mrb[0].mxu0
        %v811 = vadd.f32 0.0, %v810
        %v812 = vpop.f32.mrb[0].mxu0
        %v813 = vadd.f32 0.0, %v812
        %v814 = vpop.f32.mrb[0].mxu0
        %v815 = vadd.f32 0.0, %v814
        %816 = vmatprep.mubr.bf16.mxu0 0
        %817 = vmatmul.mubr.bf16.gmra.mrb[0].mxu0 %v580
        %v818 = vpop.f32.mrb[0].mxu0
        %v819 = vadd.f32 0.0, %v818
        %v820 = vpop.f32.mrb[0].mxu0
        %v821 = vadd.f32 0.0, %v820
        %v822 = vpop.f32.mrb[0].mxu0
        %v823 = vadd.f32 0.0, %v822
        %v824 = vpop.f32.mrb[0].mxu0
        %v825 = vadd.f32 0.0, %v824
        %826 = vmatprep.mubr.bf16.mxu0 0
        %827 = vmatmul.mubr.bf16.gmra.mrb[0].mxu0 %v581
        %v828 = vpop.f32.mrb[0].mxu0
        %v829 = vadd.f32 0.0, %v828
        %v830 = vpop.f32.mrb[0].mxu0
        %v831 = vadd.f32 0.0, %v830
        %v832 = vpop.f32.mrb[0].mxu0
        %v833 = vadd.f32 0.0, %v832
        %v834 = vpop.f32.mrb[0].mxu0
        %v835 = vadd.f32 0.0, %v834
        %836 = vmatprep.mubr.bf16.mxu0 0
        %837 = vmatmul.mubr.bf16.gmra.mrb[0].mxu0 %v582
        %v838 = vpop.f32.mrb[0].mxu0
        %v839 = vadd.f32 0.0, %v838
        %v840 = vpop.f32.mrb[0].mxu0
        %v841 = vadd.f32 0.0, %v840
        %v842 = vpop.f32.mrb[0].mxu0
        %v843 = vadd.f32 0.0, %v842
        %v844 = vpop.f32.mrb[0].mxu0
        %v845 = vadd.f32 0.0, %v844
        %846 = vmatprep.mubr.bf16.mxu0 0
        %847 = vmatmul.mubr.bf16.gmra.mrb[0].mxu0 %v583
        %v848 = vpop.f32.mrb[0].mxu0
        %v849 = vadd.f32 0.0, %v848
        %v850 = vpop.f32.mrb[0].mxu0
        %v851 = vadd.f32 0.0, %v850
        %v852 = vpop.f32.mrb[0].mxu0
        %v853 = vadd.f32 0.0, %v852
        %v854 = vpop.f32.mrb[0].mxu0
        %v855 = vadd.f32 0.0, %v854
        %856 = vdwg.mxu0
        %857 = vmatprep.subr.bf16.mxu0 0
        %858 = vmatpush1.bf16.msra.mxu0 %v698
        %859 = vmatprep.subr.bf16.mxu0 0
        %860 = vmatpush1.bf16.msra.mxu0 %v701
        %861 = vmatprep.subr.bf16.mxu0 0
        %862 = vmatpush1.bf16.msra.mxu0 %v704
        %863 = vmatprep.subr.bf16.mxu0 0
        %864 = vmatpush1.bf16.msra.mxu0 %v707
        %865 = vmatprep.subr.bf16.mxu0 0
        %866 = vmatpush1.bf16.msra.mxu0 %v710
        %867 = vmatprep.subr.bf16.mxu0 0
        %868 = vmatpush1.bf16.msra.mxu0 %v713
        %869 = vmatprep.subr.bf16.mxu0 0
        %870 = vmatpush1.bf16.msra.mxu0 %v716
        %871 = vmatprep.subr.bf16.mxu0 0
        %872 = vmatpush1.bf16.msra.mxu0 %v719
        %873 = vmatprep.subr.bf16.mxu0 0
        %874 = vmatpush1.bf16.msra.mxu0 0
        %875 = vmatprep.subr.bf16.mxu0 0
        %876 = vmatpush1.bf16.msra.mxu0 0
        %877 = vmatprep.subr.bf16.mxu0 0
        %878 = vmatpush1.bf16.msra.mxu0 0
        %879 = vmatprep.subr.bf16.mxu0 0
        %880 = vmatpush1.bf16.msra.mxu0 0
        %881 = vmatprep.subr.bf16.mxu0 0
        %882 = vmatpush1.bf16.msra.mxu0 0
        %883 = vmatprep.subr.bf16.mxu0 0
        %884 = vmatpush1.bf16.msra.mxu0 0
        %885 = vmatprep.subr.bf16.mxu0 0
        %886 = vmatpush1.bf16.msra.mxu0 0
        %887 = vmatprep.subr.bf16.mxu0 0
        %888 = vmatpush1.bf16.msra.mxu0 0
        %889 = vmatprep.mubr.bf16.mxu0 0
        %890 = vmatmul.mubr.bf16.gmra.mrb[0].mxu0 %v576
        %v891 = vpop.f32.mrb[0].mxu0
        %v892 = vadd.f32 0.0, %v891
        %v893 = vpop.f32.mrb[0].mxu0
        %v894 = vpop.f32.mrb[0].mxu0
        %v895 = vadd.f32 0.0, %v894
        %v896 = vpop.f32.mrb[0].mxu0
        %897 = vmatprep.mubr.bf16.mxu0 0
        %898 = vmatmul.mubr.bf16.gmra.mrb[0].mxu0 %v577
        %v899 = vpop.f32.mrb[0].mxu0
        %v900 = vadd.f32 0.0, %v899
        %v901 = vpop.f32.mrb[0].mxu0
        %v902 = vpop.f32.mrb[0].mxu0
        %v903 = vadd.f32 0.0, %v902
        %v904 = vpop.f32.mrb[0].mxu0
        %905 = vmatprep.mubr.bf16.mxu0 0
        %906 = vmatmul.mubr.bf16.gmra.mrb[0].mxu0 %v578
        %v907 = vpop.f32.mrb[0].mxu0
        %v908 = vadd.f32 0.0, %v907
        %v909 = vpop.f32.mrb[0].mxu0
        %v910 = vpop.f32.mrb[0].mxu0
        %v911 = vadd.f32 0.0, %v910
        %v912 = vpop.f32.mrb[0].mxu0
        %913 = vmatprep.mubr.bf16.mxu0 0
        %914 = vmatmul.mubr.bf16.gmra.mrb[0].mxu0 %v579
        %v915 = vpop.f32.mrb[0].mxu0
        %v916 = vadd.f32 0.0, %v915
        %v917 = vpop.f32.mrb[0].mxu0
        %v918 = vpop.f32.mrb[0].mxu0
        %v919 = vadd.f32 0.0, %v918
        %v920 = vpop.f32.mrb[0].mxu0
        %921 = vmatprep.mubr.bf16.mxu0 0
        %922 = vmatmul.mubr.bf16.gmra.mrb[0].mxu0 %v580
        %v923 = vpop.f32.mrb[0].mxu0
        %v924 = vadd.f32 0.0, %v923
        %v925 = vpop.f32.mrb[0].mxu0
        %v926 = vpop.f32.mrb[0].mxu0
        %v927 = vadd.f32 0.0, %v926
        %v928 = vpop.f32.mrb[0].mxu0
        %929 = vmatprep.mubr.bf16.mxu0 0
        %930 = vmatmul.mubr.bf16.gmra.mrb[0].mxu0 %v581
        %v931 = vpop.f32.mrb[0].mxu0
        %v932 = vadd.f32 0.0, %v931
        %v933 = vpop.f32.mrb[0].mxu0
        %v934 = vpop.f32.mrb[0].mxu0
        %v935 = vadd.f32 0.0, %v934
        %v936 = vpop.f32.mrb[0].mxu0
        %937 = vmatprep.mubr.bf16.mxu0 0
        %938 = vmatmul.mubr.bf16.gmra.mrb[0].mxu0 %v582
        %v939 = vpop.f32.mrb[0].mxu0
        %v940 = vadd.f32 0.0, %v939
        %v941 = vpop.f32.mrb[0].mxu0
        %v942 = vpop.f32.mrb[0].mxu0
        %v943 = vadd.f32 0.0, %v942
        %v944 = vpop.f32.mrb[0].mxu0
        %945 = vmatprep.mubr.bf16.mxu0 0
        %946 = vmatmul.mubr.bf16.gmra.mrb[0].mxu0 %v583
        %v947 = vpop.f32.mrb[0].mxu0
        %v948 = vadd.f32 0.0, %v947
        %v949 = vpop.f32.mrb[0].mxu0
        %v950 = vpop.f32.mrb[0].mxu0
        %v951 = vadd.f32 0.0, %v950
        %v952 = vpop.f32.mrb[0].mxu0
        %953 = vdwg.mxu0
        %v954 = vpack.c.bf16 %v783, %v779
        %v955 = vpack.c.bf16 %v785, %v781
        %v956 = vpack.c.bf16 %v895, %v892
        %v957 = vpack.c.bf16 %v793, %v789
        %v958 = vpack.c.bf16 %v795, %v791
        %v959 = vpack.c.bf16 %v903, %v900
        %v960 = vpack.c.bf16 %v803, %v799
        %v961 = vpack.c.bf16 %v805, %v801
        %v962 = vpack.c.bf16 %v911, %v908
        %v963 = vpack.c.bf16 %v813, %v809
        %v964 = vpack.c.bf16 %v815, %v811
        %v965 = vpack.c.bf16 %v919, %v916
        %v966 = vpack.c.bf16 %v823, %v819
        %v967 = vpack.c.bf16 %v825, %v821
        %v968 = vpack.c.bf16 %v927, %v924
        %v969 = vpack.c.bf16 %v833, %v829
        %v970 = vpack.c.bf16 %v835, %v831
        %v971 = vpack.c.bf16 %v935, %v932
        %v972 = vpack.c.bf16 %v843, %v839
        %v973 = vpack.c.bf16 %v845, %v841
        %v974 = vpack.c.bf16 %v943, %v940
        %v975 = vpack.c.bf16 %v853, %v849
        %v976 = vpack.c.bf16 %v855, %v851
        %v977 = vpack.c.bf16 %v951, %v948
        %v986 = vunpack.c.l.b16 %v954
        %v987 = vunpack.c.h.b16 %v954
        %v988 = vunpack.c.l.b16 %v957
        %v989 = vunpack.c.h.b16 %v957
        %v990 = vunpack.c.l.b16 %v960
        %v991 = vunpack.c.h.b16 %v960
        %v992 = vunpack.c.l.b16 %v963
        %v993 = vunpack.c.h.b16 %v963
        %v994 = vunpack.c.l.b16 %v966
        %v995 = vunpack.c.h.b16 %v966
        %v996 = vunpack.c.l.b16 %v969
        %v997 = vunpack.c.h.b16 %v969
        %v998 = vunpack.c.l.b16 %v972
        %v999 = vunpack.c.h.b16 %v972
        %v1000 = vunpack.c.l.b16 %v975
        %v1001 = vunpack.c.h.b16 %v975
        %v1002 = vpack.c.b16 %v986, %v986
        %v1003 = vpack.c.b16 %v987, %v987
        %v1004 = vpack.c.b16 %v988, %v988
        %v1005 = vpack.c.b16 %v989, %v989
        %v1006 = vpack.c.b16 %v990, %v990
        %v1007 = vpack.c.b16 %v991, %v991
        %v1008 = vpack.c.b16 %v992, %v992
        %v1009 = vpack.c.b16 %v993, %v993
        %v1010 = vpack.c.b16 %v994, %v994
        %v1011 = vpack.c.b16 %v995, %v995
        %v1012 = vpack.c.b16 %v996, %v996
        %v1013 = vpack.c.b16 %v997, %v997
        %v1014 = vpack.c.b16 %v998, %v998
        %v1015 = vpack.c.b16 %v999, %v999
        %v1016 = vpack.c.b16 %v1000, %v1000
        %v1017 = vpack.c.b16 %v1001, %v1001
        %vm1034 = vcmask 257024
        %1035 = vst.msk [vmem:[%s303] sm:$0xf] %vm1034, %v1002
        %1036 = vst.msk [vmem:[%s303 + $0x4] sm:$0xf] %vm1034, %v1003
        %1037 = vst.msk [vmem:[%s303 + $0x8] sm:$0xf] %vm1034, %v1004
        %1038 = vst.msk [vmem:[%s303 + $0xc] sm:$0xf] %vm1034, %v1005
        %1039 = vst.msk [vmem:[%s303 + $0x10] sm:$0xf] %vm1034, %v1006
        %1040 = vst.msk [vmem:[%s303 + $0x14] sm:$0xf] %vm1034, %v1007
        %1041 = vst.msk [vmem:[%s303 + $0x18] sm:$0xf] %vm1034, %v1008
        %1042 = vst.msk [vmem:[%s303 + $0x1c] sm:$0xf] %vm1034, %v1009
        %1043 = vst.msk [vmem:[%s303 + $0x20] sm:$0xf] %vm1034, %v1010
        %1044 = vst.msk [vmem:[%s303 + $0x24] sm:$0xf] %vm1034, %v1011
        %1045 = vst.msk [vmem:[%s303 + $0x28] sm:$0xf] %vm1034, %v1012
        %1046 = vst.msk [vmem:[%s303 + $0x2c] sm:$0xf] %vm1034, %v1013
        %1047 = vst.msk [vmem:[%s303 + $0x30] sm:$0xf] %vm1034, %v1014
        %1048 = vst.msk [vmem:[%s303 + $0x34] sm:$0xf] %vm1034, %v1015
        %1049 = vst.msk [vmem:[%s303 + $0x38] sm:$0xf] %vm1034, %v1016
        %1050 = vst.msk [vmem:[%s303 + $0x3c] sm:$0xf] %vm1034, %v1017
        %v1059 = vunpack.c.l.b16 %v955
        %v1060 = vunpack.c.h.b16 %v955
        %v1061 = vunpack.c.l.b16 %v958
        %v1062 = vunpack.c.h.b16 %v958
        %v1063 = vunpack.c.l.b16 %v961
        %v1064 = vunpack.c.h.b16 %v961
        %v1065 = vunpack.c.l.b16 %v964
        %v1066 = vunpack.c.h.b16 %v964
        %v1067 = vunpack.c.l.b16 %v967
        %v1068 = vunpack.c.h.b16 %v967
        %v1069 = vunpack.c.l.b16 %v970
        %v1070 = vunpack.c.h.b16 %v970
        %v1071 = vunpack.c.l.b16 %v973
        %v1072 = vunpack.c.h.b16 %v973
        %v1073 = vunpack.c.l.b16 %v976
        %v1074 = vunpack.c.h.b16 %v976
        %v1075 = vpack.c.b16 %v1059, %v1059
        %v1076 = vpack.c.b16 %v1060, %v1060
        %v1077 = vpack.c.b16 %v1061, %v1061
        %v1078 = vpack.c.b16 %v1062, %v1062
        %v1079 = vpack.c.b16 %v1063, %v1063
        %v1080 = vpack.c.b16 %v1064, %v1064
        %v1081 = vpack.c.b16 %v1065, %v1065
        %v1082 = vpack.c.b16 %v1066, %v1066
        %v1083 = vpack.c.b16 %v1067, %v1067
        %v1084 = vpack.c.b16 %v1068, %v1068
        %v1085 = vpack.c.b16 %v1069, %v1069
        %v1086 = vpack.c.b16 %v1070, %v1070
        %v1087 = vpack.c.b16 %v1071, %v1071
        %v1088 = vpack.c.b16 %v1072, %v1072
        %v1089 = vpack.c.b16 %v1073, %v1073
        %v1090 = vpack.c.b16 %v1074, %v1074
        %1107 = vst.msk [vmem:[%s309] sm:$0xf] %vm1034, %v1075
        %1108 = vst.msk [vmem:[%s309 + $0x4] sm:$0xf] %vm1034, %v1076
        %1109 = vst.msk [vmem:[%s309 + $0x8] sm:$0xf] %vm1034, %v1077
        %1110 = vst.msk [vmem:[%s309 + $0xc] sm:$0xf] %vm1034, %v1078
        %1111 = vst.msk [vmem:[%s309 + $0x10] sm:$0xf] %vm1034, %v1079
        %1112 = vst.msk [vmem:[%s309 + $0x14] sm:$0xf] %vm1034, %v1080
        %1113 = vst.msk [vmem:[%s309 + $0x18] sm:$0xf] %vm1034, %v1081
        %1114 = vst.msk [vmem:[%s309 + $0x1c] sm:$0xf] %vm1034, %v1082
        %1115 = vst.msk [vmem:[%s309 + $0x20] sm:$0xf] %vm1034, %v1083
        %1116 = vst.msk [vmem:[%s309 + $0x24] sm:$0xf] %vm1034, %v1084
        %1117 = vst.msk [vmem:[%s309 + $0x28] sm:$0xf] %vm1034, %v1085
        %1118 = vst.msk [vmem:[%s309 + $0x2c] sm:$0xf] %vm1034, %v1086
        %1119 = vst.msk [vmem:[%s309 + $0x30] sm:$0xf] %vm1034, %v1087
        %1120 = vst.msk [vmem:[%s309 + $0x34] sm:$0xf] %vm1034, %v1088
        %1121 = vst.msk [vmem:[%s309 + $0x38] sm:$0xf] %vm1034, %v1089
        %1122 = vst.msk [vmem:[%s309 + $0x3c] sm:$0xf] %vm1034, %v1090
        %v1131 = vunpack.c.l.b16 %v956
        %v1132 = vunpack.c.h.b16 %v956
        %v1133 = vunpack.c.l.b16 %v959
        %v1134 = vunpack.c.h.b16 %v959
        %v1135 = vunpack.c.l.b16 %v962
        %v1136 = vunpack.c.h.b16 %v962
        %v1137 = vunpack.c.l.b16 %v965
        %v1138 = vunpack.c.h.b16 %v965
        %v1139 = vunpack.c.l.b16 %v968
        %v1140 = vunpack.c.h.b16 %v968
        %v1141 = vunpack.c.l.b16 %v971
        %v1142 = vunpack.c.h.b16 %v971
        %v1143 = vunpack.c.l.b16 %v974
        %v1144 = vunpack.c.h.b16 %v974
        %v1145 = vunpack.c.l.b16 %v977
        %v1146 = vunpack.c.h.b16 %v977
        %v1147 = vpack.c.b16 %v1131, %v1131
        %v1148 = vpack.c.b16 %v1132, %v1132
        %v1149 = vpack.c.b16 %v1133, %v1133
        %v1150 = vpack.c.b16 %v1134, %v1134
        %v1151 = vpack.c.b16 %v1135, %v1135
        %v1152 = vpack.c.b16 %v1136, %v1136
        %v1153 = vpack.c.b16 %v1137, %v1137
        %v1154 = vpack.c.b16 %v1138, %v1138
        %v1155 = vpack.c.b16 %v1139, %v1139
        %v1156 = vpack.c.b16 %v1140, %v1140
        %v1157 = vpack.c.b16 %v1141, %v1141
        %v1158 = vpack.c.b16 %v1142, %v1142
        %v1159 = vpack.c.b16 %v1143, %v1143
        %v1160 = vpack.c.b16 %v1144, %v1144
        %v1161 = vpack.c.b16 %v1145, %v1145
        %v1162 = vpack.c.b16 %v1146, %v1146
        %1179 = vst.msk [vmem:[%s315] sm:$0xf] %vm1034, %v1147
        %1180 = vst.msk [vmem:[%s315 + $0x4] sm:$0xf] %vm1034, %v1148
        %1181 = vst.msk [vmem:[%s315 + $0x8] sm:$0xf] %vm1034, %v1149
        %1182 = vst.msk [vmem:[%s315 + $0xc] sm:$0xf] %vm1034, %v1150
        %1183 = vst.msk [vmem:[%s315 + $0x10] sm:$0xf] %vm1034, %v1151
        %1184 = vst.msk [vmem:[%s315 + $0x14] sm:$0xf] %vm1034, %v1152
        %1185 = vst.msk [vmem:[%s315 + $0x18] sm:$0xf] %vm1034, %v1153
        %1186 = vst.msk [vmem:[%s315 + $0x1c] sm:$0xf] %vm1034, %v1154
        %1187 = vst.msk [vmem:[%s315 + $0x20] sm:$0xf] %vm1034, %v1155
        %1188 = vst.msk [vmem:[%s315 + $0x24] sm:$0xf] %vm1034, %v1156
        %1189 = vst.msk [vmem:[%s315 + $0x28] sm:$0xf] %vm1034, %v1157
        %1190 = vst.msk [vmem:[%s315 + $0x2c] sm:$0xf] %vm1034, %v1158
        %1191 = vst.msk [vmem:[%s315 + $0x30] sm:$0xf] %vm1034, %v1159
        %1192 = vst.msk [vmem:[%s315 + $0x34] sm:$0xf] %vm1034, %v1160
        %1193 = vst.msk [vmem:[%s315 + $0x38] sm:$0xf] %vm1034, %v1161
        %1194 = vst.msk [vmem:[%s315 + $0x3c] sm:$0xf] %vm1034, %v1162
        %1195 = vrot.lane.b32.xlu0 %v1002, 96
        %v1196 = vpop.permute.xlu0 %1195
        %1197 = vrot.lane.b32.xlu0 %v1003, 96
        %v1198 = vpop.permute.xlu0 %1197
        %1199 = vrot.lane.b32.xlu0 %v1004, 96
        %v1200 = vpop.permute.xlu0 %1199
        %1201 = vrot.lane.b32.xlu0 %v1005, 96
        %v1202 = vpop.permute.xlu0 %1201
        %1203 = vrot.lane.b32.xlu0 %v1006, 96
        %v1204 = vpop.permute.xlu0 %1203
        %1205 = vrot.lane.b32.xlu0 %v1007, 96
        %v1206 = vpop.permute.xlu0 %1205
        %1207 = vrot.lane.b32.xlu0 %v1008, 96
        %v1208 = vpop.permute.xlu0 %1207
        %1209 = vrot.lane.b32.xlu0 %v1009, 96
        %v1210 = vpop.permute.xlu0 %1209
        %1211 = vrot.lane.b32.xlu0 %v1010, 96
        %v1212 = vpop.permute.xlu0 %1211
        %1213 = vrot.lane.b32.xlu0 %v1011, 96
        %v1214 = vpop.permute.xlu0 %1213
        %1215 = vrot.lane.b32.xlu0 %v1012, 96
        %v1216 = vpop.permute.xlu0 %1215
        %1217 = vrot.lane.b32.xlu0 %v1013, 96
        %v1218 = vpop.permute.xlu0 %1217
        %1219 = vrot.lane.b32.xlu0 %v1014, 96
        %v1220 = vpop.permute.xlu0 %1219
        %1221 = vrot.lane.b32.xlu0 %v1015, 96
        %v1222 = vpop.permute.xlu0 %1221
        %1223 = vrot.lane.b32.xlu0 %v1016, 96
        %v1224 = vpop.permute.xlu0 %1223
        %1225 = vrot.lane.b32.xlu0 %v1017, 96
        %v1226 = vpop.permute.xlu0 %1225
        %s1243 = scalar_lea.vmem %s303, 64 [#allocation6]
        %1244 = vst.msk [vmem:[%s1243] sm:$0xf] %vm1034, %v1196
        %1245 = vst.msk [vmem:[%s1243 + $0x4] sm:$0xf] %vm1034, %v1198
        %1246 = vst.msk [vmem:[%s1243 + $0x8] sm:$0xf] %vm1034, %v1200
        %1247 = vst.msk [vmem:[%s1243 + $0xc] sm:$0xf] %vm1034, %v1202
        %1248 = vst.msk [vmem:[%s1243 + $0x10] sm:$0xf] %vm1034, %v1204
        %1249 = vst.msk [vmem:[%s1243 + $0x14] sm:$0xf] %vm1034, %v1206
        %1250 = vst.msk [vmem:[%s1243 + $0x18] sm:$0xf] %vm1034, %v1208
        %1251 = vst.msk [vmem:[%s1243 + $0x1c] sm:$0xf] %vm1034, %v1210
        %1252 = vst.msk [vmem:[%s1243 + $0x20] sm:$0xf] %vm1034, %v1212
        %1253 = vst.msk [vmem:[%s1243 + $0x24] sm:$0xf] %vm1034, %v1214
        %1254 = vst.msk [vmem:[%s1243 + $0x28] sm:$0xf] %vm1034, %v1216
        %1255 = vst.msk [vmem:[%s1243 + $0x2c] sm:$0xf] %vm1034, %v1218
        %1256 = vst.msk [vmem:[%s1243 + $0x30] sm:$0xf] %vm1034, %v1220
        %1257 = vst.msk [vmem:[%s1243 + $0x34] sm:$0xf] %vm1034, %v1222
        %1258 = vst.msk [vmem:[%s1243 + $0x38] sm:$0xf] %vm1034, %v1224
        %1259 = vst.msk [vmem:[%s1243 + $0x3c] sm:$0xf] %vm1034, %v1226
        %1260 = vrot.lane.b32.xlu0 %v1075, 96
        %v1261 = vpop.permute.xlu0 %1260
        %1262 = vrot.lane.b32.xlu0 %v1076, 96
        %v1263 = vpop.permute.xlu0 %1262
        %1264 = vrot.lane.b32.xlu0 %v1077, 96
        %v1265 = vpop.permute.xlu0 %1264
        %1266 = vrot.lane.b32.xlu0 %v1078, 96
        %v1267 = vpop.permute.xlu0 %1266
        %1268 = vrot.lane.b32.xlu0 %v1079, 96
        %v1269 = vpop.permute.xlu0 %1268
        %1270 = vrot.lane.b32.xlu0 %v1080, 96
        %v1271 = vpop.permute.xlu0 %1270
        %1272 = vrot.lane.b32.xlu0 %v1081, 96
        %v1273 = vpop.permute.xlu0 %1272
        %1274 = vrot.lane.b32.xlu0 %v1082, 96
        %v1275 = vpop.permute.xlu0 %1274
        %1276 = vrot.lane.b32.xlu0 %v1083, 96
        %v1277 = vpop.permute.xlu0 %1276
        %1278 = vrot.lane.b32.xlu0 %v1084, 96
        %v1279 = vpop.permute.xlu0 %1278
        %1280 = vrot.lane.b32.xlu0 %v1085, 96
        %v1281 = vpop.permute.xlu0 %1280
        %1282 = vrot.lane.b32.xlu0 %v1086, 96
        %v1283 = vpop.permute.xlu0 %1282
        %1284 = vrot.lane.b32.xlu0 %v1087, 96
        %v1285 = vpop.permute.xlu0 %1284
        %1286 = vrot.lane.b32.xlu0 %v1088, 96
        %v1287 = vpop.permute.xlu0 %1286
        %1288 = vrot.lane.b32.xlu0 %v1089, 96
        %v1289 = vpop.permute.xlu0 %1288
        %1290 = vrot.lane.b32.xlu0 %v1090, 96
        %v1291 = vpop.permute.xlu0 %1290
        %s1308 = scalar_lea.vmem %s309, 64 [#allocation7]
        %1309 = vst.msk [vmem:[%s1308] sm:$0xf] %vm1034, %v1261
        %1310 = vst.msk [vmem:[%s1308 + $0x4] sm:$0xf] %vm1034, %v1263
        %1311 = vst.msk [vmem:[%s1308 + $0x8] sm:$0xf] %vm1034, %v1265
        %1312 = vst.msk [vmem:[%s1308 + $0xc] sm:$0xf] %vm1034, %v1267
        %1313 = vst.msk [vmem:[%s1308 + $0x10] sm:$0xf] %vm1034, %v1269
        %1314 = vst.msk [vmem:[%s1308 + $0x14] sm:$0xf] %vm1034, %v1271
        %1315 = vst.msk [vmem:[%s1308 + $0x18] sm:$0xf] %vm1034, %v1273
        %1316 = vst.msk [vmem:[%s1308 + $0x1c] sm:$0xf] %vm1034, %v1275
        %1317 = vst.msk [vmem:[%s1308 + $0x20] sm:$0xf] %vm1034, %v1277
        %1318 = vst.msk [vmem:[%s1308 + $0x24] sm:$0xf] %vm1034, %v1279
        %1319 = vst.msk [vmem:[%s1308 + $0x28] sm:$0xf] %vm1034, %v1281
        %1320 = vst.msk [vmem:[%s1308 + $0x2c] sm:$0xf] %vm1034, %v1283
        %1321 = vst.msk [vmem:[%s1308 + $0x30] sm:$0xf] %vm1034, %v1285
        %1322 = vst.msk [vmem:[%s1308 + $0x34] sm:$0xf] %vm1034, %v1287
        %1323 = vst.msk [vmem:[%s1308 + $0x38] sm:$0xf] %vm1034, %v1289
        %1324 = vst.msk [vmem:[%s1308 + $0x3c] sm:$0xf] %vm1034, %v1291
        %1325 = vrot.lane.b32.xlu0 %v1147, 96
        %v1326 = vpop.permute.xlu0 %1325
        %1327 = vrot.lane.b32.xlu0 %v1148, 96
        %v1328 = vpop.permute.xlu0 %1327
        %1329 = vrot.lane.b32.xlu0 %v1149, 96
        %v1330 = vpop.permute.xlu0 %1329
        %1331 = vrot.lane.b32.xlu0 %v1150, 96
        %v1332 = vpop.permute.xlu0 %1331
        %1333 = vrot.lane.b32.xlu0 %v1151, 96
        %v1334 = vpop.permute.xlu0 %1333
        %1335 = vrot.lane.b32.xlu0 %v1152, 96
        %v1336 = vpop.permute.xlu0 %1335
        %1337 = vrot.lane.b32.xlu0 %v1153, 96
        %v1338 = vpop.permute.xlu0 %1337
        %1339 = vrot.lane.b32.xlu0 %v1154, 96
        %v1340 = vpop.permute.xlu0 %1339
        %1341 = vrot.lane.b32.xlu0 %v1155, 96
        %v1342 = vpop.permute.xlu0 %1341
        %1343 = vrot.lane.b32.xlu0 %v1156, 96
        %v1344 = vpop.permute.xlu0 %1343
        %1345 = vrot.lane.b32.xlu0 %v1157, 96
        %v1346 = vpop.permute.xlu0 %1345
        %1347 = vrot.lane.b32.xlu0 %v1158, 96
        %v1348 = vpop.permute.xlu0 %1347
        %1349 = vrot.lane.b32.xlu0 %v1159, 96
        %v1350 = vpop.permute.xlu0 %1349
        %1351 = vrot.lane.b32.xlu0 %v1160, 96
        %v1352 = vpop.permute.xlu0 %1351
        %1353 = vrot.lane.b32.xlu0 %v1161, 96
        %v1354 = vpop.permute.xlu0 %1353
        %1355 = vrot.lane.b32.xlu0 %v1162, 96
        %v1356 = vpop.permute.xlu0 %1355
        %s1373 = scalar_lea.vmem %s315, 64 [#allocation8]
        %1374 = vst.msk [vmem:[%s1373] sm:$0xf] %vm1034, %v1326
        %1375 = vst.msk [vmem:[%s1373 + $0x4] sm:$0xf] %vm1034, %v1328
        %1376 = vst.msk [vmem:[%s1373 + $0x8] sm:$0xf] %vm1034, %v1330
        %1377 = vst.msk [vmem:[%s1373 + $0xc] sm:$0xf] %vm1034, %v1332
        %1378 = vst.msk [vmem:[%s1373 + $0x10] sm:$0xf] %vm1034, %v1334
        %1379 = vst.msk [vmem:[%s1373 + $0x14] sm:$0xf] %vm1034, %v1336
        %1380 = vst.msk [vmem:[%s1373 + $0x18] sm:$0xf] %vm1034, %v1338
        %1381 = vst.msk [vmem:[%s1373 + $0x1c] sm:$0xf] %vm1034, %v1340
        %1382 = vst.msk [vmem:[%s1373 + $0x20] sm:$0xf] %vm1034, %v1342
        %1383 = vst.msk [vmem:[%s1373 + $0x24] sm:$0xf] %vm1034, %v1344
        %1384 = vst.msk [vmem:[%s1373 + $0x28] sm:$0xf] %vm1034, %v1346
        %1385 = vst.msk [vmem:[%s1373 + $0x2c] sm:$0xf] %vm1034, %v1348
        %1386 = vst.msk [vmem:[%s1373 + $0x30] sm:$0xf] %vm1034, %v1350
        %1387 = vst.msk [vmem:[%s1373 + $0x34] sm:$0xf] %vm1034, %v1352
        %1388 = vst.msk [vmem:[%s1373 + $0x38] sm:$0xf] %vm1034, %v1354
        %1389 = vst.msk [vmem:[%s1373 + $0x3c] sm:$0xf] %vm1034, %v1356
        %1390 = vrot.lane.b32.xlu0 %v1002, 64
        %v1391 = vpop.permute.xlu0 %1390
        %1392 = vrot.lane.b32.xlu0 %v1003, 64
        %v1393 = vpop.permute.xlu0 %1392
        %1394 = vrot.lane.b32.xlu0 %v1004, 64
        %v1395 = vpop.permute.xlu0 %1394
        %1396 = vrot.lane.b32.xlu0 %v1005, 64
        %v1397 = vpop.permute.xlu0 %1396
        %1398 = vrot.lane.b32.xlu0 %v1006, 64
        %v1399 = vpop.permute.xlu0 %1398
        %1400 = vrot.lane.b32.xlu0 %v1007, 64
        %v1401 = vpop.permute.xlu0 %1400
        %1402 = vrot.lane.b32.xlu0 %v1008, 64
        %v1403 = vpop.permute.xlu0 %1402
        %1404 = vrot.lane.b32.xlu0 %v1009, 64
        %v1405 = vpop.permute.xlu0 %1404
        %1406 = vrot.lane.b32.xlu0 %v1010, 64
        %v1407 = vpop.permute.xlu0 %1406
        %1408 = vrot.lane.b32.xlu0 %v1011, 64
        %v1409 = vpop.permute.xlu0 %1408
        %1410 = vrot.lane.b32.xlu0 %v1012, 64
        %v1411 = vpop.permute.xlu0 %1410
        %1412 = vrot.lane.b32.xlu0 %v1013, 64
        %v1413 = vpop.permute.xlu0 %1412
        %1414 = vrot.lane.b32.xlu0 %v1014, 64
        %v1415 = vpop.permute.xlu0 %1414
        %1416 = vrot.lane.b32.xlu0 %v1015, 64
        %v1417 = vpop.permute.xlu0 %1416
        %1418 = vrot.lane.b32.xlu0 %v1016, 64
        %v1419 = vpop.permute.xlu0 %1418
        %1420 = vrot.lane.b32.xlu0 %v1017, 64
        %v1421 = vpop.permute.xlu0 %1420
        %s1438 = scalar_lea.vmem %s303, 128 [#allocation6]
        %1439 = vst.msk [vmem:[%s1438] sm:$0xf] %vm1034, %v1391
        %1440 = vst.msk [vmem:[%s1438 + $0x4] sm:$0xf] %vm1034, %v1393
        %1441 = vst.msk [vmem:[%s1438 + $0x8] sm:$0xf] %vm1034, %v1395
        %1442 = vst.msk [vmem:[%s1438 + $0xc] sm:$0xf] %vm1034, %v1397
        %1443 = vst.msk [vmem:[%s1438 + $0x10] sm:$0xf] %vm1034, %v1399
        %1444 = vst.msk [vmem:[%s1438 + $0x14] sm:$0xf] %vm1034, %v1401
        %1445 = vst.msk [vmem:[%s1438 + $0x18] sm:$0xf] %vm1034, %v1403
        %1446 = vst.msk [vmem:[%s1438 + $0x1c] sm:$0xf] %vm1034, %v1405
        %1447 = vst.msk [vmem:[%s1438 + $0x20] sm:$0xf] %vm1034, %v1407
        %1448 = vst.msk [vmem:[%s1438 + $0x24] sm:$0xf] %vm1034, %v1409
        %1449 = vst.msk [vmem:[%s1438 + $0x28] sm:$0xf] %vm1034, %v1411
        %1450 = vst.msk [vmem:[%s1438 + $0x2c] sm:$0xf] %vm1034, %v1413
        %1451 = vst.msk [vmem:[%s1438 + $0x30] sm:$0xf] %vm1034, %v1415
        %1452 = vst.msk [vmem:[%s1438 + $0x34] sm:$0xf] %vm1034, %v1417
        %1453 = vst.msk [vmem:[%s1438 + $0x38] sm:$0xf] %vm1034, %v1419
        %1454 = vst.msk [vmem:[%s1438 + $0x3c] sm:$0xf] %vm1034, %v1421
        %1455 = vrot.lane.b32.xlu0 %v1075, 64
        %v1456 = vpop.permute.xlu0 %1455
        %1457 = vrot.lane.b32.xlu0 %v1076, 64
        %v1458 = vpop.permute.xlu0 %1457
        %1459 = vrot.lane.b32.xlu0 %v1077, 64
        %v1460 = vpop.permute.xlu0 %1459
        %1461 = vrot.lane.b32.xlu0 %v1078, 64
        %v1462 = vpop.permute.xlu0 %1461
        %1463 = vrot.lane.b32.xlu0 %v1079, 64
        %v1464 = vpop.permute.xlu0 %1463
        %1465 = vrot.lane.b32.xlu0 %v1080, 64
        %v1466 = vpop.permute.xlu0 %1465
        %1467 = vrot.lane.b32.xlu0 %v1081, 64
        %v1468 = vpop.permute.xlu0 %1467
        %1469 = vrot.lane.b32.xlu0 %v1082, 64
        %v1470 = vpop.permute.xlu0 %1469
        %1471 = vrot.lane.b32.xlu0 %v1083, 64
        %v1472 = vpop.permute.xlu0 %1471
        %1473 = vrot.lane.b32.xlu0 %v1084, 64
        %v1474 = vpop.permute.xlu0 %1473
        %1475 = vrot.lane.b32.xlu0 %v1085, 64
        %v1476 = vpop.permute.xlu0 %1475
        %1477 = vrot.lane.b32.xlu0 %v1086, 64
        %v1478 = vpop.permute.xlu0 %1477
        %1479 = vrot.lane.b32.xlu0 %v1087, 64
        %v1480 = vpop.permute.xlu0 %1479
        %1481 = vrot.lane.b32.xlu0 %v1088, 64
        %v1482 = vpop.permute.xlu0 %1481
        %1483 = vrot.lane.b32.xlu0 %v1089, 64
        %v1484 = vpop.permute.xlu0 %1483
        %1485 = vrot.lane.b32.xlu0 %v1090, 64
        %v1486 = vpop.permute.xlu0 %1485
        %s1503 = scalar_lea.vmem %s309, 128 [#allocation7]
        %1504 = vst.msk [vmem:[%s1503] sm:$0xf] %vm1034, %v1456
        %1505 = vst.msk [vmem:[%s1503 + $0x4] sm:$0xf] %vm1034, %v1458
        %1506 = vst.msk [vmem:[%s1503 + $0x8] sm:$0xf] %vm1034, %v1460
        %1507 = vst.msk [vmem:[%s1503 + $0xc] sm:$0xf] %vm1034, %v1462
        %1508 = vst.msk [vmem:[%s1503 + $0x10] sm:$0xf] %vm1034, %v1464
        %1509 = vst.msk [vmem:[%s1503 + $0x14] sm:$0xf] %vm1034, %v1466
        %1510 = vst.msk [vmem:[%s1503 + $0x18] sm:$0xf] %vm1034, %v1468
        %1511 = vst.msk [vmem:[%s1503 + $0x1c] sm:$0xf] %vm1034, %v1470
        %1512 = vst.msk [vmem:[%s1503 + $0x20] sm:$0xf] %vm1034, %v1472
        %1513 = vst.msk [vmem:[%s1503 + $0x24] sm:$0xf] %vm1034, %v1474
        %1514 = vst.msk [vmem:[%s1503 + $0x28] sm:$0xf] %vm1034, %v1476
        %1515 = vst.msk [vmem:[%s1503 + $0x2c] sm:$0xf] %vm1034, %v1478
        %1516 = vst.msk [vmem:[%s1503 + $0x30] sm:$0xf] %vm1034, %v1480
        %1517 = vst.msk [vmem:[%s1503 + $0x34] sm:$0xf] %vm1034, %v1482
        %1518 = vst.msk [vmem:[%s1503 + $0x38] sm:$0xf] %vm1034, %v1484
        %1519 = vst.msk [vmem:[%s1503 + $0x3c] sm:$0xf] %vm1034, %v1486
        %1520 = vrot.lane.b32.xlu0 %v1147, 64
        %v1521 = vpop.permute.xlu0 %1520
        %1522 = vrot.lane.b32.xlu0 %v1148, 64
        %v1523 = vpop.permute.xlu0 %1522
        %1524 = vrot.lane.b32.xlu0 %v1149, 64
        %v1525 = vpop.permute.xlu0 %1524
        %1526 = vrot.lane.b32.xlu0 %v1150, 64
        %v1527 = vpop.permute.xlu0 %1526
        %1528 = vrot.lane.b32.xlu0 %v1151, 64
        %v1529 = vpop.permute.xlu0 %1528
        %1530 = vrot.lane.b32.xlu0 %v1152, 64
        %v1531 = vpop.permute.xlu0 %1530
        %1532 = vrot.lane.b32.xlu0 %v1153, 64
        %v1533 = vpop.permute.xlu0 %1532
        %1534 = vrot.lane.b32.xlu0 %v1154, 64
        %v1535 = vpop.permute.xlu0 %1534
        %1536 = vrot.lane.b32.xlu0 %v1155, 64
        %v1537 = vpop.permute.xlu0 %1536
        %1538 = vrot.lane.b32.xlu0 %v1156, 64
        %v1539 = vpop.permute.xlu0 %1538
        %1540 = vrot.lane.b32.xlu0 %v1157, 64
        %v1541 = vpop.permute.xlu0 %1540
        %1542 = vrot.lane.b32.xlu0 %v1158, 64
        %v1543 = vpop.permute.xlu0 %1542
        %1544 = vrot.lane.b32.xlu0 %v1159, 64
        %v1545 = vpop.permute.xlu0 %1544
        %1546 = vrot.lane.b32.xlu0 %v1160, 64
        %v1547 = vpop.permute.xlu0 %1546
        %1548 = vrot.lane.b32.xlu0 %v1161, 64
        %v1549 = vpop.permute.xlu0 %1548
        %1550 = vrot.lane.b32.xlu0 %v1162, 64
        %v1551 = vpop.permute.xlu0 %1550
        %s1568 = scalar_lea.vmem %s315, 128 [#allocation8]
        %1569 = vst.msk [vmem:[%s1568] sm:$0xf] %vm1034, %v1521
        %1570 = vst.msk [vmem:[%s1568 + $0x4] sm:$0xf] %vm1034, %v1523
        %1571 = vst.msk [vmem:[%s1568 + $0x8] sm:$0xf] %vm1034, %v1525
        %1572 = vst.msk [vmem:[%s1568 + $0xc] sm:$0xf] %vm1034, %v1527
        %1573 = vst.msk [vmem:[%s1568 + $0x10] sm:$0xf] %vm1034, %v1529
        %1574 = vst.msk [vmem:[%s1568 + $0x14] sm:$0xf] %vm1034, %v1531
        %1575 = vst.msk [vmem:[%s1568 + $0x18] sm:$0xf] %vm1034, %v1533
        %1576 = vst.msk [vmem:[%s1568 + $0x1c] sm:$0xf] %vm1034, %v1535
        %1577 = vst.msk [vmem:[%s1568 + $0x20] sm:$0xf] %vm1034, %v1537
        %1578 = vst.msk [vmem:[%s1568 + $0x24] sm:$0xf] %vm1034, %v1539
        %1579 = vst.msk [vmem:[%s1568 + $0x28] sm:$0xf] %vm1034, %v1541
        %1580 = vst.msk [vmem:[%s1568 + $0x2c] sm:$0xf] %vm1034, %v1543
        %1581 = vst.msk [vmem:[%s1568 + $0x30] sm:$0xf] %vm1034, %v1545
        %1582 = vst.msk [vmem:[%s1568 + $0x34] sm:$0xf] %vm1034, %v1547
        %1583 = vst.msk [vmem:[%s1568 + $0x38] sm:$0xf] %vm1034, %v1549
        %1584 = vst.msk [vmem:[%s1568 + $0x3c] sm:$0xf] %vm1034, %v1551
        %1585 = vrot.lane.b32.xlu0 %v1002, 32
        %v1586 = vpop.permute.xlu0 %1585
        %1587 = vrot.lane.b32.xlu0 %v1003, 32
        %v1588 = vpop.permute.xlu0 %1587
        %1589 = vrot.lane.b32.xlu0 %v1004, 32
        %v1590 = vpop.permute.xlu0 %1589
        %1591 = vrot.lane.b32.xlu0 %v1005, 32
        %v1592 = vpop.permute.xlu0 %1591
        %1593 = vrot.lane.b32.xlu0 %v1006, 32
        %v1594 = vpop.permute.xlu0 %1593
        %1595 = vrot.lane.b32.xlu0 %v1007, 32
        %v1596 = vpop.permute.xlu0 %1595
        %1597 = vrot.lane.b32.xlu0 %v1008, 32
        %v1598 = vpop.permute.xlu0 %1597
        %1599 = vrot.lane.b32.xlu0 %v1009, 32
        %v1600 = vpop.permute.xlu0 %1599
        %1601 = vrot.lane.b32.xlu0 %v1010, 32
        %v1602 = vpop.permute.xlu0 %1601
        %1603 = vrot.lane.b32.xlu0 %v1011, 32
        %v1604 = vpop.permute.xlu0 %1603
        %1605 = vrot.lane.b32.xlu0 %v1012, 32
        %v1606 = vpop.permute.xlu0 %1605
        %1607 = vrot.lane.b32.xlu0 %v1013, 32
        %v1608 = vpop.permute.xlu0 %1607
        %1609 = vrot.lane.b32.xlu0 %v1014, 32
        %v1610 = vpop.permute.xlu0 %1609
        %1611 = vrot.lane.b32.xlu0 %v1015, 32
        %v1612 = vpop.permute.xlu0 %1611
        %1613 = vrot.lane.b32.xlu0 %v1016, 32
        %v1614 = vpop.permute.xlu0 %1613
        %1615 = vrot.lane.b32.xlu0 %v1017, 32
        %v1616 = vpop.permute.xlu0 %1615
        %s1633 = scalar_lea.vmem %s303, 192 [#allocation6]
        %1634 = vst.msk [vmem:[%s1633] sm:$0xf] %vm1034, %v1586
        %1635 = vst.msk [vmem:[%s1633 + $0x4] sm:$0xf] %vm1034, %v1588
        %1636 = vst.msk [vmem:[%s1633 + $0x8] sm:$0xf] %vm1034, %v1590
        %1637 = vst.msk [vmem:[%s1633 + $0xc] sm:$0xf] %vm1034, %v1592
        %1638 = vst.msk [vmem:[%s1633 + $0x10] sm:$0xf] %vm1034, %v1594
        %1639 = vst.msk [vmem:[%s1633 + $0x14] sm:$0xf] %vm1034, %v1596
        %1640 = vst.msk [vmem:[%s1633 + $0x18] sm:$0xf] %vm1034, %v1598
        %1641 = vst.msk [vmem:[%s1633 + $0x1c] sm:$0xf] %vm1034, %v1600
        %1642 = vst.msk [vmem:[%s1633 + $0x20] sm:$0xf] %vm1034, %v1602
        %1643 = vst.msk [vmem:[%s1633 + $0x24] sm:$0xf] %vm1034, %v1604
        %1644 = vst.msk [vmem:[%s1633 + $0x28] sm:$0xf] %vm1034, %v1606
        %1645 = vst.msk [vmem:[%s1633 + $0x2c] sm:$0xf] %vm1034, %v1608
        %1646 = vst.msk [vmem:[%s1633 + $0x30] sm:$0xf] %vm1034, %v1610
        %1647 = vst.msk [vmem:[%s1633 + $0x34] sm:$0xf] %vm1034, %v1612
        %1648 = vst.msk [vmem:[%s1633 + $0x38] sm:$0xf] %vm1034, %v1614
        %1649 = vst.msk [vmem:[%s1633 + $0x3c] sm:$0xf] %vm1034, %v1616
        %1650 = vrot.lane.b32.xlu0 %v1075, 32
        %v1651 = vpop.permute.xlu0 %1650
        %1652 = vrot.lane.b32.xlu0 %v1076, 32
        %v1653 = vpop.permute.xlu0 %1652
        %1654 = vrot.lane.b32.xlu0 %v1077, 32
        %v1655 = vpop.permute.xlu0 %1654
        %1656 = vrot.lane.b32.xlu0 %v1078, 32
        %v1657 = vpop.permute.xlu0 %1656
        %1658 = vrot.lane.b32.xlu0 %v1079, 32
        %v1659 = vpop.permute.xlu0 %1658
        %1660 = vrot.lane.b32.xlu0 %v1080, 32
        %v1661 = vpop.permute.xlu0 %1660
        %1662 = vrot.lane.b32.xlu0 %v1081, 32
        %v1663 = vpop.permute.xlu0 %1662
        %1664 = vrot.lane.b32.xlu0 %v1082, 32
        %v1665 = vpop.permute.xlu0 %1664
        %1666 = vrot.lane.b32.xlu0 %v1083, 32
        %v1667 = vpop.permute.xlu0 %1666
        %1668 = vrot.lane.b32.xlu0 %v1084, 32
        %v1669 = vpop.permute.xlu0 %1668
        %1670 = vrot.lane.b32.xlu0 %v1085, 32
        %v1671 = vpop.permute.xlu0 %1670
        %1672 = vrot.lane.b32.xlu0 %v1086, 32
        %v1673 = vpop.permute.xlu0 %1672
        %1674 = vrot.lane.b32.xlu0 %v1087, 32
        %v1675 = vpop.permute.xlu0 %1674
        %1676 = vrot.lane.b32.xlu0 %v1088, 32
        %v1677 = vpop.permute.xlu0 %1676
        %1678 = vrot.lane.b32.xlu0 %v1089, 32
        %v1679 = vpop.permute.xlu0 %1678
        %1680 = vrot.lane.b32.xlu0 %v1090, 32
        %v1681 = vpop.permute.xlu0 %1680
        %s1698 = scalar_lea.vmem %s309, 192 [#allocation7]
        %1699 = vst.msk [vmem:[%s1698] sm:$0xf] %vm1034, %v1651
        %1700 = vst.msk [vmem:[%s1698 + $0x4] sm:$0xf] %vm1034, %v1653
        %1701 = vst.msk [vmem:[%s1698 + $0x8] sm:$0xf] %vm1034, %v1655
        %1702 = vst.msk [vmem:[%s1698 + $0xc] sm:$0xf] %vm1034, %v1657
        %1703 = vst.msk [vmem:[%s1698 + $0x10] sm:$0xf] %vm1034, %v1659
        %1704 = vst.msk [vmem:[%s1698 + $0x14] sm:$0xf] %vm1034, %v1661
        %1705 = vst.msk [vmem:[%s1698 + $0x18] sm:$0xf] %vm1034, %v1663
        %1706 = vst.msk [vmem:[%s1698 + $0x1c] sm:$0xf] %vm1034, %v1665
        %1707 = vst.msk [vmem:[%s1698 + $0x20] sm:$0xf] %vm1034, %v1667
        %1708 = vst.msk [vmem:[%s1698 + $0x24] sm:$0xf] %vm1034, %v1669
        %1709 = vst.msk [vmem:[%s1698 + $0x28] sm:$0xf] %vm1034, %v1671
        %1710 = vst.msk [vmem:[%s1698 + $0x2c] sm:$0xf] %vm1034, %v1673
        %1711 = vst.msk [vmem:[%s1698 + $0x30] sm:$0xf] %vm1034, %v1675
        %1712 = vst.msk [vmem:[%s1698 + $0x34] sm:$0xf] %vm1034, %v1677
        %1713 = vst.msk [vmem:[%s1698 + $0x38] sm:$0xf] %vm1034, %v1679
        %1714 = vst.msk [vmem:[%s1698 + $0x3c] sm:$0xf] %vm1034, %v1681
        %1715 = vrot.lane.b32.xlu0 %v1147, 32
        %v1716 = vpop.permute.xlu0 %1715
        %1717 = vrot.lane.b32.xlu0 %v1148, 32
        %v1718 = vpop.permute.xlu0 %1717
        %1719 = vrot.lane.b32.xlu0 %v1149, 32
        %v1720 = vpop.permute.xlu0 %1719
        %1721 = vrot.lane.b32.xlu0 %v1150, 32
        %v1722 = vpop.permute.xlu0 %1721
        %1723 = vrot.lane.b32.xlu0 %v1151, 32
        %v1724 = vpop.permute.xlu0 %1723
        %1725 = vrot.lane.b32.xlu0 %v1152, 32
        %v1726 = vpop.permute.xlu0 %1725
        %1727 = vrot.lane.b32.xlu0 %v1153, 32
        %v1728 = vpop.permute.xlu0 %1727
        %1729 = vrot.lane.b32.xlu0 %v1154, 32
        %v1730 = vpop.permute.xlu0 %1729
        %1731 = vrot.lane.b32.xlu0 %v1155, 32
        %v1732 = vpop.permute.xlu0 %1731
        %1733 = vrot.lane.b32.xlu0 %v1156, 32
        %v1734 = vpop.permute.xlu0 %1733
        %1735 = vrot.lane.b32.xlu0 %v1157, 32
        %v1736 = vpop.permute.xlu0 %1735
        %1737 = vrot.lane.b32.xlu0 %v1158, 32
        %v1738 = vpop.permute.xlu0 %1737
        %1739 = vrot.lane.b32.xlu0 %v1159, 32
        %v1740 = vpop.permute.xlu0 %1739
        %1741 = vrot.lane.b32.xlu0 %v1160, 32
        %v1742 = vpop.permute.xlu0 %1741
        %1743 = vrot.lane.b32.xlu0 %v1161, 32
        %v1744 = vpop.permute.xlu0 %1743
        %1745 = vrot.lane.b32.xlu0 %v1162, 32
        %v1746 = vpop.permute.xlu0 %1745
        %s1763 = scalar_lea.vmem %s315, 192 [#allocation8]
        %1764 = vst.msk [vmem:[%s1763] sm:$0xf] %vm1034, %v1716
        %1765 = vst.msk [vmem:[%s1763 + $0x4] sm:$0xf] %vm1034, %v1718
        %1766 = vst.msk [vmem:[%s1763 + $0x8] sm:$0xf] %vm1034, %v1720
        %1767 = vst.msk [vmem:[%s1763 + $0xc] sm:$0xf] %vm1034, %v1722
        %1768 = vst.msk [vmem:[%s1763 + $0x10] sm:$0xf] %vm1034, %v1724
        %1769 = vst.msk [vmem:[%s1763 + $0x14] sm:$0xf] %vm1034, %v1726
        %1770 = vst.msk [vmem:[%s1763 + $0x18] sm:$0xf] %vm1034, %v1728
        %1771 = vst.msk [vmem:[%s1763 + $0x1c] sm:$0xf] %vm1034, %v1730
        %1772 = vst.msk [vmem:[%s1763 + $0x20] sm:$0xf] %vm1034, %v1732
        %1773 = vst.msk [vmem:[%s1763 + $0x24] sm:$0xf] %vm1034, %v1734
        %1774 = vst.msk [vmem:[%s1763 + $0x28] sm:$0xf] %vm1034, %v1736
        %1775 = vst.msk [vmem:[%s1763 + $0x2c] sm:$0xf] %vm1034, %v1738
        %1776 = vst.msk [vmem:[%s1763 + $0x30] sm:$0xf] %vm1034, %v1740
        %1777 = vst.msk [vmem:[%s1763 + $0x34] sm:$0xf] %vm1034, %v1742
        %1778 = vst.msk [vmem:[%s1763 + $0x38] sm:$0xf] %vm1034, %v1744
        %1779 = vst.msk [vmem:[%s1763 + $0x3c] sm:$0xf] %vm1034, %v1746
        %s1780 = sand.u32 %s135, 1
        %s1781 = sand.u32 %s135, 1
        %s1782 = smul.addr %s1781, 256
        %s1783 = scalar_lea.vmem [#allocation6], %s1782
        %s1784 = sand.u32 %s163, 1
        %s1785 = sand.u32 %s163, 1
        %s1786 = smul.addr %s1785, 256
        %s1787 = scalar_lea.vmem [#allocation7], %s1786
        %s1788 = sand.u32 %s191, 1
        %s1789 = sand.u32 %s191, 1
        %s1790 = smul.addr %s1789, 256
        %s1791 = scalar_lea.vmem [#allocation8], %s1790
        // Predicated region
        $region45: #{tpu_custom_call.1} parent=35 // pred_check
          %p1792 = pneg %p145
        $region46: #{tpu_custom_call.1} parent=35 // pred_check_branch
          %1794 = sbr.rel (%p1792) target = $region48
        $region47: #{tpu_custom_call.1} parent=35 // pred_region
          %s1795 = smul.u32 16, %s27
          %s1796 = smul.addr %s26, 128
          %s1797 = sadd.s32 %s1795, %s1796
          %s1798 = smul.addr %s1797, 4
          %s1799 = scalar_lea.vmem %s4, %s1798
          // Predicated region
          $region49: #{tpu_custom_call.1} parent=47 // pred_check
            _
          $region50: #{tpu_custom_call.1} parent=47 // pred_check_branch
            %1801 = sbr.rel (0) target = $region52
          $region51: #{tpu_custom_call.1} parent=47 // pred_region
            // Predicated region
            $region53: #{tpu_custom_call.1} parent=51 // pred_check
              _
            $region54: #{tpu_custom_call.1} parent=51 // pred_check_branch
              %1803 = sbr.rel target = $region56
            $region55: #{tpu_custom_call.1} parent=51 // pred_region
              // Predicated region
              $region68: #{tpu_custom_call.1} parent=55 // pred_check
                _
              $region69: #{tpu_custom_call.1} parent=55 // pred_check_branch
                %1944 = sbr.rel (0) target = $region71
              $region70: #{tpu_custom_call.1} parent=55 // pred_region
                loop: start=0, step=1, limit=1
                $region72: #{tpu_custom_call.1} parent=70 // loop_pre_header
                  _
                $region73: #{tpu_custom_call.1} parent=70 // loop_header
                  %s1946 = sphi 0, %s1950
                  %p1947 = scmp.ge.s32.totalorder %s1946, 1
                  %s1951 = sphi %s1783, %s1783
                  %s1952 = sphi %s1799, %s1799
                $region74: #{tpu_custom_call.1} parent=70 // loop_header_branch
                  %1949 = sbr.rel (%p1947) target = $region78
                $region75: #{tpu_custom_call.1} parent=70 // loop_body
                  _
                $region76: #{tpu_custom_call.1} parent=70 // loop_footer
                  %s1950 = sadd.s32 1, %s1946
                $region77: #{tpu_custom_call.1} parent=70 // loop_footer_branch
                  %1945 = sbr.rel target = $region73
                $region78: #{tpu_custom_call.1} parent=70 // loop_exit
                  _
                loop: start=0, step=1, limit=1
                $region79: #{tpu_custom_call.1} parent=70 // loop_pre_header
                  _
                $region80: #{tpu_custom_call.1} parent=70 // loop_header
                  %s1955 = sphi 0, %s1959
                  %p1956 = scmp.ge.s32.totalorder %s1955, 1
                  %s1960 = sphi %s1783, %s1783
                  %s1961 = sphi %s1799, %s1799
                $region81: #{tpu_custom_call.1} parent=70 // loop_header_branch
                  %1958 = sbr.rel (%p1956) target = $region85
                $region82: #{tpu_custom_call.1} parent=70 // loop_body
                  %v1962 = vld [vmem:[%s1960] sm:$0xf]
                  %1963 = vst [vmem:[%s1961] sm:$0xf] %v1962
                  %v1964 = vld [vmem:[%s1960 + $0x4] sm:$0xf]
                  %1965 = vst [vmem:[%s1961 + $0x4] sm:$0xf] %v1964
                  %v1966 = vld [vmem:[%s1960 + $0x8] sm:$0xf]
                  %1967 = vst [vmem:[%s1961 + $0x8] sm:$0xf] %v1966
                  %v1968 = vld [vmem:[%s1960 + $0xc] sm:$0xf]
                  %1969 = vst [vmem:[%s1961 + $0xc] sm:$0xf] %v1968
                  %v1970 = vld [vmem:[%s1960 + $0x10] sm:$0xf]
                  %1971 = vst [vmem:[%s1961 + $0x10] sm:$0xf] %v1970
                  %v1972 = vld [vmem:[%s1960 + $0x14] sm:$0xf]
                  %1973 = vst [vmem:[%s1961 + $0x14] sm:$0xf] %v1972
                  %v1974 = vld [vmem:[%s1960 + $0x18] sm:$0xf]
                  %1975 = vst [vmem:[%s1961 + $0x18] sm:$0xf] %v1974
                  %v1976 = vld [vmem:[%s1960 + $0x1c] sm:$0xf]
                  %1977 = vst [vmem:[%s1961 + $0x1c] sm:$0xf] %v1976
                  %v1978 = vld [vmem:[%s1960 + $0x20] sm:$0xf]
                  %1979 = vst [vmem:[%s1961 + $0x20] sm:$0xf] %v1978
                  %v1980 = vld [vmem:[%s1960 + $0x24] sm:$0xf]
                  %1981 = vst [vmem:[%s1961 + $0x24] sm:$0xf] %v1980
                  %v1982 = vld [vmem:[%s1960 + $0x28] sm:$0xf]
                  %1983 = vst [vmem:[%s1961 + $0x28] sm:$0xf] %v1982
                  %v1984 = vld [vmem:[%s1960 + $0x2c] sm:$0xf]
                  %1985 = vst [vmem:[%s1961 + $0x2c] sm:$0xf] %v1984
                  %v1986 = vld [vmem:[%s1960 + $0x30] sm:$0xf]
                  %1987 = vst [vmem:[%s1961 + $0x30] sm:$0xf] %v1986
                  %v1988 = vld [vmem:[%s1960 + $0x34] sm:$0xf]
                  %1989 = vst [vmem:[%s1961 + $0x34] sm:$0xf] %v1988
                  %v1990 = vld [vmem:[%s1960 + $0x38] sm:$0xf]
                  %1991 = vst [vmem:[%s1961 + $0x38] sm:$0xf] %v1990
                  %v1992 = vld [vmem:[%s1960 + $0x3c] sm:$0xf]
                  %1993 = vst [vmem:[%s1961 + $0x3c] sm:$0xf] %v1992
                  %v1994 = vld [vmem:[%s1960 + $0x40] sm:$0xf]
                  %1995 = vst [vmem:[%s1961 + $0x80] sm:$0xf] %v1994
                  %v1996 = vld [vmem:[%s1960 + $0x44] sm:$0xf]
                  %1997 = vst [vmem:[%s1961 + $0x84] sm:$0xf] %v1996
                  %v1998 = vld [vmem:[%s1960 + $0x48] sm:$0xf]
                  %1999 = vst [vmem:[%s1961 + $0x88] sm:$0xf] %v1998
                  %v2000 = vld [vmem:[%s1960 + $0x4c] sm:$0xf]
                  %2001 = vst [vmem:[%s1961 + $0x8c] sm:$0xf] %v2000
                  %v2002 = vld [vmem:[%s1960 + $0x50] sm:$0xf]
                  %2003 = vst [vmem:[%s1961 + $0x90] sm:$0xf] %v2002
                  %v2004 = vld [vmem:[%s1960 + $0x54] sm:$0xf]
                  %2005 = vst [vmem:[%s1961 + $0x94] sm:$0xf] %v2004
                  %v2006 = vld [vmem:[%s1960 + $0x58] sm:$0xf]
                  %2007 = vst [vmem:[%s1961 + $0x98] sm:$0xf] %v2006
                  %v2008 = vld [vmem:[%s1960 + $0x5c] sm:$0xf]
                  %2009 = vst [vmem:[%s1961 + $0x9c] sm:$0xf] %v2008
                  %v2010 = vld [vmem:[%s1960 + $0x60] sm:$0xf]
                  %2011 = vst [vmem:[%s1961 + $0xa0] sm:$0xf] %v2010
                  %v2012 = vld [vmem:[%s1960 + $0x64] sm:$0xf]
                  %2013 = vst [vmem:[%s1961 + $0xa4] sm:$0xf] %v2012
                  %v2014 = vld [vmem:[%s1960 + $0x68] sm:$0xf]
                  %2015 = vst [vmem:[%s1961 + $0xa8] sm:$0xf] %v2014
                  %v2016 = vld [vmem:[%s1960 + $0x6c] sm:$0xf]
                  %2017 = vst [vmem:[%s1961 + $0xac] sm:$0xf] %v2016
                  %v2018 = vld [vmem:[%s1960 + $0x70] sm:$0xf]
                  %2019 = vst [vmem:[%s1961 + $0xb0] sm:$0xf] %v2018
                  %v2020 = vld [vmem:[%s1960 + $0x74] sm:$0xf]
                  %2021 = vst [vmem:[%s1961 + $0xb4] sm:$0xf] %v2020
                  %v2022 = vld [vmem:[%s1960 + $0x78] sm:$0xf]
                  %2023 = vst [vmem:[%s1961 + $0xb8] sm:$0xf] %v2022
                  %v2024 = vld [vmem:[%s1960 + $0x7c] sm:$0xf]
                  %2025 = vst [vmem:[%s1961 + $0xbc] sm:$0xf] %v2024
                  %v2026 = vld [vmem:[%s1960 + $0x80] sm:$0xf]
                  %2027 = vst [vmem:[%s1961 + $0x100] sm:$0xf] %v2026
                  %v2028 = vld [vmem:[%s1960 + $0x84] sm:$0xf]
                  %2029 = vst [vmem:[%s1961 + $0x104] sm:$0xf] %v2028
                  %v2030 = vld [vmem:[%s1960 + $0x88] sm:$0xf]
                  %2031 = vst [vmem:[%s1961 + $0x108] sm:$0xf] %v2030
                  %v2032 = vld [vmem:[%s1960 + $0x8c] sm:$0xf]
                  %2033 = vst [vmem:[%s1961 + $0x10c] sm:$0xf] %v2032
                  %v2034 = vld [vmem:[%s1960 + $0x90] sm:$0xf]
                  %2035 = vst [vmem:[%s1961 + $0x110] sm:$0xf] %v2034
                  %v2036 = vld [vmem:[%s1960 + $0x94] sm:$0xf]
                  %2037 = vst [vmem:[%s1961 + $0x114] sm:$0xf] %v2036
                  %v2038 = vld [vmem:[%s1960 + $0x98] sm:$0xf]
                  %2039 = vst [vmem:[%s1961 + $0x118] sm:$0xf] %v2038
                  %v2040 = vld [vmem:[%s1960 + $0x9c] sm:$0xf]
                  %2041 = vst [vmem:[%s1961 + $0x11c] sm:$0xf] %v2040
                  %v2042 = vld [vmem:[%s1960 + $0xa0] sm:$0xf]
                  %2043 = vst [vmem:[%s1961 + $0x120] sm:$0xf] %v2042
                  %v2044 = vld [vmem:[%s1960 + $0xa4] sm:$0xf]
                  %2045 = vst [vmem:[%s1961 + $0x124] sm:$0xf] %v2044
                  %v2046 = vld [vmem:[%s1960 + $0xa8] sm:$0xf]
                  %2047 = vst [vmem:[%s1961 + $0x128] sm:$0xf] %v2046
                  %v2048 = vld [vmem:[%s1960 + $0xac] sm:$0xf]
                  %2049 = vst [vmem:[%s1961 + $0x12c] sm:$0xf] %v2048
                  %v2050 = vld [vmem:[%s1960 + $0xb0] sm:$0xf]
                  %2051 = vst [vmem:[%s1961 + $0x130] sm:$0xf] %v2050
                  %v2052 = vld [vmem:[%s1960 + $0xb4] sm:$0xf]
                  %2053 = vst [vmem:[%s1961 + $0x134] sm:$0xf] %v2052
                  %v2054 = vld [vmem:[%s1960 + $0xb8] sm:$0xf]
                  %2055 = vst [vmem:[%s1961 + $0x138] sm:$0xf] %v2054
                  %v2056 = vld [vmem:[%s1960 + $0xbc] sm:$0xf]
                  %2057 = vst [vmem:[%s1961 + $0x13c] sm:$0xf] %v2056
                  %v2058 = vld [vmem:[%s1960 + $0xc0] sm:$0xf]
                  %2059 = vst [vmem:[%s1961 + $0x180] sm:$0xf] %v2058
                  %v2060 = vld [vmem:[%s1960 + $0xc4] sm:$0xf]
                  %2061 = vst [vmem:[%s1961 + $0x184] sm:$0xf] %v2060
                  %v2062 = vld [vmem:[%s1960 + $0xc8] sm:$0xf]
                  %2063 = vst [vmem:[%s1961 + $0x188] sm:$0xf] %v2062
                  %v2064 = vld [vmem:[%s1960 + $0xcc] sm:$0xf]
                  %2065 = vst [vmem:[%s1961 + $0x18c] sm:$0xf] %v2064
                  %v2066 = vld [vmem:[%s1960 + $0xd0] sm:$0xf]
                  %2067 = vst [vmem:[%s1961 + $0x190] sm:$0xf] %v2066
                  %v2068 = vld [vmem:[%s1960 + $0xd4] sm:$0xf]
                  %2069 = vst [vmem:[%s1961 + $0x194] sm:$0xf] %v2068
                  %v2070 = vld [vmem:[%s1960 + $0xd8] sm:$0xf]
                  %2071 = vst [vmem:[%s1961 + $0x198] sm:$0xf] %v2070
                  %v2072 = vld [vmem:[%s1960 + $0xdc] sm:$0xf]
                  %2073 = vst [vmem:[%s1961 + $0x19c] sm:$0xf] %v2072
                  %v2074 = vld [vmem:[%s1960 + $0xe0] sm:$0xf]
                  %2075 = vst [vmem:[%s1961 + $0x1a0] sm:$0xf] %v2074
                  %v2076 = vld [vmem:[%s1960 + $0xe4] sm:$0xf]
                  %2077 = vst [vmem:[%s1961 + $0x1a4] sm:$0xf] %v2076
                  %v2078 = vld [vmem:[%s1960 + $0xe8] sm:$0xf]
                  %2079 = vst [vmem:[%s1961 + $0x1a8] sm:$0xf] %v2078
                  %v2080 = vld [vmem:[%s1960 + $0xec] sm:$0xf]
                  %2081 = vst [vmem:[%s1961 + $0x1ac] sm:$0xf] %v2080
                  %v2082 = vld [vmem:[%s1960 + $0xf0] sm:$0xf]
                  %2083 = vst [vmem:[%s1961 + $0x1b0] sm:$0xf] %v2082
                  %v2084 = vld [vmem:[%s1960 + $0xf4] sm:$0xf]
                  %2085 = vst [vmem:[%s1961 + $0x1b4] sm:$0xf] %v2084
                  %v2086 = vld [vmem:[%s1960 + $0xf8] sm:$0xf]
                  %2087 = vst [vmem:[%s1961 + $0x1b8] sm:$0xf] %v2086
                  %v2088 = vld [vmem:[%s1960 + $0xfc] sm:$0xf]
                  %2089 = vst [vmem:[%s1961 + $0x1bc] sm:$0xf] %v2088
                $region83: #{tpu_custom_call.1} parent=70 // loop_footer
                  %s1959 = sadd.s32 1, %s1955
                $region84: #{tpu_custom_call.1} parent=70 // loop_footer_branch
                  %1954 = sbr.rel target = $region80
                $region85: #{tpu_custom_call.1} parent=70 // loop_exit
                  _
              $region71: #{tpu_custom_call.1} parent=55 // pred_fallthru
                _
            $region56: #{tpu_custom_call.1} parent=51 // pred_fallthru
              _
            // Predicated region
            $region57: #{tpu_custom_call.1} parent=51 // pred_check
              _
            $region58: #{tpu_custom_call.1} parent=51 // pred_check_branch
              %1805 = sbr.rel (0) target = $region60
            $region59: #{tpu_custom_call.1} parent=51 // pred_region
              loop: start=0, step=1, limit=1
              $region61: #{tpu_custom_call.1} parent=59 // loop_pre_header
                _
              $region62: #{tpu_custom_call.1} parent=59 // loop_header
                %s1808 = sphi 0, %s1812
                %p1809 = scmp.ge.s32.totalorder %s1808, 1
                %s1813 = sphi %s1783, %s1783
                %s1814 = sphi %s1799, %s1799
              $region63: #{tpu_custom_call.1} parent=59 // loop_header_branch
                %1811 = sbr.rel (%p1809) target = $region67
              $region64: #{tpu_custom_call.1} parent=59 // loop_body
                %v1815 = vld [vmem:[%s1813] sm:$0xf]
                %1816 = vst [vmem:[%s1814] sm:$0xf] %v1815
                %v1817 = vld [vmem:[%s1813 + $0x4] sm:$0xf]
                %1818 = vst [vmem:[%s1814 + $0x4] sm:$0xf] %v1817
                %v1819 = vld [vmem:[%s1813 + $0x8] sm:$0xf]
                %1820 = vst [vmem:[%s1814 + $0x8] sm:$0xf] %v1819
                %v1821 = vld [vmem:[%s1813 + $0xc] sm:$0xf]
                %1822 = vst [vmem:[%s1814 + $0xc] sm:$0xf] %v1821
                %v1823 = vld [vmem:[%s1813 + $0x10] sm:$0xf]
                %1824 = vst [vmem:[%s1814 + $0x10] sm:$0xf] %v1823
                %v1825 = vld [vmem:[%s1813 + $0x14] sm:$0xf]
                %1826 = vst [vmem:[%s1814 + $0x14] sm:$0xf] %v1825
                %v1827 = vld [vmem:[%s1813 + $0x18] sm:$0xf]
                %1828 = vst [vmem:[%s1814 + $0x18] sm:$0xf] %v1827
                %v1829 = vld [vmem:[%s1813 + $0x1c] sm:$0xf]
                %1830 = vst [vmem:[%s1814 + $0x1c] sm:$0xf] %v1829
                %v1831 = vld [vmem:[%s1813 + $0x20] sm:$0xf]
                %1832 = vst [vmem:[%s1814 + $0x20] sm:$0xf] %v1831
                %v1833 = vld [vmem:[%s1813 + $0x24] sm:$0xf]
                %1834 = vst [vmem:[%s1814 + $0x24] sm:$0xf] %v1833
                %v1835 = vld [vmem:[%s1813 + $0x28] sm:$0xf]
                %1836 = vst [vmem:[%s1814 + $0x28] sm:$0xf] %v1835
                %v1837 = vld [vmem:[%s1813 + $0x2c] sm:$0xf]
                %1838 = vst [vmem:[%s1814 + $0x2c] sm:$0xf] %v1837
                %v1839 = vld [vmem:[%s1813 + $0x30] sm:$0xf]
                %1840 = vst [vmem:[%s1814 + $0x30] sm:$0xf] %v1839
                %v1841 = vld [vmem:[%s1813 + $0x34] sm:$0xf]
                %1842 = vst [vmem:[%s1814 + $0x34] sm:$0xf] %v1841
                %v1843 = vld [vmem:[%s1813 + $0x38] sm:$0xf]
                %1844 = vst [vmem:[%s1814 + $0x38] sm:$0xf] %v1843
                %v1845 = vld [vmem:[%s1813 + $0x3c] sm:$0xf]
                %1846 = vst [vmem:[%s1814 + $0x3c] sm:$0xf] %v1845
                %v1847 = vld [vmem:[%s1813 + $0x40] sm:$0xf]
                %1848 = vst [vmem:[%s1814 + $0x80] sm:$0xf] %v1847
                %v1849 = vld [vmem:[%s1813 + $0x44] sm:$0xf]
                %1850 = vst [vmem:[%s1814 + $0x84] sm:$0xf] %v1849
                %v1851 = vld [vmem:[%s1813 + $0x48] sm:$0xf]
                %1852 = vst [vmem:[%s1814 + $0x88] sm:$0xf] %v1851
                %v1853 = vld [vmem:[%s1813 + $0x4c] sm:$0xf]
                %1854 = vst [vmem:[%s1814 + $0x8c] sm:$0xf] %v1853
                %v1855 = vld [vmem:[%s1813 + $0x50] sm:$0xf]
                %1856 = vst [vmem:[%s1814 + $0x90] sm:$0xf] %v1855
                %v1857 = vld [vmem:[%s1813 + $0x54] sm:$0xf]
                %1858 = vst [vmem:[%s1814 + $0x94] sm:$0xf] %v1857
                %v1859 = vld [vmem:[%s1813 + $0x58] sm:$0xf]
                %1860 = vst [vmem:[%s1814 + $0x98] sm:$0xf] %v1859
                %v1861 = vld [vmem:[%s1813 + $0x5c] sm:$0xf]
                %1862 = vst [vmem:[%s1814 + $0x9c] sm:$0xf] %v1861
                %v1863 = vld [vmem:[%s1813 + $0x60] sm:$0xf]
                %1864 = vst [vmem:[%s1814 + $0xa0] sm:$0xf] %v1863
                %v1865 = vld [vmem:[%s1813 + $0x64] sm:$0xf]
                %1866 = vst [vmem:[%s1814 + $0xa4] sm:$0xf] %v1865
                %v1867 = vld [vmem:[%s1813 + $0x68] sm:$0xf]
                %1868 = vst [vmem:[%s1814 + $0xa8] sm:$0xf] %v1867
                %v1869 = vld [vmem:[%s1813 + $0x6c] sm:$0xf]
                %1870 = vst [vmem:[%s1814 + $0xac] sm:$0xf] %v1869
                %v1871 = vld [vmem:[%s1813 + $0x70] sm:$0xf]
                %1872 = vst [vmem:[%s1814 + $0xb0] sm:$0xf] %v1871
                %v1873 = vld [vmem:[%s1813 + $0x74] sm:$0xf]
                %1874 = vst [vmem:[%s1814 + $0xb4] sm:$0xf] %v1873
                %v1875 = vld [vmem:[%s1813 + $0x78] sm:$0xf]
                %1876 = vst [vmem:[%s1814 + $0xb8] sm:$0xf] %v1875
                %v1877 = vld [vmem:[%s1813 + $0x7c] sm:$0xf]
                %1878 = vst [vmem:[%s1814 + $0xbc] sm:$0xf] %v1877
                %v1879 = vld [vmem:[%s1813 + $0x80] sm:$0xf]
                %1880 = vst [vmem:[%s1814 + $0x100] sm:$0xf] %v1879
                %v1881 = vld [vmem:[%s1813 + $0x84] sm:$0xf]
                %1882 = vst [vmem:[%s1814 + $0x104] sm:$0xf] %v1881
                %v1883 = vld [vmem:[%s1813 + $0x88] sm:$0xf]
                %1884 = vst [vmem:[%s1814 + $0x108] sm:$0xf] %v1883
                %v1885 = vld [vmem:[%s1813 + $0x8c] sm:$0xf]
                %1886 = vst [vmem:[%s1814 + $0x10c] sm:$0xf] %v1885
                %v1887 = vld [vmem:[%s1813 + $0x90] sm:$0xf]
                %1888 = vst [vmem:[%s1814 + $0x110] sm:$0xf] %v1887
                %v1889 = vld [vmem:[%s1813 + $0x94] sm:$0xf]
                %1890 = vst [vmem:[%s1814 + $0x114] sm:$0xf] %v1889
                %v1891 = vld [vmem:[%s1813 + $0x98] sm:$0xf]
                %1892 = vst [vmem:[%s1814 + $0x118] sm:$0xf] %v1891
                %v1893 = vld [vmem:[%s1813 + $0x9c] sm:$0xf]
                %1894 = vst [vmem:[%s1814 + $0x11c] sm:$0xf] %v1893
                %v1895 = vld [vmem:[%s1813 + $0xa0] sm:$0xf]
                %1896 = vst [vmem:[%s1814 + $0x120] sm:$0xf] %v1895
                %v1897 = vld [vmem:[%s1813 + $0xa4] sm:$0xf]
                %1898 = vst [vmem:[%s1814 + $0x124] sm:$0xf] %v1897
                %v1899 = vld [vmem:[%s1813 + $0xa8] sm:$0xf]
                %1900 = vst [vmem:[%s1814 + $0x128] sm:$0xf] %v1899
                %v1901 = vld [vmem:[%s1813 + $0xac] sm:$0xf]
                %1902 = vst [vmem:[%s1814 + $0x12c] sm:$0xf] %v1901
                %v1903 = vld [vmem:[%s1813 + $0xb0] sm:$0xf]
                %1904 = vst [vmem:[%s1814 + $0x130] sm:$0xf] %v1903
                %v1905 = vld [vmem:[%s1813 + $0xb4] sm:$0xf]
                %1906 = vst [vmem:[%s1814 + $0x134] sm:$0xf] %v1905
                %v1907 = vld [vmem:[%s1813 + $0xb8] sm:$0xf]
                %1908 = vst [vmem:[%s1814 + $0x138] sm:$0xf] %v1907
                %v1909 = vld [vmem:[%s1813 + $0xbc] sm:$0xf]
                %1910 = vst [vmem:[%s1814 + $0x13c] sm:$0xf] %v1909
                %v1911 = vld [vmem:[%s1813 + $0xc0] sm:$0xf]
                %1912 = vst [vmem:[%s1814 + $0x180] sm:$0xf] %v1911
                %v1913 = vld [vmem:[%s1813 + $0xc4] sm:$0xf]
                %1914 = vst [vmem:[%s1814 + $0x184] sm:$0xf] %v1913
                %v1915 = vld [vmem:[%s1813 + $0xc8] sm:$0xf]
                %1916 = vst [vmem:[%s1814 + $0x188] sm:$0xf] %v1915
                %v1917 = vld [vmem:[%s1813 + $0xcc] sm:$0xf]
                %1918 = vst [vmem:[%s1814 + $0x18c] sm:$0xf] %v1917
                %v1919 = vld [vmem:[%s1813 + $0xd0] sm:$0xf]
                %1920 = vst [vmem:[%s1814 + $0x190] sm:$0xf] %v1919
                %v1921 = vld [vmem:[%s1813 + $0xd4] sm:$0xf]
                %1922 = vst [vmem:[%s1814 + $0x194] sm:$0xf] %v1921
                %v1923 = vld [vmem:[%s1813 + $0xd8] sm:$0xf]
                %1924 = vst [vmem:[%s1814 + $0x198] sm:$0xf] %v1923
                %v1925 = vld [vmem:[%s1813 + $0xdc] sm:$0xf]
                %1926 = vst [vmem:[%s1814 + $0x19c] sm:$0xf] %v1925
                %v1927 = vld [vmem:[%s1813 + $0xe0] sm:$0xf]
                %1928 = vst [vmem:[%s1814 + $0x1a0] sm:$0xf] %v1927
                %v1929 = vld [vmem:[%s1813 + $0xe4] sm:$0xf]
                %1930 = vst [vmem:[%s1814 + $0x1a4] sm:$0xf] %v1929
                %v1931 = vld [vmem:[%s1813 + $0xe8] sm:$0xf]
                %1932 = vst [vmem:[%s1814 + $0x1a8] sm:$0xf] %v1931
                %v1933 = vld [vmem:[%s1813 + $0xec] sm:$0xf]
                %1934 = vst [vmem:[%s1814 + $0x1ac] sm:$0xf] %v1933
                %v1935 = vld [vmem:[%s1813 + $0xf0] sm:$0xf]
                %1936 = vst [vmem:[%s1814 + $0x1b0] sm:$0xf] %v1935
                %v1937 = vld [vmem:[%s1813 + $0xf4] sm:$0xf]
                %1938 = vst [vmem:[%s1814 + $0x1b4] sm:$0xf] %v1937
                %v1939 = vld [vmem:[%s1813 + $0xf8] sm:$0xf]
                %1940 = vst [vmem:[%s1814 + $0x1b8] sm:$0xf] %v1939
                %v1941 = vld [vmem:[%s1813 + $0xfc] sm:$0xf]
                %1942 = vst [vmem:[%s1814 + $0x1bc] sm:$0xf] %v1941
              $region65: #{tpu_custom_call.1} parent=59 // loop_footer
                %s1812 = sadd.s32 1, %s1808
              $region66: #{tpu_custom_call.1} parent=59 // loop_footer_branch
                %1807 = sbr.rel target = $region62
              $region67: #{tpu_custom_call.1} parent=59 // loop_exit
                _
            $region60: #{tpu_custom_call.1} parent=51 // pred_fallthru
              _
          $region52: #{tpu_custom_call.1} parent=47 // pred_fallthru
            _
          %2090 = vnop
        $region48: #{tpu_custom_call.1} parent=35 // pred_fallthru
          _
        // Predicated region
        $region86: #{tpu_custom_call.1} parent=35 // pred_check
          %p2091 = pneg %p173
        $region87: #{tpu_custom_call.1} parent=35 // pred_check_branch
          %2093 = sbr.rel (%p2091) target = $region89
        $region88: #{tpu_custom_call.1} parent=35 // pred_region
          %s2094 = smul.u32 16, %s27
          %s2095 = smul.addr %s26, 128
          %s2096 = sadd.s32 %s2094, %s2095
          %s2097 = smul.addr %s2096, 4
          %s2098 = scalar_lea.vmem %s5, %s2097
          // Predicated region
          $region90: #{tpu_custom_call.1} parent=88 // pred_check
            _
          $region91: #{tpu_custom_call.1} parent=88 // pred_check_branch
            %2100 = sbr.rel (0) target = $region93
          $region92: #{tpu_custom_call.1} parent=88 // pred_region
            // Predicated region
            $region94: #{tpu_custom_call.1} parent=92 // pred_check
              _
            $region95: #{tpu_custom_call.1} parent=92 // pred_check_branch
              %2102 = sbr.rel target = $region97
            $region96: #{tpu_custom_call.1} parent=92 // pred_region
              // Predicated region
              $region109: #{tpu_custom_call.1} parent=96 // pred_check
                _
              $region110: #{tpu_custom_call.1} parent=96 // pred_check_branch
                %2243 = sbr.rel (0) target = $region112
              $region111: #{tpu_custom_call.1} parent=96 // pred_region
                loop: start=0, step=1, limit=1
                $region113: #{tpu_custom_call.1} parent=111 // loop_pre_header
                  _
                $region114: #{tpu_custom_call.1} parent=111 // loop_header
                  %s2245 = sphi 0, %s2249
                  %p2246 = scmp.ge.s32.totalorder %s2245, 1
                  %s2250 = sphi %s1787, %s1787
                  %s2251 = sphi %s2098, %s2098
                $region115: #{tpu_custom_call.1} parent=111 // loop_header_branch
                  %2248 = sbr.rel (%p2246) target = $region119
                $region116: #{tpu_custom_call.1} parent=111 // loop_body
                  _
                $region117: #{tpu_custom_call.1} parent=111 // loop_footer
                  %s2249 = sadd.s32 1, %s2245
                $region118: #{tpu_custom_call.1} parent=111 // loop_footer_branch
                  %2244 = sbr.rel target = $region114
                $region119: #{tpu_custom_call.1} parent=111 // loop_exit
                  _
                loop: start=0, step=1, limit=1
                $region120: #{tpu_custom_call.1} parent=111 // loop_pre_header
                  _
                $region121: #{tpu_custom_call.1} parent=111 // loop_header
                  %s2254 = sphi 0, %s2258
                  %p2255 = scmp.ge.s32.totalorder %s2254, 1
                  %s2259 = sphi %s1787, %s1787
                  %s2260 = sphi %s2098, %s2098
                $region122: #{tpu_custom_call.1} parent=111 // loop_header_branch
                  %2257 = sbr.rel (%p2255) target = $region126
                $region123: #{tpu_custom_call.1} parent=111 // loop_body
                  %v2261 = vld [vmem:[%s2259] sm:$0xf]
                  %2262 = vst [vmem:[%s2260] sm:$0xf] %v2261
                  %v2263 = vld [vmem:[%s2259 + $0x4] sm:$0xf]
                  %2264 = vst [vmem:[%s2260 + $0x4] sm:$0xf] %v2263
                  %v2265 = vld [vmem:[%s2259 + $0x8] sm:$0xf]
                  %2266 = vst [vmem:[%s2260 + $0x8] sm:$0xf] %v2265
                  %v2267 = vld [vmem:[%s2259 + $0xc] sm:$0xf]
                  %2268 = vst [vmem:[%s2260 + $0xc] sm:$0xf] %v2267
                  %v2269 = vld [vmem:[%s2259 + $0x10] sm:$0xf]
                  %2270 = vst [vmem:[%s2260 + $0x10] sm:$0xf] %v2269
                  %v2271 = vld [vmem:[%s2259 + $0x14] sm:$0xf]
                  %2272 = vst [vmem:[%s2260 + $0x14] sm:$0xf] %v2271
                  %v2273 = vld [vmem:[%s2259 + $0x18] sm:$0xf]
                  %2274 = vst [vmem:[%s2260 + $0x18] sm:$0xf] %v2273
                  %v2275 = vld [vmem:[%s2259 + $0x1c] sm:$0xf]
                  %2276 = vst [vmem:[%s2260 + $0x1c] sm:$0xf] %v2275
                  %v2277 = vld [vmem:[%s2259 + $0x20] sm:$0xf]
                  %2278 = vst [vmem:[%s2260 + $0x20] sm:$0xf] %v2277
                  %v2279 = vld [vmem:[%s2259 + $0x24] sm:$0xf]
                  %2280 = vst [vmem:[%s2260 + $0x24] sm:$0xf] %v2279
                  %v2281 = vld [vmem:[%s2259 + $0x28] sm:$0xf]
                  %2282 = vst [vmem:[%s2260 + $0x28] sm:$0xf] %v2281
                  %v2283 = vld [vmem:[%s2259 + $0x2c] sm:$0xf]
                  %2284 = vst [vmem:[%s2260 + $0x2c] sm:$0xf] %v2283
                  %v2285 = vld [vmem:[%s2259 + $0x30] sm:$0xf]
                  %2286 = vst [vmem:[%s2260 + $0x30] sm:$0xf] %v2285
                  %v2287 = vld [vmem:[%s2259 + $0x34] sm:$0xf]
                  %2288 = vst [vmem:[%s2260 + $0x34] sm:$0xf] %v2287
                  %v2289 = vld [vmem:[%s2259 + $0x38] sm:$0xf]
                  %2290 = vst [vmem:[%s2260 + $0x38] sm:$0xf] %v2289
                  %v2291 = vld [vmem:[%s2259 + $0x3c] sm:$0xf]
                  %2292 = vst [vmem:[%s2260 + $0x3c] sm:$0xf] %v2291
                  %v2293 = vld [vmem:[%s2259 + $0x40] sm:$0xf]
                  %2294 = vst [vmem:[%s2260 + $0x80] sm:$0xf] %v2293
                  %v2295 = vld [vmem:[%s2259 + $0x44] sm:$0xf]
                  %2296 = vst [vmem:[%s2260 + $0x84] sm:$0xf] %v2295
                  %v2297 = vld [vmem:[%s2259 + $0x48] sm:$0xf]
                  %2298 = vst [vmem:[%s2260 + $0x88] sm:$0xf] %v2297
                  %v2299 = vld [vmem:[%s2259 + $0x4c] sm:$0xf]
                  %2300 = vst [vmem:[%s2260 + $0x8c] sm:$0xf] %v2299
                  %v2301 = vld [vmem:[%s2259 + $0x50] sm:$0xf]
                  %2302 = vst [vmem:[%s2260 + $0x90] sm:$0xf] %v2301
                  %v2303 = vld [vmem:[%s2259 + $0x54] sm:$0xf]
                  %2304 = vst [vmem:[%s2260 + $0x94] sm:$0xf] %v2303
                  %v2305 = vld [vmem:[%s2259 + $0x58] sm:$0xf]
                  %2306 = vst [vmem:[%s2260 + $0x98] sm:$0xf] %v2305
                  %v2307 = vld [vmem:[%s2259 + $0x5c] sm:$0xf]
                  %2308 = vst [vmem:[%s2260 + $0x9c] sm:$0xf] %v2307
                  %v2309 = vld [vmem:[%s2259 + $0x60] sm:$0xf]
                  %2310 = vst [vmem:[%s2260 + $0xa0] sm:$0xf] %v2309
                  %v2311 = vld [vmem:[%s2259 + $0x64] sm:$0xf]
                  %2312 = vst [vmem:[%s2260 + $0xa4] sm:$0xf] %v2311
                  %v2313 = vld [vmem:[%s2259 + $0x68] sm:$0xf]
                  %2314 = vst [vmem:[%s2260 + $0xa8] sm:$0xf] %v2313
                  %v2315 = vld [vmem:[%s2259 + $0x6c] sm:$0xf]
                  %2316 = vst [vmem:[%s2260 + $0xac] sm:$0xf] %v2315
                  %v2317 = vld [vmem:[%s2259 + $0x70] sm:$0xf]
                  %2318 = vst [vmem:[%s2260 + $0xb0] sm:$0xf] %v2317
                  %v2319 = vld [vmem:[%s2259 + $0x74] sm:$0xf]
                  %2320 = vst [vmem:[%s2260 + $0xb4] sm:$0xf] %v2319
                  %v2321 = vld [vmem:[%s2259 + $0x78] sm:$0xf]
                  %2322 = vst [vmem:[%s2260 + $0xb8] sm:$0xf] %v2321
                  %v2323 = vld [vmem:[%s2259 + $0x7c] sm:$0xf]
                  %2324 = vst [vmem:[%s2260 + $0xbc] sm:$0xf] %v2323
                  %v2325 = vld [vmem:[%s2259 + $0x80] sm:$0xf]
                  %2326 = vst [vmem:[%s2260 + $0x100] sm:$0xf] %v2325
                  %v2327 = vld [vmem:[%s2259 + $0x84] sm:$0xf]
                  %2328 = vst [vmem:[%s2260 + $0x104] sm:$0xf] %v2327
                  %v2329 = vld [vmem:[%s2259 + $0x88] sm:$0xf]
                  %2330 = vst [vmem:[%s2260 + $0x108] sm:$0xf] %v2329
                  %v2331 = vld [vmem:[%s2259 + $0x8c] sm:$0xf]
                  %2332 = vst [vmem:[%s2260 + $0x10c] sm:$0xf] %v2331
                  %v2333 = vld [vmem:[%s2259 + $0x90] sm:$0xf]
                  %2334 = vst [vmem:[%s2260 + $0x110] sm:$0xf] %v2333
                  %v2335 = vld [vmem:[%s2259 + $0x94] sm:$0xf]
                  %2336 = vst [vmem:[%s2260 + $0x114] sm:$0xf] %v2335
                  %v2337 = vld [vmem:[%s2259 + $0x98] sm:$0xf]
                  %2338 = vst [vmem:[%s2260 + $0x118] sm:$0xf] %v2337
                  %v2339 = vld [vmem:[%s2259 + $0x9c] sm:$0xf]
                  %2340 = vst [vmem:[%s2260 + $0x11c] sm:$0xf] %v2339
                  %v2341 = vld [vmem:[%s2259 + $0xa0] sm:$0xf]
                  %2342 = vst [vmem:[%s2260 + $0x120] sm:$0xf] %v2341
                  %v2343 = vld [vmem:[%s2259 + $0xa4] sm:$0xf]
                  %2344 = vst [vmem:[%s2260 + $0x124] sm:$0xf] %v2343
                  %v2345 = vld [vmem:[%s2259 + $0xa8] sm:$0xf]
                  %2346 = vst [vmem:[%s2260 + $0x128] sm:$0xf] %v2345
                  %v2347 = vld [vmem:[%s2259 + $0xac] sm:$0xf]
                  %2348 = vst [vmem:[%s2260 + $0x12c] sm:$0xf] %v2347
                  %v2349 = vld [vmem:[%s2259 + $0xb0] sm:$0xf]
                  %2350 = vst [vmem:[%s2260 + $0x130] sm:$0xf] %v2349
                  %v2351 = vld [vmem:[%s2259 + $0xb4] sm:$0xf]
                  %2352 = vst [vmem:[%s2260 + $0x134] sm:$0xf] %v2351
                  %v2353 = vld [vmem:[%s2259 + $0xb8] sm:$0xf]
                  %2354 = vst [vmem:[%s2260 + $0x138] sm:$0xf] %v2353
                  %v2355 = vld [vmem:[%s2259 + $0xbc] sm:$0xf]
                  %2356 = vst [vmem:[%s2260 + $0x13c] sm:$0xf] %v2355
                  %v2357 = vld [vmem:[%s2259 + $0xc0] sm:$0xf]
                  %2358 = vst [vmem:[%s2260 + $0x180] sm:$0xf] %v2357
                  %v2359 = vld [vmem:[%s2259 + $0xc4] sm:$0xf]
                  %2360 = vst [vmem:[%s2260 + $0x184] sm:$0xf] %v2359
                  %v2361 = vld [vmem:[%s2259 + $0xc8] sm:$0xf]
                  %2362 = vst [vmem:[%s2260 + $0x188] sm:$0xf] %v2361
                  %v2363 = vld [vmem:[%s2259 + $0xcc] sm:$0xf]
                  %2364 = vst [vmem:[%s2260 + $0x18c] sm:$0xf] %v2363
                  %v2365 = vld [vmem:[%s2259 + $0xd0] sm:$0xf]
                  %2366 = vst [vmem:[%s2260 + $0x190] sm:$0xf] %v2365
                  %v2367 = vld [vmem:[%s2259 + $0xd4] sm:$0xf]
                  %2368 = vst [vmem:[%s2260 + $0x194] sm:$0xf] %v2367
                  %v2369 = vld [vmem:[%s2259 + $0xd8] sm:$0xf]
                  %2370 = vst [vmem:[%s2260 + $0x198] sm:$0xf] %v2369
                  %v2371 = vld [vmem:[%s2259 + $0xdc] sm:$0xf]
                  %2372 = vst [vmem:[%s2260 + $0x19c] sm:$0xf] %v2371
                  %v2373 = vld [vmem:[%s2259 + $0xe0] sm:$0xf]
                  %2374 = vst [vmem:[%s2260 + $0x1a0] sm:$0xf] %v2373
                  %v2375 = vld [vmem:[%s2259 + $0xe4] sm:$0xf]
                  %2376 = vst [vmem:[%s2260 + $0x1a4] sm:$0xf] %v2375
                  %v2377 = vld [vmem:[%s2259 + $0xe8] sm:$0xf]
                  %2378 = vst [vmem:[%s2260 + $0x1a8] sm:$0xf] %v2377
                  %v2379 = vld [vmem:[%s2259 + $0xec] sm:$0xf]
                  %2380 = vst [vmem:[%s2260 + $0x1ac] sm:$0xf] %v2379
                  %v2381 = vld [vmem:[%s2259 + $0xf0] sm:$0xf]
                  %2382 = vst [vmem:[%s2260 + $0x1b0] sm:$0xf] %v2381
                  %v2383 = vld [vmem:[%s2259 + $0xf4] sm:$0xf]
                  %2384 = vst [vmem:[%s2260 + $0x1b4] sm:$0xf] %v2383
                  %v2385 = vld [vmem:[%s2259 + $0xf8] sm:$0xf]
                  %2386 = vst [vmem:[%s2260 + $0x1b8] sm:$0xf] %v2385
                  %v2387 = vld [vmem:[%s2259 + $0xfc] sm:$0xf]
                  %2388 = vst [vmem:[%s2260 + $0x1bc] sm:$0xf] %v2387
                $region124: #{tpu_custom_call.1} parent=111 // loop_footer
                  %s2258 = sadd.s32 1, %s2254
                $region125: #{tpu_custom_call.1} parent=111 // loop_footer_branch
                  %2253 = sbr.rel target = $region121
                $region126: #{tpu_custom_call.1} parent=111 // loop_exit
                  _
              $region112: #{tpu_custom_call.1} parent=96 // pred_fallthru
                _
            $region97: #{tpu_custom_call.1} parent=92 // pred_fallthru
              _
            // Predicated region
            $region98: #{tpu_custom_call.1} parent=92 // pred_check
              _
            $region99: #{tpu_custom_call.1} parent=92 // pred_check_branch
              %2104 = sbr.rel (0) target = $region101
            $region100: #{tpu_custom_call.1} parent=92 // pred_region
              loop: start=0, step=1, limit=1
              $region102: #{tpu_custom_call.1} parent=100 // loop_pre_header
                _
              $region103: #{tpu_custom_call.1} parent=100 // loop_header
                %s2107 = sphi 0, %s2111
                %p2108 = scmp.ge.s32.totalorder %s2107, 1
                %s2112 = sphi %s1787, %s1787
                %s2113 = sphi %s2098, %s2098
              $region104: #{tpu_custom_call.1} parent=100 // loop_header_branch
                %2110 = sbr.rel (%p2108) target = $region108
              $region105: #{tpu_custom_call.1} parent=100 // loop_body
                %v2114 = vld [vmem:[%s2112] sm:$0xf]
                %2115 = vst [vmem:[%s2113] sm:$0xf] %v2114
                %v2116 = vld [vmem:[%s2112 + $0x4] sm:$0xf]
                %2117 = vst [vmem:[%s2113 + $0x4] sm:$0xf] %v2116
                %v2118 = vld [vmem:[%s2112 + $0x8] sm:$0xf]
                %2119 = vst [vmem:[%s2113 + $0x8] sm:$0xf] %v2118
                %v2120 = vld [vmem:[%s2112 + $0xc] sm:$0xf]
                %2121 = vst [vmem:[%s2113 + $0xc] sm:$0xf] %v2120
                %v2122 = vld [vmem:[%s2112 + $0x10] sm:$0xf]
                %2123 = vst [vmem:[%s2113 + $0x10] sm:$0xf] %v2122
                %v2124 = vld [vmem:[%s2112 + $0x14] sm:$0xf]
                %2125 = vst [vmem:[%s2113 + $0x14] sm:$0xf] %v2124
                %v2126 = vld [vmem:[%s2112 + $0x18] sm:$0xf]
                %2127 = vst [vmem:[%s2113 + $0x18] sm:$0xf] %v2126
                %v2128 = vld [vmem:[%s2112 + $0x1c] sm:$0xf]
                %2129 = vst [vmem:[%s2113 + $0x1c] sm:$0xf] %v2128
                %v2130 = vld [vmem:[%s2112 + $0x20] sm:$0xf]
                %2131 = vst [vmem:[%s2113 + $0x20] sm:$0xf] %v2130
                %v2132 = vld [vmem:[%s2112 + $0x24] sm:$0xf]
                %2133 = vst [vmem:[%s2113 + $0x24] sm:$0xf] %v2132
                %v2134 = vld [vmem:[%s2112 + $0x28] sm:$0xf]
                %2135 = vst [vmem:[%s2113 + $0x28] sm:$0xf] %v2134
                %v2136 = vld [vmem:[%s2112 + $0x2c] sm:$0xf]
                %2137 = vst [vmem:[%s2113 + $0x2c] sm:$0xf] %v2136
                %v2138 = vld [vmem:[%s2112 + $0x30] sm:$0xf]
                %2139 = vst [vmem:[%s2113 + $0x30] sm:$0xf] %v2138
                %v2140 = vld [vmem:[%s2112 + $0x34] sm:$0xf]
                %2141 = vst [vmem:[%s2113 + $0x34] sm:$0xf] %v2140
                %v2142 = vld [vmem:[%s2112 + $0x38] sm:$0xf]
                %2143 = vst [vmem:[%s2113 + $0x38] sm:$0xf] %v2142
                %v2144 = vld [vmem:[%s2112 + $0x3c] sm:$0xf]
                %2145 = vst [vmem:[%s2113 + $0x3c] sm:$0xf] %v2144
                %v2146 = vld [vmem:[%s2112 + $0x40] sm:$0xf]
                %2147 = vst [vmem:[%s2113 + $0x80] sm:$0xf] %v2146
                %v2148 = vld [vmem:[%s2112 + $0x44] sm:$0xf]
                %2149 = vst [vmem:[%s2113 + $0x84] sm:$0xf] %v2148
                %v2150 = vld [vmem:[%s2112 + $0x48] sm:$0xf]
                %2151 = vst [vmem:[%s2113 + $0x88] sm:$0xf] %v2150
                %v2152 = vld [vmem:[%s2112 + $0x4c] sm:$0xf]
                %2153 = vst [vmem:[%s2113 + $0x8c] sm:$0xf] %v2152
                %v2154 = vld [vmem:[%s2112 + $0x50] sm:$0xf]
                %2155 = vst [vmem:[%s2113 + $0x90] sm:$0xf] %v2154
                %v2156 = vld [vmem:[%s2112 + $0x54] sm:$0xf]
                %2157 = vst [vmem:[%s2113 + $0x94] sm:$0xf] %v2156
                %v2158 = vld [vmem:[%s2112 + $0x58] sm:$0xf]
                %2159 = vst [vmem:[%s2113 + $0x98] sm:$0xf] %v2158
                %v2160 = vld [vmem:[%s2112 + $0x5c] sm:$0xf]
                %2161 = vst [vmem:[%s2113 + $0x9c] sm:$0xf] %v2160
                %v2162 = vld [vmem:[%s2112 + $0x60] sm:$0xf]
                %2163 = vst [vmem:[%s2113 + $0xa0] sm:$0xf] %v2162
                %v2164 = vld [vmem:[%s2112 + $0x64] sm:$0xf]
                %2165 = vst [vmem:[%s2113 + $0xa4] sm:$0xf] %v2164
                %v2166 = vld [vmem:[%s2112 + $0x68] sm:$0xf]
                %2167 = vst [vmem:[%s2113 + $0xa8] sm:$0xf] %v2166
                %v2168 = vld [vmem:[%s2112 + $0x6c] sm:$0xf]
                %2169 = vst [vmem:[%s2113 + $0xac] sm:$0xf] %v2168
                %v2170 = vld [vmem:[%s2112 + $0x70] sm:$0xf]
                %2171 = vst [vmem:[%s2113 + $0xb0] sm:$0xf] %v2170
                %v2172 = vld [vmem:[%s2112 + $0x74] sm:$0xf]
                %2173 = vst [vmem:[%s2113 + $0xb4] sm:$0xf] %v2172
                %v2174 = vld [vmem:[%s2112 + $0x78] sm:$0xf]
                %2175 = vst [vmem:[%s2113 + $0xb8] sm:$0xf] %v2174
                %v2176 = vld [vmem:[%s2112 + $0x7c] sm:$0xf]
                %2177 = vst [vmem:[%s2113 + $0xbc] sm:$0xf] %v2176
                %v2178 = vld [vmem:[%s2112 + $0x80] sm:$0xf]
                %2179 = vst [vmem:[%s2113 + $0x100] sm:$0xf] %v2178
                %v2180 = vld [vmem:[%s2112 + $0x84] sm:$0xf]
                %2181 = vst [vmem:[%s2113 + $0x104] sm:$0xf] %v2180
                %v2182 = vld [vmem:[%s2112 + $0x88] sm:$0xf]
                %2183 = vst [vmem:[%s2113 + $0x108] sm:$0xf] %v2182
                %v2184 = vld [vmem:[%s2112 + $0x8c] sm:$0xf]
                %2185 = vst [vmem:[%s2113 + $0x10c] sm:$0xf] %v2184
                %v2186 = vld [vmem:[%s2112 + $0x90] sm:$0xf]
                %2187 = vst [vmem:[%s2113 + $0x110] sm:$0xf] %v2186
                %v2188 = vld [vmem:[%s2112 + $0x94] sm:$0xf]
                %2189 = vst [vmem:[%s2113 + $0x114] sm:$0xf] %v2188
                %v2190 = vld [vmem:[%s2112 + $0x98] sm:$0xf]
                %2191 = vst [vmem:[%s2113 + $0x118] sm:$0xf] %v2190
                %v2192 = vld [vmem:[%s2112 + $0x9c] sm:$0xf]
                %2193 = vst [vmem:[%s2113 + $0x11c] sm:$0xf] %v2192
                %v2194 = vld [vmem:[%s2112 + $0xa0] sm:$0xf]
                %2195 = vst [vmem:[%s2113 + $0x120] sm:$0xf] %v2194
                %v2196 = vld [vmem:[%s2112 + $0xa4] sm:$0xf]
                %2197 = vst [vmem:[%s2113 + $0x124] sm:$0xf] %v2196
                %v2198 = vld [vmem:[%s2112 + $0xa8] sm:$0xf]
                %2199 = vst [vmem:[%s2113 + $0x128] sm:$0xf] %v2198
                %v2200 = vld [vmem:[%s2112 + $0xac] sm:$0xf]
                %2201 = vst [vmem:[%s2113 + $0x12c] sm:$0xf] %v2200
                %v2202 = vld [vmem:[%s2112 + $0xb0] sm:$0xf]
                %2203 = vst [vmem:[%s2113 + $0x130] sm:$0xf] %v2202
                %v2204 = vld [vmem:[%s2112 + $0xb4] sm:$0xf]
                %2205 = vst [vmem:[%s2113 + $0x134] sm:$0xf] %v2204
                %v2206 = vld [vmem:[%s2112 + $0xb8] sm:$0xf]
                %2207 = vst [vmem:[%s2113 + $0x138] sm:$0xf] %v2206
                %v2208 = vld [vmem:[%s2112 + $0xbc] sm:$0xf]
                %2209 = vst [vmem:[%s2113 + $0x13c] sm:$0xf] %v2208
                %v2210 = vld [vmem:[%s2112 + $0xc0] sm:$0xf]
                %2211 = vst [vmem:[%s2113 + $0x180] sm:$0xf] %v2210
                %v2212 = vld [vmem:[%s2112 + $0xc4] sm:$0xf]
                %2213 = vst [vmem:[%s2113 + $0x184] sm:$0xf] %v2212
                %v2214 = vld [vmem:[%s2112 + $0xc8] sm:$0xf]
                %2215 = vst [vmem:[%s2113 + $0x188] sm:$0xf] %v2214
                %v2216 = vld [vmem:[%s2112 + $0xcc] sm:$0xf]
                %2217 = vst [vmem:[%s2113 + $0x18c] sm:$0xf] %v2216
                %v2218 = vld [vmem:[%s2112 + $0xd0] sm:$0xf]
                %2219 = vst [vmem:[%s2113 + $0x190] sm:$0xf] %v2218
                %v2220 = vld [vmem:[%s2112 + $0xd4] sm:$0xf]
                %2221 = vst [vmem:[%s2113 + $0x194] sm:$0xf] %v2220
                %v2222 = vld [vmem:[%s2112 + $0xd8] sm:$0xf]
                %2223 = vst [vmem:[%s2113 + $0x198] sm:$0xf] %v2222
                %v2224 = vld [vmem:[%s2112 + $0xdc] sm:$0xf]
                %2225 = vst [vmem:[%s2113 + $0x19c] sm:$0xf] %v2224
                %v2226 = vld [vmem:[%s2112 + $0xe0] sm:$0xf]
                %2227 = vst [vmem:[%s2113 + $0x1a0] sm:$0xf] %v2226
                %v2228 = vld [vmem:[%s2112 + $0xe4] sm:$0xf]
                %2229 = vst [vmem:[%s2113 + $0x1a4] sm:$0xf] %v2228
                %v2230 = vld [vmem:[%s2112 + $0xe8] sm:$0xf]
                %2231 = vst [vmem:[%s2113 + $0x1a8] sm:$0xf] %v2230
                %v2232 = vld [vmem:[%s2112 + $0xec] sm:$0xf]
                %2233 = vst [vmem:[%s2113 + $0x1ac] sm:$0xf] %v2232
                %v2234 = vld [vmem:[%s2112 + $0xf0] sm:$0xf]
                %2235 = vst [vmem:[%s2113 + $0x1b0] sm:$0xf] %v2234
                %v2236 = vld [vmem:[%s2112 + $0xf4] sm:$0xf]
                %2237 = vst [vmem:[%s2113 + $0x1b4] sm:$0xf] %v2236
                %v2238 = vld [vmem:[%s2112 + $0xf8] sm:$0xf]
                %2239 = vst [vmem:[%s2113 + $0x1b8] sm:$0xf] %v2238
                %v2240 = vld [vmem:[%s2112 + $0xfc] sm:$0xf]
                %2241 = vst [vmem:[%s2113 + $0x1bc] sm:$0xf] %v2240
              $region106: #{tpu_custom_call.1} parent=100 // loop_footer
                %s2111 = sadd.s32 1, %s2107
              $region107: #{tpu_custom_call.1} parent=100 // loop_footer_branch
                %2106 = sbr.rel target = $region103
              $region108: #{tpu_custom_call.1} parent=100 // loop_exit
                _
            $region101: #{tpu_custom_call.1} parent=92 // pred_fallthru
              _
          $region93: #{tpu_custom_call.1} parent=88 // pred_fallthru
            _
          %2389 = vnop
        $region89: #{tpu_custom_call.1} parent=35 // pred_fallthru
          _
        // Predicated region
        $region127: #{tpu_custom_call.1} parent=35 // pred_check
          %p2390 = pneg %p201
        $region128: #{tpu_custom_call.1} parent=35 // pred_check_branch
          %2392 = sbr.rel (%p2390) target = $region130
        $region129: #{tpu_custom_call.1} parent=35 // pred_region
          %s2393 = smul.u32 16, %s27
          %s2394 = smul.addr %s26, 128
          %s2395 = sadd.s32 %s2393, %s2394
          %s2396 = smul.addr %s2395, 4
          %s2397 = scalar_lea.vmem %s6, %s2396
          // Predicated region
          $region131: #{tpu_custom_call.1} parent=129 // pred_check
            _
          $region132: #{tpu_custom_call.1} parent=129 // pred_check_branch
            %2399 = sbr.rel (0) target = $region134
          $region133: #{tpu_custom_call.1} parent=129 // pred_region
            // Predicated region
            $region135: #{tpu_custom_call.1} parent=133 // pred_check
              _
            $region136: #{tpu_custom_call.1} parent=133 // pred_check_branch
              %2401 = sbr.rel target = $region138
            $region137: #{tpu_custom_call.1} parent=133 // pred_region
              // Predicated region
              $region150: #{tpu_custom_call.1} parent=137 // pred_check
                _
              $region151: #{tpu_custom_call.1} parent=137 // pred_check_branch
                %2542 = sbr.rel (0) target = $region153
              $region152: #{tpu_custom_call.1} parent=137 // pred_region
                loop: start=0, step=1, limit=1
                $region154: #{tpu_custom_call.1} parent=152 // loop_pre_header
                  _
                $region155: #{tpu_custom_call.1} parent=152 // loop_header
                  %s2544 = sphi 0, %s2548
                  %p2545 = scmp.ge.s32.totalorder %s2544, 1
                  %s2549 = sphi %s1791, %s1791
                  %s2550 = sphi %s2397, %s2397
                $region156: #{tpu_custom_call.1} parent=152 // loop_header_branch
                  %2547 = sbr.rel (%p2545) target = $region160
                $region157: #{tpu_custom_call.1} parent=152 // loop_body
                  _
                $region158: #{tpu_custom_call.1} parent=152 // loop_footer
                  %s2548 = sadd.s32 1, %s2544
                $region159: #{tpu_custom_call.1} parent=152 // loop_footer_branch
                  %2543 = sbr.rel target = $region155
                $region160: #{tpu_custom_call.1} parent=152 // loop_exit
                  _
                loop: start=0, step=1, limit=1
                $region161: #{tpu_custom_call.1} parent=152 // loop_pre_header
                  _
                $region162: #{tpu_custom_call.1} parent=152 // loop_header
                  %s2553 = sphi 0, %s2557
                  %p2554 = scmp.ge.s32.totalorder %s2553, 1
                  %s2558 = sphi %s1791, %s1791
                  %s2559 = sphi %s2397, %s2397
                $region163: #{tpu_custom_call.1} parent=152 // loop_header_branch
                  %2556 = sbr.rel (%p2554) target = $region167
                $region164: #{tpu_custom_call.1} parent=152 // loop_body
                  %v2560 = vld [vmem:[%s2558] sm:$0xf]
                  %2561 = vst [vmem:[%s2559] sm:$0xf] %v2560
                  %v2562 = vld [vmem:[%s2558 + $0x4] sm:$0xf]
                  %2563 = vst [vmem:[%s2559 + $0x4] sm:$0xf] %v2562
                  %v2564 = vld [vmem:[%s2558 + $0x8] sm:$0xf]
                  %2565 = vst [vmem:[%s2559 + $0x8] sm:$0xf] %v2564
                  %v2566 = vld [vmem:[%s2558 + $0xc] sm:$0xf]
                  %2567 = vst [vmem:[%s2559 + $0xc] sm:$0xf] %v2566
                  %v2568 = vld [vmem:[%s2558 + $0x10] sm:$0xf]
                  %2569 = vst [vmem:[%s2559 + $0x10] sm:$0xf] %v2568
                  %v2570 = vld [vmem:[%s2558 + $0x14] sm:$0xf]
                  %2571 = vst [vmem:[%s2559 + $0x14] sm:$0xf] %v2570
                  %v2572 = vld [vmem:[%s2558 + $0x18] sm:$0xf]
                  %2573 = vst [vmem:[%s2559 + $0x18] sm:$0xf] %v2572
                  %v2574 = vld [vmem:[%s2558 + $0x1c] sm:$0xf]
                  %2575 = vst [vmem:[%s2559 + $0x1c] sm:$0xf] %v2574
                  %v2576 = vld [vmem:[%s2558 + $0x20] sm:$0xf]
                  %2577 = vst [vmem:[%s2559 + $0x20] sm:$0xf] %v2576
                  %v2578 = vld [vmem:[%s2558 + $0x24] sm:$0xf]
                  %2579 = vst [vmem:[%s2559 + $0x24] sm:$0xf] %v2578
                  %v2580 = vld [vmem:[%s2558 + $0x28] sm:$0xf]
                  %2581 = vst [vmem:[%s2559 + $0x28] sm:$0xf] %v2580
                  %v2582 = vld [vmem:[%s2558 + $0x2c] sm:$0xf]
                  %2583 = vst [vmem:[%s2559 + $0x2c] sm:$0xf] %v2582
                  %v2584 = vld [vmem:[%s2558 + $0x30] sm:$0xf]
                  %2585 = vst [vmem:[%s2559 + $0x30] sm:$0xf] %v2584
                  %v2586 = vld [vmem:[%s2558 + $0x34] sm:$0xf]
                  %2587 = vst [vmem:[%s2559 + $0x34] sm:$0xf] %v2586
                  %v2588 = vld [vmem:[%s2558 + $0x38] sm:$0xf]
                  %2589 = vst [vmem:[%s2559 + $0x38] sm:$0xf] %v2588
                  %v2590 = vld [vmem:[%s2558 + $0x3c] sm:$0xf]
                  %2591 = vst [vmem:[%s2559 + $0x3c] sm:$0xf] %v2590
                  %v2592 = vld [vmem:[%s2558 + $0x40] sm:$0xf]
                  %2593 = vst [vmem:[%s2559 + $0x80] sm:$0xf] %v2592
                  %v2594 = vld [vmem:[%s2558 + $0x44] sm:$0xf]
                  %2595 = vst [vmem:[%s2559 + $0x84] sm:$0xf] %v2594
                  %v2596 = vld [vmem:[%s2558 + $0x48] sm:$0xf]
                  %2597 = vst [vmem:[%s2559 + $0x88] sm:$0xf] %v2596
                  %v2598 = vld [vmem:[%s2558 + $0x4c] sm:$0xf]
                  %2599 = vst [vmem:[%s2559 + $0x8c] sm:$0xf] %v2598
                  %v2600 = vld [vmem:[%s2558 + $0x50] sm:$0xf]
                  %2601 = vst [vmem:[%s2559 + $0x90] sm:$0xf] %v2600
                  %v2602 = vld [vmem:[%s2558 + $0x54] sm:$0xf]
                  %2603 = vst [vmem:[%s2559 + $0x94] sm:$0xf] %v2602
                  %v2604 = vld [vmem:[%s2558 + $0x58] sm:$0xf]
                  %2605 = vst [vmem:[%s2559 + $0x98] sm:$0xf] %v2604
                  %v2606 = vld [vmem:[%s2558 + $0x5c] sm:$0xf]
                  %2607 = vst [vmem:[%s2559 + $0x9c] sm:$0xf] %v2606
                  %v2608 = vld [vmem:[%s2558 + $0x60] sm:$0xf]
                  %2609 = vst [vmem:[%s2559 + $0xa0] sm:$0xf] %v2608
                  %v2610 = vld [vmem:[%s2558 + $0x64] sm:$0xf]
                  %2611 = vst [vmem:[%s2559 + $0xa4] sm:$0xf] %v2610
                  %v2612 = vld [vmem:[%s2558 + $0x68] sm:$0xf]
                  %2613 = vst [vmem:[%s2559 + $0xa8] sm:$0xf] %v2612
                  %v2614 = vld [vmem:[%s2558 + $0x6c] sm:$0xf]
                  %2615 = vst [vmem:[%s2559 + $0xac] sm:$0xf] %v2614
                  %v2616 = vld [vmem:[%s2558 + $0x70] sm:$0xf]
                  %2617 = vst [vmem:[%s2559 + $0xb0] sm:$0xf] %v2616
                  %v2618 = vld [vmem:[%s2558 + $0x74] sm:$0xf]
                  %2619 = vst [vmem:[%s2559 + $0xb4] sm:$0xf] %v2618
                  %v2620 = vld [vmem:[%s2558 + $0x78] sm:$0xf]
                  %2621 = vst [vmem:[%s2559 + $0xb8] sm:$0xf] %v2620
                  %v2622 = vld [vmem:[%s2558 + $0x7c] sm:$0xf]
                  %2623 = vst [vmem:[%s2559 + $0xbc] sm:$0xf] %v2622
                  %v2624 = vld [vmem:[%s2558 + $0x80] sm:$0xf]
                  %2625 = vst [vmem:[%s2559 + $0x100] sm:$0xf] %v2624
                  %v2626 = vld [vmem:[%s2558 + $0x84] sm:$0xf]
                  %2627 = vst [vmem:[%s2559 + $0x104] sm:$0xf] %v2626
                  %v2628 = vld [vmem:[%s2558 + $0x88] sm:$0xf]
                  %2629 = vst [vmem:[%s2559 + $0x108] sm:$0xf] %v2628
                  %v2630 = vld [vmem:[%s2558 + $0x8c] sm:$0xf]
                  %2631 = vst [vmem:[%s2559 + $0x10c] sm:$0xf] %v2630
                  %v2632 = vld [vmem:[%s2558 + $0x90] sm:$0xf]
                  %2633 = vst [vmem:[%s2559 + $0x110] sm:$0xf] %v2632
                  %v2634 = vld [vmem:[%s2558 + $0x94] sm:$0xf]
                  %2635 = vst [vmem:[%s2559 + $0x114] sm:$0xf] %v2634
                  %v2636 = vld [vmem:[%s2558 + $0x98] sm:$0xf]
                  %2637 = vst [vmem:[%s2559 + $0x118] sm:$0xf] %v2636
                  %v2638 = vld [vmem:[%s2558 + $0x9c] sm:$0xf]
                  %2639 = vst [vmem:[%s2559 + $0x11c] sm:$0xf] %v2638
                  %v2640 = vld [vmem:[%s2558 + $0xa0] sm:$0xf]
                  %2641 = vst [vmem:[%s2559 + $0x120] sm:$0xf] %v2640
                  %v2642 = vld [vmem:[%s2558 + $0xa4] sm:$0xf]
                  %2643 = vst [vmem:[%s2559 + $0x124] sm:$0xf] %v2642
                  %v2644 = vld [vmem:[%s2558 + $0xa8] sm:$0xf]
                  %2645 = vst [vmem:[%s2559 + $0x128] sm:$0xf] %v2644
                  %v2646 = vld [vmem:[%s2558 + $0xac] sm:$0xf]
                  %2647 = vst [vmem:[%s2559 + $0x12c] sm:$0xf] %v2646
                  %v2648 = vld [vmem:[%s2558 + $0xb0] sm:$0xf]
                  %2649 = vst [vmem:[%s2559 + $0x130] sm:$0xf] %v2648
                  %v2650 = vld [vmem:[%s2558 + $0xb4] sm:$0xf]
                  %2651 = vst [vmem:[%s2559 + $0x134] sm:$0xf] %v2650
                  %v2652 = vld [vmem:[%s2558 + $0xb8] sm:$0xf]
                  %2653 = vst [vmem:[%s2559 + $0x138] sm:$0xf] %v2652
                  %v2654 = vld [vmem:[%s2558 + $0xbc] sm:$0xf]
                  %2655 = vst [vmem:[%s2559 + $0x13c] sm:$0xf] %v2654
                  %v2656 = vld [vmem:[%s2558 + $0xc0] sm:$0xf]
                  %2657 = vst [vmem:[%s2559 + $0x180] sm:$0xf] %v2656
                  %v2658 = vld [vmem:[%s2558 + $0xc4] sm:$0xf]
                  %2659 = vst [vmem:[%s2559 + $0x184] sm:$0xf] %v2658
                  %v2660 = vld [vmem:[%s2558 + $0xc8] sm:$0xf]
                  %2661 = vst [vmem:[%s2559 + $0x188] sm:$0xf] %v2660
                  %v2662 = vld [vmem:[%s2558 + $0xcc] sm:$0xf]
                  %2663 = vst [vmem:[%s2559 + $0x18c] sm:$0xf] %v2662
                  %v2664 = vld [vmem:[%s2558 + $0xd0] sm:$0xf]
                  %2665 = vst [vmem:[%s2559 + $0x190] sm:$0xf] %v2664
                  %v2666 = vld [vmem:[%s2558 + $0xd4] sm:$0xf]
                  %2667 = vst [vmem:[%s2559 + $0x194] sm:$0xf] %v2666
                  %v2668 = vld [vmem:[%s2558 + $0xd8] sm:$0xf]
                  %2669 = vst [vmem:[%s2559 + $0x198] sm:$0xf] %v2668
                  %v2670 = vld [vmem:[%s2558 + $0xdc] sm:$0xf]
                  %2671 = vst [vmem:[%s2559 + $0x19c] sm:$0xf] %v2670
                  %v2672 = vld [vmem:[%s2558 + $0xe0] sm:$0xf]
                  %2673 = vst [vmem:[%s2559 + $0x1a0] sm:$0xf] %v2672
                  %v2674 = vld [vmem:[%s2558 + $0xe4] sm:$0xf]
                  %2675 = vst [vmem:[%s2559 + $0x1a4] sm:$0xf] %v2674
                  %v2676 = vld [vmem:[%s2558 + $0xe8] sm:$0xf]
                  %2677 = vst [vmem:[%s2559 + $0x1a8] sm:$0xf] %v2676
                  %v2678 = vld [vmem:[%s2558 + $0xec] sm:$0xf]
                  %2679 = vst [vmem:[%s2559 + $0x1ac] sm:$0xf] %v2678
                  %v2680 = vld [vmem:[%s2558 + $0xf0] sm:$0xf]
                  %2681 = vst [vmem:[%s2559 + $0x1b0] sm:$0xf] %v2680
                  %v2682 = vld [vmem:[%s2558 + $0xf4] sm:$0xf]
                  %2683 = vst [vmem:[%s2559 + $0x1b4] sm:$0xf] %v2682
                  %v2684 = vld [vmem:[%s2558 + $0xf8] sm:$0xf]
                  %2685 = vst [vmem:[%s2559 + $0x1b8] sm:$0xf] %v2684
                  %v2686 = vld [vmem:[%s2558 + $0xfc] sm:$0xf]
                  %2687 = vst [vmem:[%s2559 + $0x1bc] sm:$0xf] %v2686
                $region165: #{tpu_custom_call.1} parent=152 // loop_footer
                  %s2557 = sadd.s32 1, %s2553
                $region166: #{tpu_custom_call.1} parent=152 // loop_footer_branch
                  %2552 = sbr.rel target = $region162
                $region167: #{tpu_custom_call.1} parent=152 // loop_exit
                  _
              $region153: #{tpu_custom_call.1} parent=137 // pred_fallthru
                _
            $region138: #{tpu_custom_call.1} parent=133 // pred_fallthru
              _
            // Predicated region
            $region139: #{tpu_custom_call.1} parent=133 // pred_check
              _
            $region140: #{tpu_custom_call.1} parent=133 // pred_check_branch
              %2403 = sbr.rel (0) target = $region142
            $region141: #{tpu_custom_call.1} parent=133 // pred_region
              loop: start=0, step=1, limit=1
              $region143: #{tpu_custom_call.1} parent=141 // loop_pre_header
                _
              $region144: #{tpu_custom_call.1} parent=141 // loop_header
                %s2406 = sphi 0, %s2410
                %p2407 = scmp.ge.s32.totalorder %s2406, 1
                %s2411 = sphi %s1791, %s1791
                %s2412 = sphi %s2397, %s2397
              $region145: #{tpu_custom_call.1} parent=141 // loop_header_branch
                %2409 = sbr.rel (%p2407) target = $region149
              $region146: #{tpu_custom_call.1} parent=141 // loop_body
                %v2413 = vld [vmem:[%s2411] sm:$0xf]
                %2414 = vst [vmem:[%s2412] sm:$0xf] %v2413
                %v2415 = vld [vmem:[%s2411 + $0x4] sm:$0xf]
                %2416 = vst [vmem:[%s2412 + $0x4] sm:$0xf] %v2415
                %v2417 = vld [vmem:[%s2411 + $0x8] sm:$0xf]
                %2418 = vst [vmem:[%s2412 + $0x8] sm:$0xf] %v2417
                %v2419 = vld [vmem:[%s2411 + $0xc] sm:$0xf]
                %2420 = vst [vmem:[%s2412 + $0xc] sm:$0xf] %v2419
                %v2421 = vld [vmem:[%s2411 + $0x10] sm:$0xf]
                %2422 = vst [vmem:[%s2412 + $0x10] sm:$0xf] %v2421
                %v2423 = vld [vmem:[%s2411 + $0x14] sm:$0xf]
                %2424 = vst [vmem:[%s2412 + $0x14] sm:$0xf] %v2423
                %v2425 = vld [vmem:[%s2411 + $0x18] sm:$0xf]
                %2426 = vst [vmem:[%s2412 + $0x18] sm:$0xf] %v2425
                %v2427 = vld [vmem:[%s2411 + $0x1c] sm:$0xf]
                %2428 = vst [vmem:[%s2412 + $0x1c] sm:$0xf] %v2427
                %v2429 = vld [vmem:[%s2411 + $0x20] sm:$0xf]
                %2430 = vst [vmem:[%s2412 + $0x20] sm:$0xf] %v2429
                %v2431 = vld [vmem:[%s2411 + $0x24] sm:$0xf]
                %2432 = vst [vmem:[%s2412 + $0x24] sm:$0xf] %v2431
                %v2433 = vld [vmem:[%s2411 + $0x28] sm:$0xf]
                %2434 = vst [vmem:[%s2412 + $0x28] sm:$0xf] %v2433
                %v2435 = vld [vmem:[%s2411 + $0x2c] sm:$0xf]
                %2436 = vst [vmem:[%s2412 + $0x2c] sm:$0xf] %v2435
                %v2437 = vld [vmem:[%s2411 + $0x30] sm:$0xf]
                %2438 = vst [vmem:[%s2412 + $0x30] sm:$0xf] %v2437
                %v2439 = vld [vmem:[%s2411 + $0x34] sm:$0xf]
                %2440 = vst [vmem:[%s2412 + $0x34] sm:$0xf] %v2439
                %v2441 = vld [vmem:[%s2411 + $0x38] sm:$0xf]
                %2442 = vst [vmem:[%s2412 + $0x38] sm:$0xf] %v2441
                %v2443 = vld [vmem:[%s2411 + $0x3c] sm:$0xf]
                %2444 = vst [vmem:[%s2412 + $0x3c] sm:$0xf] %v2443
                %v2445 = vld [vmem:[%s2411 + $0x40] sm:$0xf]
                %2446 = vst [vmem:[%s2412 + $0x80] sm:$0xf] %v2445
                %v2447 = vld [vmem:[%s2411 + $0x44] sm:$0xf]
                %2448 = vst [vmem:[%s2412 + $0x84] sm:$0xf] %v2447
                %v2449 = vld [vmem:[%s2411 + $0x48] sm:$0xf]
                %2450 = vst [vmem:[%s2412 + $0x88] sm:$0xf] %v2449
                %v2451 = vld [vmem:[%s2411 + $0x4c] sm:$0xf]
                %2452 = vst [vmem:[%s2412 + $0x8c] sm:$0xf] %v2451
                %v2453 = vld [vmem:[%s2411 + $0x50] sm:$0xf]
                %2454 = vst [vmem:[%s2412 + $0x90] sm:$0xf] %v2453
                %v2455 = vld [vmem:[%s2411 + $0x54] sm:$0xf]
                %2456 = vst [vmem:[%s2412 + $0x94] sm:$0xf] %v2455
                %v2457 = vld [vmem:[%s2411 + $0x58] sm:$0xf]
                %2458 = vst [vmem:[%s2412 + $0x98] sm:$0xf] %v2457
                %v2459 = vld [vmem:[%s2411 + $0x5c] sm:$0xf]
                %2460 = vst [vmem:[%s2412 + $0x9c] sm:$0xf] %v2459
                %v2461 = vld [vmem:[%s2411 + $0x60] sm:$0xf]
                %2462 = vst [vmem:[%s2412 + $0xa0] sm:$0xf] %v2461
                %v2463 = vld [vmem:[%s2411 + $0x64] sm:$0xf]
                %2464 = vst [vmem:[%s2412 + $0xa4] sm:$0xf] %v2463
                %v2465 = vld [vmem:[%s2411 + $0x68] sm:$0xf]
                %2466 = vst [vmem:[%s2412 + $0xa8] sm:$0xf] %v2465
                %v2467 = vld [vmem:[%s2411 + $0x6c] sm:$0xf]
                %2468 = vst [vmem:[%s2412 + $0xac] sm:$0xf] %v2467
                %v2469 = vld [vmem:[%s2411 + $0x70] sm:$0xf]
                %2470 = vst [vmem:[%s2412 + $0xb0] sm:$0xf] %v2469
                %v2471 = vld [vmem:[%s2411 + $0x74] sm:$0xf]
                %2472 = vst [vmem:[%s2412 + $0xb4] sm:$0xf] %v2471
                %v2473 = vld [vmem:[%s2411 + $0x78] sm:$0xf]
                %2474 = vst [vmem:[%s2412 + $0xb8] sm:$0xf] %v2473
                %v2475 = vld [vmem:[%s2411 + $0x7c] sm:$0xf]
                %2476 = vst [vmem:[%s2412 + $0xbc] sm:$0xf] %v2475
                %v2477 = vld [vmem:[%s2411 + $0x80] sm:$0xf]
                %2478 = vst [vmem:[%s2412 + $0x100] sm:$0xf] %v2477
                %v2479 = vld [vmem:[%s2411 + $0x84] sm:$0xf]
                %2480 = vst [vmem:[%s2412 + $0x104] sm:$0xf] %v2479
                %v2481 = vld [vmem:[%s2411 + $0x88] sm:$0xf]
                %2482 = vst [vmem:[%s2412 + $0x108] sm:$0xf] %v2481
                %v2483 = vld [vmem:[%s2411 + $0x8c] sm:$0xf]
                %2484 = vst [vmem:[%s2412 + $0x10c] sm:$0xf] %v2483
                %v2485 = vld [vmem:[%s2411 + $0x90] sm:$0xf]
                %2486 = vst [vmem:[%s2412 + $0x110] sm:$0xf] %v2485
                %v2487 = vld [vmem:[%s2411 + $0x94] sm:$0xf]
                %2488 = vst [vmem:[%s2412 + $0x114] sm:$0xf] %v2487
                %v2489 = vld [vmem:[%s2411 + $0x98] sm:$0xf]
                %2490 = vst [vmem:[%s2412 + $0x118] sm:$0xf] %v2489
                %v2491 = vld [vmem:[%s2411 + $0x9c] sm:$0xf]
                %2492 = vst [vmem:[%s2412 + $0x11c] sm:$0xf] %v2491
                %v2493 = vld [vmem:[%s2411 + $0xa0] sm:$0xf]
                %2494 = vst [vmem:[%s2412 + $0x120] sm:$0xf] %v2493
                %v2495 = vld [vmem:[%s2411 + $0xa4] sm:$0xf]
                %2496 = vst [vmem:[%s2412 + $0x124] sm:$0xf] %v2495
                %v2497 = vld [vmem:[%s2411 + $0xa8] sm:$0xf]
                %2498 = vst [vmem:[%s2412 + $0x128] sm:$0xf] %v2497
                %v2499 = vld [vmem:[%s2411 + $0xac] sm:$0xf]
                %2500 = vst [vmem:[%s2412 + $0x12c] sm:$0xf] %v2499
                %v2501 = vld [vmem:[%s2411 + $0xb0] sm:$0xf]
                %2502 = vst [vmem:[%s2412 + $0x130] sm:$0xf] %v2501
                %v2503 = vld [vmem:[%s2411 + $0xb4] sm:$0xf]
                %2504 = vst [vmem:[%s2412 + $0x134] sm:$0xf] %v2503
                %v2505 = vld [vmem:[%s2411 + $0xb8] sm:$0xf]
                %2506 = vst [vmem:[%s2412 + $0x138] sm:$0xf] %v2505
                %v2507 = vld [vmem:[%s2411 + $0xbc] sm:$0xf]
                %2508 = vst [vmem:[%s2412 + $0x13c] sm:$0xf] %v2507
                %v2509 = vld [vmem:[%s2411 + $0xc0] sm:$0xf]
                %2510 = vst [vmem:[%s2412 + $0x180] sm:$0xf] %v2509
                %v2511 = vld [vmem:[%s2411 + $0xc4] sm:$0xf]
                %2512 = vst [vmem:[%s2412 + $0x184] sm:$0xf] %v2511
                %v2513 = vld [vmem:[%s2411 + $0xc8] sm:$0xf]
                %2514 = vst [vmem:[%s2412 + $0x188] sm:$0xf] %v2513
                %v2515 = vld [vmem:[%s2411 + $0xcc] sm:$0xf]
                %2516 = vst [vmem:[%s2412 + $0x18c] sm:$0xf] %v2515
                %v2517 = vld [vmem:[%s2411 + $0xd0] sm:$0xf]
                %2518 = vst [vmem:[%s2412 + $0x190] sm:$0xf] %v2517
                %v2519 = vld [vmem:[%s2411 + $0xd4] sm:$0xf]
                %2520 = vst [vmem:[%s2412 + $0x194] sm:$0xf] %v2519
                %v2521 = vld [vmem:[%s2411 + $0xd8] sm:$0xf]
                %2522 = vst [vmem:[%s2412 + $0x198] sm:$0xf] %v2521
                %v2523 = vld [vmem:[%s2411 + $0xdc] sm:$0xf]
                %2524 = vst [vmem:[%s2412 + $0x19c] sm:$0xf] %v2523
                %v2525 = vld [vmem:[%s2411 + $0xe0] sm:$0xf]
                %2526 = vst [vmem:[%s2412 + $0x1a0] sm:$0xf] %v2525
                %v2527 = vld [vmem:[%s2411 + $0xe4] sm:$0xf]
                %2528 = vst [vmem:[%s2412 + $0x1a4] sm:$0xf] %v2527
                %v2529 = vld [vmem:[%s2411 + $0xe8] sm:$0xf]
                %2530 = vst [vmem:[%s2412 + $0x1a8] sm:$0xf] %v2529
                %v2531 = vld [vmem:[%s2411 + $0xec] sm:$0xf]
                %2532 = vst [vmem:[%s2412 + $0x1ac] sm:$0xf] %v2531
                %v2533 = vld [vmem:[%s2411 + $0xf0] sm:$0xf]
                %2534 = vst [vmem:[%s2412 + $0x1b0] sm:$0xf] %v2533
                %v2535 = vld [vmem:[%s2411 + $0xf4] sm:$0xf]
                %2536 = vst [vmem:[%s2412 + $0x1b4] sm:$0xf] %v2535
                %v2537 = vld [vmem:[%s2411 + $0xf8] sm:$0xf]
                %2538 = vst [vmem:[%s2412 + $0x1b8] sm:$0xf] %v2537
                %v2539 = vld [vmem:[%s2411 + $0xfc] sm:$0xf]
                %2540 = vst [vmem:[%s2412 + $0x1bc] sm:$0xf] %v2539
              $region147: #{tpu_custom_call.1} parent=141 // loop_footer
                %s2410 = sadd.s32 1, %s2406
              $region148: #{tpu_custom_call.1} parent=141 // loop_footer_branch
                %2405 = sbr.rel target = $region144
              $region149: #{tpu_custom_call.1} parent=141 // loop_exit
                _
            $region142: #{tpu_custom_call.1} parent=133 // pred_fallthru
              _
          $region134: #{tpu_custom_call.1} parent=129 // pred_fallthru
            _
          %2688 = vnop
        $region130: #{tpu_custom_call.1} parent=35 // pred_fallthru
          _
      $region36: #{tpu_custom_call.1} parent=5 // pred_fallthru
        _
      %p2689 = scmp.le.s32.totalorder 2, %s17
      // Predicated region
      $region168: #{tpu_custom_call.1} parent=5 // pred_check
        %p2690 = pneg %p2689
      $region169: #{tpu_custom_call.1} parent=5 // pred_check_branch
        %2692 = sbr.rel (%p2690) target = $region171
      $region170: #{tpu_custom_call.1} parent=5 // pred_region
        %s2693 = ssub.s32 %s17, 2
        // Predicated region
        $region172: #{tpu_custom_call.1} parent=170 // pred_check
          %p2694 = pneg %p151
        $region173: #{tpu_custom_call.1} parent=170 // pred_check_branch
          %2696 = sbr.rel (%p2694) target = $region175
        $region174: #{tpu_custom_call.1} parent=170 // pred_region
          %s2697 = sand.u32 %s136, 1
          %s2698 = sand.u32 %s136, 1
          %s2699 = smul.addr %s2698, 256
          %s2700 = scalar_lea.vmem [#allocation6], %s2699
        $region175: #{tpu_custom_call.1} parent=170 // pred_fallthru
          _
        // Predicated region
        $region176: #{tpu_custom_call.1} parent=170 // pred_check
          %p2701 = pneg %p179
        $region177: #{tpu_custom_call.1} parent=170 // pred_check_branch
          %2703 = sbr.rel (%p2701) target = $region179
        $region178: #{tpu_custom_call.1} parent=170 // pred_region
          %s2704 = sand.u32 %s164, 1
          %s2705 = sand.u32 %s164, 1
          %s2706 = smul.addr %s2705, 256
          %s2707 = scalar_lea.vmem [#allocation7], %s2706
        $region179: #{tpu_custom_call.1} parent=170 // pred_fallthru
          _
        // Predicated region
        $region180: #{tpu_custom_call.1} parent=170 // pred_check
          %p2708 = pneg %p207
        $region181: #{tpu_custom_call.1} parent=170 // pred_check_branch
          %2710 = sbr.rel (%p2708) target = $region183
        $region182: #{tpu_custom_call.1} parent=170 // pred_region
          %s2711 = sand.u32 %s192, 1
          %s2712 = sand.u32 %s192, 1
          %s2713 = smul.addr %s2712, 256
          %s2714 = scalar_lea.vmem [#allocation8], %s2713
        $region183: #{tpu_custom_call.1} parent=170 // pred_fallthru
          _
      $region171: #{tpu_custom_call.1} parent=5 // pred_fallthru
        _
    $region6: #{tpu_custom_call.1} parent=1 // loop_footer
      %s21 = sadd.s32 1, %s17
    $region7: #{tpu_custom_call.1} parent=1 // loop_footer_branch
      %16 = sbr.rel target = $region3
    $region8: #{tpu_custom_call.1} parent=1 // loop_exit
      _
    %2715 = vsyncpa [#allocation3], 1
    %s2716 = scalar_lea.sflag [#allocation3], 1
    %2717 = vsyncpa %s2716, 1
    %2718 = vsyncpa [#allocation5], 1

</llo_original>
